<compile_context>
chip_gen: v7x
topology: tpu7x:2x2x1
jax: 0.10.0
libtpu: 0.0.40
codegen_flags: <defaults>
</compile_context>

<pallas_src>
import math

import jax
import jax.numpy as jnp
import numpy as np
from jax.experimental import pallas as pl
from jax.experimental.pallas import tpu as pltpu  # noqa: F401  (TPU backend namespace)

# ----------------------------- model hyper-params -----------------------------
B = 2          # batch
S = 8          # sequence length
D = 32         # d_model  (layer.size)
H = 4          # attention heads
DK = D // H    # per-head dim
DFF = 64       # feed-forward hidden
N_LAYERS = 2   # number of encoder layers
EPS = 1e-6
T = B * S      # flattened token count


# ------------------------------ in-kernel helpers ------------------------------
def _fast_recip(d):
    """EUP approx reciprocal seed + one Newton step -> ~f32-exact 1/d."""
    r = pl.reciprocal(d, approx=True)
    return r * (2.0 - d * r)


def _torch_layernorm(x, a, b):
    """Matches the PyTorch LayerNorm in the reference (std uses n-1, eps added to std)."""
    n = x.shape[-1]
    mean = jnp.mean(x, axis=-1, keepdims=True)
    var = jnp.sum((x - mean) ** 2, axis=-1, keepdims=True) / (n - 1)
    inv = _fast_recip(jnp.sqrt(var) + EPS)
    return a * (x - mean) * inv + b


# ------------------------------ fused Pallas kernel -----------------------------
def encoder_kernel(x_ref,
                   ln1_a_ref, ln1_b_ref,
                   wqkv_ref, bqkv_ref,
                   wo_ref, bo_ref,
                   ln2_a_ref, ln2_b_ref,
                   w1_ref, b1_ref, w2_ref, b2_ref,
                   lnf_a_ref, lnf_b_ref,
                   out_ref):
    """Entire Encoder forward (all layers + final norm) in one kernel invocation.

    x_ref: [T, D] activations (T = B*S).  All params are stacked over layers and
    kept whole in VMEM; the layer loop is statically unrolled.
    """
    x = x_ref[...]                                              # [T, D] f32

    for l in range(N_LAYERS):                                   # static unroll
        # ---- sublayer 1: x + SelfAttn(LayerNorm(x)) ----
        xn = _torch_layernorm(x, ln1_a_ref[l], ln1_b_ref[l])    # [T, D]
        # Fused QKV projection (1/sqrt(dk) already folded into the Q part).
        qkv = jnp.dot(xn, wqkv_ref[l],
                      preferred_element_type=jnp.float32) + bqkv_ref[l]   # [T, 3D]

        batch_outs = []
        for b in range(B):                                      # attention is per-batch
            qb = qkv[b * S:(b + 1) * S, :]                      # [S, 3D]
            acc = jnp.zeros((S, D), jnp.float32)
            for h in range(H):                                  # static head loop
                c = h * DK
                qh = qb[:, c:c + DK]                            # [S, DK] (scaled)
                kh = qb[:, D + c:D + c + DK]                    # [S, DK]
                vh = qb[:, 2 * D + c:2 * D + c + DK]            # [S, DK]
                s = jnp.dot(qh, kh.T, preferred_element_type=jnp.float32)   # [S, S]
                s = s - jnp.max(s, axis=-1, keepdims=True)
                p = jnp.exp(s)
                p = p * _fast_recip(jnp.sum(p, axis=-1, keepdims=True))
                oh = jnp.dot(p, vh, preferred_element_type=jnp.float32)     # [S, DK]
                # Fold Wo into the head loop: no lane-axis head concat needed.
                acc = acc + jnp.dot(oh, wo_ref[l * H + h],
                                    preferred_element_type=jnp.float32)     # [S, D]
            batch_outs.append(acc)
        x = x + jnp.concatenate(batch_outs, axis=0) + bo_ref[l]             # [T, D]

        # ---- sublayer 2: x + FFN(LayerNorm(x)) ----
        xn2 = _torch_layernorm(x, ln2_a_ref[l], ln2_b_ref[l])
        hff = jnp.dot(xn2, w1_ref[l], preferred_element_type=jnp.float32) + b1_ref[l]
        hff = jnp.maximum(hff, 0.0)                                         # ReLU
        x = x + jnp.dot(hff, w2_ref[l], preferred_element_type=jnp.float32) + b2_ref[l]

    # ---- final LayerNorm ----
    out_ref[...] = _torch_layernorm(x, lnf_a_ref[...], lnf_b_ref[...])


# ------------------------------- host-side wrappers ------------------------------
def _prep_params(layer_params, final_norm):
    """Fuse / restack parameters for the single-call kernel."""
    scale = 1.0 / math.sqrt(DK)
    ln1_a = jnp.stack([p["ln1_a"].reshape(1, D) for p in layer_params])           # [L,1,D]
    ln1_b = jnp.stack([p["ln1_b"].reshape(1, D) for p in layer_params])
    wqkv = jnp.stack([jnp.concatenate([p["wq"] * scale, p["wk"], p["wv"]], axis=1)
                      for p in layer_params])                                      # [L,D,3D]
    bqkv = jnp.stack([jnp.concatenate([p["bq"] * scale, p["bk"], p["bv"]]).reshape(1, 3 * D)
                      for p in layer_params])                                      # [L,1,3D]
    wo = jnp.concatenate([p["wo"].reshape(H, DK, D) for p in layer_params], axis=0)  # [L*H,DK,D]
    bo = jnp.stack([p["bo"].reshape(1, D) for p in layer_params])                  # [L,1,D]
    ln2_a = jnp.stack([p["ln2_a"].reshape(1, D) for p in layer_params])
    ln2_b = jnp.stack([p["ln2_b"].reshape(1, D) for p in layer_params])
    w1 = jnp.stack([p["w1"] for p in layer_params])                                # [L,D,DFF]
    b1 = jnp.stack([p["b1"].reshape(1, DFF) for p in layer_params])                # [L,1,DFF]
    w2 = jnp.stack([p["w2"] for p in layer_params])                                # [L,DFF,D]
    b2 = jnp.stack([p["b2"].reshape(1, D) for p in layer_params])                  # [L,1,D]
    lnf_a = final_norm["a"].reshape(1, D)
    lnf_b = final_norm["b"].reshape(1, D)
    return (ln1_a, ln1_b, wqkv, bqkv, wo, bo, ln2_a, ln2_b,
            w1, b1, w2, b2, lnf_a, lnf_b)


@jax.jit
def encoder_forward(x, *fused_params):
    """x: [B, S, D] float32 -> [B, S, D] float32 (single fused pallas_call)."""
    x2d = x.reshape(T, D)
    out2d = pl.pallas_call(
        encoder_kernel,
        out_shape=jax.ShapeDtypeStruct((T, D), jnp.float32),
        # No grid: whole problem (16 x 32 activations + ~66 KB of weights) lives
        # in VMEM for the single kernel invocation.
    )(x2d, *fused_params)
    return out2d.reshape(B, S, D)


# ------------------------------ reference (plain jnp) ----------------------------
def _ref_layer(x, p):
    def ln(y, a, b):
        mean = y.mean(-1, keepdims=True)
        std = jnp.sqrt(((y - mean) ** 2).sum(-1, keepdims=True) / (y.shape[-1] - 1))
        return a * (y - mean) / (std + EPS) + b

    xn = ln(x, p["ln1_a"], p["ln1_b"])
    q = xn @ p["wq"] + p["bq"]
    k = xn @ p["wk"] + p["bk"]
    v = xn @ p["wv"] + p["bv"]
    qh = q.reshape(B, S, H, DK).transpose(0, 2, 1, 3)
    kh = k.reshape(B, S, H, DK).transpose(0, 2, 1, 3)
    vh = v.reshape(B, S, H, DK).transpose(0, 2, 1, 3)
    sc = jnp.einsum("bhqd,bhkd->bhqk", qh, kh) / math.sqrt(DK)
    pattn = jax.nn.softmax(sc, axis=-1)
    o = jnp.einsum("bhqk,bhkd->bhqd", pattn, vh).transpose(0, 2, 1, 3).reshape(B, S, D)
    x = x + (o @ p["wo"] + p["bo"])
    xn2 = ln(x, p["ln2_a"], p["ln2_b"])
    ff = jnp.maximum(xn2 @ p["w1"] + p["b1"], 0.0) @ p["w2"] + p["b2"]
    return x + ff


def _ref_forward(x, layer_params, final_norm_params):
    for p in layer_params:
        x = _ref_layer(x, p)
    mean = x.mean(-1, keepdims=True)
    std = jnp.sqrt(((x - mean) ** 2).sum(-1, keepdims=True) / (x.shape[-1] - 1))
    return final_norm_params["a"] * (x - mean) / (std + EPS) + final_norm_params["b"]


# ------------------------------------ main ----------------------------------------
def _init_params(key):
    layer_params = []
    for _ in range(N_LAYERS):
        keys = jax.random.split(key, 8)
        key = keys[0]
        p = {
            "ln1_a": jnp.ones((D,), jnp.float32),
            "ln1_b": jnp.zeros((D,), jnp.float32),
            "wq": jax.random.normal(keys[1], (D, D), jnp.float32) * 0.1,
            "bq": jnp.zeros((D,), jnp.float32),
            "wk": jax.random.normal(keys[2], (D, D), jnp.float32) * 0.1,
            "bk": jnp.zeros((D,), jnp.float32),
            "wv": jax.random.normal(keys[3], (D, D), jnp.float32) * 0.1,
            "bv": jnp.zeros((D,), jnp.float32),
            "wo": jax.random.normal(keys[4], (D, D), jnp.float32) * 0.1,
            "bo": jnp.zeros((D,), jnp.float32),
            "ln2_a": jnp.ones((D,), jnp.float32),
            "ln2_b": jnp.zeros((D,), jnp.float32),
            "w1": jax.random.normal(keys[5], (D, DFF), jnp.float32) * 0.1,
            "b1": jnp.zeros((DFF,), jnp.float32),
            "w2": jax.random.normal(keys[6], (DFF, D), jnp.float32) * 0.1,
            "b2": jnp.zeros((D,), jnp.float32),
        }
        layer_params.append(p)
    final_norm = {"a": jnp.ones((D,), jnp.float32), "b": jnp.zeros((D,), jnp.float32)}
    return layer_params, final_norm, key


if __name__ == "__main__":
    key = jax.random.PRNGKey(0)
    layer_params, final_norm, key = _init_params(key)
    x = jax.random.normal(key, (B, S, D), jnp.float32)

    fused_params = _prep_params(layer_params, final_norm)
    out = encoder_forward(x, *fused_params)
    out = jax.block_until_ready(out)

    ref = jax.block_until_ready(_ref_forward(x, layer_params, final_norm))
    assert out.shape == (B, S, D)
    np.testing.assert_allclose(np.asarray(out), np.asarray(ref), atol=2e-3, rtol=2e-3)

    print("KERNEL_OK")
</pallas_src>

<mosaic_0001>
module attributes {stable_mosaic.version = 11 : i64} {
  func.func @encoder_kernel(%arg0: memref<16x32xf32, #tpu.memory_space<vmem>>, %arg1: memref<2x1x32xf32, #tpu.memory_space<vmem>>, %arg2: memref<2x1x32xf32, #tpu.memory_space<vmem>>, %arg3: memref<2x32x96xf32, #tpu.memory_space<vmem>>, %arg4: memref<2x1x96xf32, #tpu.memory_space<vmem>>, %arg5: memref<8x8x32xf32, #tpu.memory_space<vmem>>, %arg6: memref<2x1x32xf32, #tpu.memory_space<vmem>>, %arg7: memref<2x1x32xf32, #tpu.memory_space<vmem>>, %arg8: memref<2x1x32xf32, #tpu.memory_space<vmem>>, %arg9: memref<2x32x64xf32, #tpu.memory_space<vmem>>, %arg10: memref<2x1x64xf32, #tpu.memory_space<vmem>>, %arg11: memref<2x64x32xf32, #tpu.memory_space<vmem>>, %arg12: memref<2x1x32xf32, #tpu.memory_space<vmem>>, %arg13: memref<1x32xf32, #tpu.memory_space<vmem>>, %arg14: memref<1x32xf32, #tpu.memory_space<vmem>>, %arg15: memref<16x32xf32, #tpu.memory_space<vmem>>) attributes {dimension_semantics = [], scalar_prefetch = 0 : i64, scratch_operands = 0 : i64, tpu.core_type = #tpu.core_type<tc>} {
    %c0 = arith.constant 0 : index
    %c0_0 = arith.constant 0 : index
    %0 = vector.load %arg0[%c0, %c0_0] : memref<16x32xf32, #tpu.memory_space<vmem>>, vector<16x32xf32>
    %c0_1 = arith.constant 0 : index
    %c0_2 = arith.constant 0 : index
    %c0_3 = arith.constant 0 : index
    %1 = vector.load %arg1[%c0_1, %c0_2, %c0_3] : memref<2x1x32xf32, #tpu.memory_space<vmem>>, vector<1x1x32xf32>
    %2 = vector.shape_cast %1 : vector<1x1x32xf32> to vector<1x32xf32>
    %c0_4 = arith.constant 0 : index
    %c0_5 = arith.constant 0 : index
    %c0_6 = arith.constant 0 : index
    %3 = vector.load %arg2[%c0_4, %c0_5, %c0_6] : memref<2x1x32xf32, #tpu.memory_space<vmem>>, vector<1x1x32xf32>
    %4 = vector.shape_cast %3 : vector<1x1x32xf32> to vector<1x32xf32>
    %cst = arith.constant dense<0.000000e+00> : vector<16xf32>
    %5 = vector.multi_reduction <add>, %0, %cst [1] : vector<16x32xf32> to vector<16xf32>
    %6 = vector.shape_cast %5 : vector<16xf32> to vector<16x1xf32>
    %cst_7 = arith.constant 3.200000e+01 : f32
    %7 = vector.broadcast %cst_7 : f32 to vector<16x1xf32>
    %8 = arith.divf %6, %7 : vector<16x1xf32>
    %9 = vector.broadcast %8 : vector<16x1xf32> to vector<16x32xf32>
    %10 = arith.subf %0, %9 : vector<16x32xf32>
    %11 = arith.mulf %10, %10 : vector<16x32xf32>
    %cst_8 = arith.constant dense<0.000000e+00> : vector<16xf32>
    %12 = vector.multi_reduction <add>, %11, %cst_8 [1] : vector<16x32xf32> to vector<16xf32>
    %13 = vector.shape_cast %12 : vector<16xf32> to vector<16x1xf32>
    %cst_9 = arith.constant 3.100000e+01 : f32
    %14 = vector.broadcast %cst_9 : f32 to vector<16x1xf32>
    %15 = arith.divf %13, %14 : vector<16x1xf32>
    %16 = math.sqrt %15 : vector<16x1xf32>
    %cst_10 = arith.constant 9.99999997E-7 : f32
    %17 = vector.broadcast %cst_10 : f32 to vector<16x1xf32>
    %18 = arith.addf %16, %17 : vector<16x1xf32>
    %19 = tpu.reciprocal %18 {approx = true} : vector<16x1xf32> -> vector<16x1xf32>
    %20 = arith.mulf %18, %19 : vector<16x1xf32>
    %cst_11 = arith.constant 2.000000e+00 : f32
    %21 = vector.broadcast %cst_11 : f32 to vector<16x1xf32>
    %22 = arith.subf %21, %20 : vector<16x1xf32>
    %23 = arith.mulf %19, %22 : vector<16x1xf32>
    %24 = vector.broadcast %8 : vector<16x1xf32> to vector<16x32xf32>
    %25 = arith.subf %0, %24 : vector<16x32xf32>
    %26 = vector.broadcast %2 : vector<1x32xf32> to vector<16x32xf32>
    %27 = arith.mulf %26, %25 : vector<16x32xf32>
    %28 = vector.broadcast %23 : vector<16x1xf32> to vector<16x32xf32>
    %29 = arith.mulf %27, %28 : vector<16x32xf32>
    %30 = vector.broadcast %4 : vector<1x32xf32> to vector<16x32xf32>
    %31 = arith.addf %29, %30 : vector<16x32xf32>
    %c0_12 = arith.constant 0 : index
    %c0_13 = arith.constant 0 : index
    %c0_14 = arith.constant 0 : index
    %32 = vector.load %arg3[%c0_12, %c0_13, %c0_14] : memref<2x32x96xf32, #tpu.memory_space<vmem>>, vector<1x32x96xf32>
    %33 = vector.shape_cast %32 : vector<1x32x96xf32> to vector<32x96xf32>
    %cst_15 = arith.constant dense<0.000000e+00> : vector<16x96xf32>
    %34 = tpu.matmul %31, %33, %cst_15 {dimension_numbers = #tpu.dot_dimension_numbers<[1], [0], [0], [1], [0, 0, 1, 1], [], []>} : vector<16x32xf32>, vector<32x96xf32>, vector<16x96xf32> -> vector<16x96xf32>
    %c0_16 = arith.constant 0 : index
    %c0_17 = arith.constant 0 : index
    %c0_18 = arith.constant 0 : index
    %35 = vector.load %arg4[%c0_16, %c0_17, %c0_18] : memref<2x1x96xf32, #tpu.memory_space<vmem>>, vector<1x1x96xf32>
    %36 = vector.shape_cast %35 : vector<1x1x96xf32> to vector<1x96xf32>
    %37 = vector.broadcast %36 : vector<1x96xf32> to vector<16x96xf32>
    %38 = arith.addf %34, %37 : vector<16x96xf32>
    %39 = vector.extract_strided_slice %38 {offsets = [0, 0], sizes = [8, 96], strides = [1, 1]} : vector<16x96xf32> to vector<8x96xf32>
    %cst_19 = arith.constant 0.000000e+00 : f32
    %40 = vector.broadcast %cst_19 : f32 to vector<8x32xf32>
    %41 = vector.extract_strided_slice %39 {offsets = [0, 0], sizes = [8, 8], strides = [1, 1]} : vector<8x96xf32> to vector<8x8xf32>
    %42 = vector.extract_strided_slice %39 {offsets = [0, 32], sizes = [8, 8], strides = [1, 1]} : vector<8x96xf32> to vector<8x8xf32>
    %43 = vector.extract_strided_slice %39 {offsets = [0, 64], sizes = [8, 8], strides = [1, 1]} : vector<8x96xf32> to vector<8x8xf32>
    %44 = tpu.transpose %42, [1, 0] : vector<8x8xf32> -> vector<8x8xf32>
    %cst_20 = arith.constant dense<0.000000e+00> : vector<8x8xf32>
    %45 = tpu.matmul %41, %44, %cst_20 {dimension_numbers = #tpu.dot_dimension_numbers<[1], [0], [0], [1], [0, 0, 1, 1], [], []>} : vector<8x8xf32>, vector<8x8xf32>, vector<8x8xf32> -> vector<8x8xf32>
    %cst_21 = arith.constant dense<0xFF800000> : vector<8xf32>
    %46 = vector.multi_reduction <maximumf>, %45, %cst_21 [1] : vector<8x8xf32> to vector<8xf32>
    %47 = vector.shape_cast %46 : vector<8xf32> to vector<8x1xf32>
    %48 = vector.broadcast %47 : vector<8x1xf32> to vector<8x8xf32>
    %49 = arith.subf %45, %48 : vector<8x8xf32>
    %50 = math.exp %49 : vector<8x8xf32>
    %cst_22 = arith.constant dense<0.000000e+00> : vector<8xf32>
    %51 = vector.multi_reduction <add>, %50, %cst_22 [1] : vector<8x8xf32> to vector<8xf32>
    %52 = vector.shape_cast %51 : vector<8xf32> to vector<8x1xf32>
    %53 = tpu.reciprocal %52 {approx = true} : vector<8x1xf32> -> vector<8x1xf32>
    %54 = arith.mulf %52, %53 : vector<8x1xf32>
    %cst_23 = arith.constant 2.000000e+00 : f32
    %55 = vector.broadcast %cst_23 : f32 to vector<8x1xf32>
    %56 = arith.subf %55, %54 : vector<8x1xf32>
    %57 = arith.mulf %53, %56 : vector<8x1xf32>
    %58 = vector.broadcast %57 : vector<8x1xf32> to vector<8x8xf32>
    %59 = arith.mulf %50, %58 : vector<8x8xf32>
    %cst_24 = arith.constant dense<0.000000e+00> : vector<8x8xf32>
    %60 = tpu.matmul %59, %43, %cst_24 {dimension_numbers = #tpu.dot_dimension_numbers<[1], [0], [0], [1], [0, 0, 1, 1], [], []>} : vector<8x8xf32>, vector<8x8xf32>, vector<8x8xf32> -> vector<8x8xf32>
    %c0_25 = arith.constant 0 : index
    %c0_26 = arith.constant 0 : index
    %c0_27 = arith.constant 0 : index
    %61 = vector.load %arg5[%c0_25, %c0_26, %c0_27] : memref<8x8x32xf32, #tpu.memory_space<vmem>>, vector<1x8x32xf32>
    %62 = vector.shape_cast %61 : vector<1x8x32xf32> to vector<8x32xf32>
    %cst_28 = arith.constant dense<0.000000e+00> : vector<8x32xf32>
    %63 = tpu.matmul %60, %62, %cst_28 {dimension_numbers = #tpu.dot_dimension_numbers<[1], [0], [0], [1], [0, 0, 1, 1], [], []>} : vector<8x8xf32>, vector<8x32xf32>, vector<8x32xf32> -> vector<8x32xf32>
    %64 = arith.addf %40, %63 : vector<8x32xf32>
    %65 = vector.extract_strided_slice %39 {offsets = [0, 8], sizes = [8, 8], strides = [1, 1]} : vector<8x96xf32> to vector<8x8xf32>
    %66 = vector.extract_strided_slice %39 {offsets = [0, 40], sizes = [8, 8], strides = [1, 1]} : vector<8x96xf32> to vector<8x8xf32>
    %67 = vector.extract_strided_slice %39 {offsets = [0, 72], sizes = [8, 8], strides = [1, 1]} : vector<8x96xf32> to vector<8x8xf32>
    %68 = tpu.transpose %66, [1, 0] : vector<8x8xf32> -> vector<8x8xf32>
    %cst_29 = arith.constant dense<0.000000e+00> : vector<8x8xf32>
    %69 = tpu.matmul %65, %68, %cst_29 {dimension_numbers = #tpu.dot_dimension_numbers<[1], [0], [0], [1], [0, 0, 1, 1], [], []>} : vector<8x8xf32>, vector<8x8xf32>, vector<8x8xf32> -> vector<8x8xf32>
    %cst_30 = arith.constant dense<0xFF800000> : vector<8xf32>
    %70 = vector.multi_reduction <maximumf>, %69, %cst_30 [1] : vector<8x8xf32> to vector<8xf32>
    %71 = vector.shape_cast %70 : vector<8xf32> to vector<8x1xf32>
    %72 = vector.broadcast %71 : vector<8x1xf32> to vector<8x8xf32>
    %73 = arith.subf %69, %72 : vector<8x8xf32>
    %74 = math.exp %73 : vector<8x8xf32>
    %cst_31 = arith.constant dense<0.000000e+00> : vector<8xf32>
    %75 = vector.multi_reduction <add>, %74, %cst_31 [1] : vector<8x8xf32> to vector<8xf32>
    %76 = vector.shape_cast %75 : vector<8xf32> to vector<8x1xf32>
    %77 = tpu.reciprocal %76 {approx = true} : vector<8x1xf32> -> vector<8x1xf32>
    %78 = arith.mulf %76, %77 : vector<8x1xf32>
    %cst_32 = arith.constant 2.000000e+00 : f32
    %79 = vector.broadcast %cst_32 : f32 to vector<8x1xf32>
    %80 = arith.subf %79, %78 : vector<8x1xf32>
    %81 = arith.mulf %77, %80 : vector<8x1xf32>
    %82 = vector.broadcast %81 : vector<8x1xf32> to vector<8x8xf32>
    %83 = arith.mulf %74, %82 : vector<8x8xf32>
    %cst_33 = arith.constant dense<0.000000e+00> : vector<8x8xf32>
    %84 = tpu.matmul %83, %67, %cst_33 {dimension_numbers = #tpu.dot_dimension_numbers<[1], [0], [0], [1], [0, 0, 1, 1], [], []>} : vector<8x8xf32>, vector<8x8xf32>, vector<8x8xf32> -> vector<8x8xf32>
    %c1 = arith.constant 1 : index
    %c0_34 = arith.constant 0 : index
    %c0_35 = arith.constant 0 : index
    %85 = vector.load %arg5[%c1, %c0_34, %c0_35] : memref<8x8x32xf32, #tpu.memory_space<vmem>>, vector<1x8x32xf32>
    %86 = vector.shape_cast %85 : vector<1x8x32xf32> to vector<8x32xf32>
    %cst_36 = arith.constant dense<0.000000e+00> : vector<8x32xf32>
    %87 = tpu.matmul %84, %86, %cst_36 {dimension_numbers = #tpu.dot_dimension_numbers<[1], [0], [0], [1], [0, 0, 1, 1], [], []>} : vector<8x8xf32>, vector<8x32xf32>, vector<8x32xf32> -> vector<8x32xf32>
    %88 = arith.addf %64, %87 : vector<8x32xf32>
    %89 = vector.extract_strided_slice %39 {offsets = [0, 16], sizes = [8, 8], strides = [1, 1]} : vector<8x96xf32> to vector<8x8xf32>
    %90 = vector.extract_strided_slice %39 {offsets = [0, 48], sizes = [8, 8], strides = [1, 1]} : vector<8x96xf32> to vector<8x8xf32>
    %91 = vector.extract_strided_slice %39 {offsets = [0, 80], sizes = [8, 8], strides = [1, 1]} : vector<8x96xf32> to vector<8x8xf32>
    %92 = tpu.transpose %90, [1, 0] : vector<8x8xf32> -> vector<8x8xf32>
    %cst_37 = arith.constant dense<0.000000e+00> : vector<8x8xf32>
    %93 = tpu.matmul %89, %92, %cst_37 {dimension_numbers = #tpu.dot_dimension_numbers<[1], [0], [0], [1], [0, 0, 1, 1], [], []>} : vector<8x8xf32>, vector<8x8xf32>, vector<8x8xf32> -> vector<8x8xf32>
    %cst_38 = arith.constant dense<0xFF800000> : vector<8xf32>
    %94 = vector.multi_reduction <maximumf>, %93, %cst_38 [1] : vector<8x8xf32> to vector<8xf32>
    %95 = vector.shape_cast %94 : vector<8xf32> to vector<8x1xf32>
    %96 = vector.broadcast %95 : vector<8x1xf32> to vector<8x8xf32>
    %97 = arith.subf %93, %96 : vector<8x8xf32>
    %98 = math.exp %97 : vector<8x8xf32>
    %cst_39 = arith.constant dense<0.000000e+00> : vector<8xf32>
    %99 = vector.multi_reduction <add>, %98, %cst_39 [1] : vector<8x8xf32> to vector<8xf32>
    %100 = vector.shape_cast %99 : vector<8xf32> to vector<8x1xf32>
    %101 = tpu.reciprocal %100 {approx = true} : vector<8x1xf32> -> vector<8x1xf32>
    %102 = arith.mulf %100, %101 : vector<8x1xf32>
    %cst_40 = arith.constant 2.000000e+00 : f32
    %103 = vector.broadcast %cst_40 : f32 to vector<8x1xf32>
    %104 = arith.subf %103, %102 : vector<8x1xf32>
    %105 = arith.mulf %101, %104 : vector<8x1xf32>
    %106 = vector.broadcast %105 : vector<8x1xf32> to vector<8x8xf32>
    %107 = arith.mulf %98, %106 : vector<8x8xf32>
    %cst_41 = arith.constant dense<0.000000e+00> : vector<8x8xf32>
    %108 = tpu.matmul %107, %91, %cst_41 {dimension_numbers = #tpu.dot_dimension_numbers<[1], [0], [0], [1], [0, 0, 1, 1], [], []>} : vector<8x8xf32>, vector<8x8xf32>, vector<8x8xf32> -> vector<8x8xf32>
    %c2 = arith.constant 2 : index
    %c0_42 = arith.constant 0 : index
    %c0_43 = arith.constant 0 : index
    %109 = vector.load %arg5[%c2, %c0_42, %c0_43] : memref<8x8x32xf32, #tpu.memory_space<vmem>>, vector<1x8x32xf32>
    %110 = vector.shape_cast %109 : vector<1x8x32xf32> to vector<8x32xf32>
    %cst_44 = arith.constant dense<0.000000e+00> : vector<8x32xf32>
    %111 = tpu.matmul %108, %110, %cst_44 {dimension_numbers = #tpu.dot_dimension_numbers<[1], [0], [0], [1], [0, 0, 1, 1], [], []>} : vector<8x8xf32>, vector<8x32xf32>, vector<8x32xf32> -> vector<8x32xf32>
    %112 = arith.addf %88, %111 : vector<8x32xf32>
    %113 = vector.extract_strided_slice %39 {offsets = [0, 24], sizes = [8, 8], strides = [1, 1]} : vector<8x96xf32> to vector<8x8xf32>
    %114 = vector.extract_strided_slice %39 {offsets = [0, 56], sizes = [8, 8], strides = [1, 1]} : vector<8x96xf32> to vector<8x8xf32>
    %115 = vector.extract_strided_slice %39 {offsets = [0, 88], sizes = [8, 8], strides = [1, 1]} : vector<8x96xf32> to vector<8x8xf32>
    %116 = tpu.transpose %114, [1, 0] : vector<8x8xf32> -> vector<8x8xf32>
    %cst_45 = arith.constant dense<0.000000e+00> : vector<8x8xf32>
    %117 = tpu.matmul %113, %116, %cst_45 {dimension_numbers = #tpu.dot_dimension_numbers<[1], [0], [0], [1], [0, 0, 1, 1], [], []>} : vector<8x8xf32>, vector<8x8xf32>, vector<8x8xf32> -> vector<8x8xf32>
    %cst_46 = arith.constant dense<0xFF800000> : vector<8xf32>
    %118 = vector.multi_reduction <maximumf>, %117, %cst_46 [1] : vector<8x8xf32> to vector<8xf32>
    %119 = vector.shape_cast %118 : vector<8xf32> to vector<8x1xf32>
    %120 = vector.broadcast %119 : vector<8x1xf32> to vector<8x8xf32>
    %121 = arith.subf %117, %120 : vector<8x8xf32>
    %122 = math.exp %121 : vector<8x8xf32>
    %cst_47 = arith.constant dense<0.000000e+00> : vector<8xf32>
    %123 = vector.multi_reduction <add>, %122, %cst_47 [1] : vector<8x8xf32> to vector<8xf32>
    %124 = vector.shape_cast %123 : vector<8xf32> to vector<8x1xf32>
    %125 = tpu.reciprocal %124 {approx = true} : vector<8x1xf32> -> vector<8x1xf32>
    %126 = arith.mulf %124, %125 : vector<8x1xf32>
    %cst_48 = arith.constant 2.000000e+00 : f32
    %127 = vector.broadcast %cst_48 : f32 to vector<8x1xf32>
    %128 = arith.subf %127, %126 : vector<8x1xf32>
    %129 = arith.mulf %125, %128 : vector<8x1xf32>
    %130 = vector.broadcast %129 : vector<8x1xf32> to vector<8x8xf32>
    %131 = arith.mulf %122, %130 : vector<8x8xf32>
    %cst_49 = arith.constant dense<0.000000e+00> : vector<8x8xf32>
    %132 = tpu.matmul %131, %115, %cst_49 {dimension_numbers = #tpu.dot_dimension_numbers<[1], [0], [0], [1], [0, 0, 1, 1], [], []>} : vector<8x8xf32>, vector<8x8xf32>, vector<8x8xf32> -> vector<8x8xf32>
    %c3 = arith.constant 3 : index
    %c0_50 = arith.constant 0 : index
    %c0_51 = arith.constant 0 : index
    %133 = vector.load %arg5[%c3, %c0_50, %c0_51] : memref<8x8x32xf32, #tpu.memory_space<vmem>>, vector<1x8x32xf32>
    %134 = vector.shape_cast %133 : vector<1x8x32xf32> to vector<8x32xf32>
    %cst_52 = arith.constant dense<0.000000e+00> : vector<8x32xf32>
    %135 = tpu.matmul %132, %134, %cst_52 {dimension_numbers = #tpu.dot_dimension_numbers<[1], [0], [0], [1], [0, 0, 1, 1], [], []>} : vector<8x8xf32>, vector<8x32xf32>, vector<8x32xf32> -> vector<8x32xf32>
    %136 = arith.addf %112, %135 : vector<8x32xf32>
    %137 = vector.extract_strided_slice %38 {offsets = [8, 0], sizes = [8, 96], strides = [1, 1]} : vector<16x96xf32> to vector<8x96xf32>
    %cst_53 = arith.constant 0.000000e+00 : f32
    %138 = vector.broadcast %cst_53 : f32 to vector<8x32xf32>
    %139 = vector.extract_strided_slice %137 {offsets = [0, 0], sizes = [8, 8], strides = [1, 1]} : vector<8x96xf32> to vector<8x8xf32>
    %140 = vector.extract_strided_slice %137 {offsets = [0, 32], sizes = [8, 8], strides = [1, 1]} : vector<8x96xf32> to vector<8x8xf32>
    %141 = vector.extract_strided_slice %137 {offsets = [0, 64], sizes = [8, 8], strides = [1, 1]} : vector<8x96xf32> to vector<8x8xf32>
    %142 = tpu.transpose %140, [1, 0] : vector<8x8xf32> -> vector<8x8xf32>
    %cst_54 = arith.constant dense<0.000000e+00> : vector<8x8xf32>
    %143 = tpu.matmul %139, %142, %cst_54 {dimension_numbers = #tpu.dot_dimension_numbers<[1], [0], [0], [1], [0, 0, 1, 1], [], []>} : vector<8x8xf32>, vector<8x8xf32>, vector<8x8xf32> -> vector<8x8xf32>
    %cst_55 = arith.constant dense<0xFF800000> : vector<8xf32>
    %144 = vector.multi_reduction <maximumf>, %143, %cst_55 [1] : vector<8x8xf32> to vector<8xf32>
    %145 = vector.shape_cast %144 : vector<8xf32> to vector<8x1xf32>
    %146 = vector.broadcast %145 : vector<8x1xf32> to vector<8x8xf32>
    %147 = arith.subf %143, %146 : vector<8x8xf32>
    %148 = math.exp %147 : vector<8x8xf32>
    %cst_56 = arith.constant dense<0.000000e+00> : vector<8xf32>
    %149 = vector.multi_reduction <add>, %148, %cst_56 [1] : vector<8x8xf32> to vector<8xf32>
    %150 = vector.shape_cast %149 : vector<8xf32> to vector<8x1xf32>
    %151 = tpu.reciprocal %150 {approx = true} : vector<8x1xf32> -> vector<8x1xf32>
    %152 = arith.mulf %150, %151 : vector<8x1xf32>
    %cst_57 = arith.constant 2.000000e+00 : f32
    %153 = vector.broadcast %cst_57 : f32 to vector<8x1xf32>
    %154 = arith.subf %153, %152 : vector<8x1xf32>
    %155 = arith.mulf %151, %154 : vector<8x1xf32>
    %156 = vector.broadcast %155 : vector<8x1xf32> to vector<8x8xf32>
    %157 = arith.mulf %148, %156 : vector<8x8xf32>
    %cst_58 = arith.constant dense<0.000000e+00> : vector<8x8xf32>
    %158 = tpu.matmul %157, %141, %cst_58 {dimension_numbers = #tpu.dot_dimension_numbers<[1], [0], [0], [1], [0, 0, 1, 1], [], []>} : vector<8x8xf32>, vector<8x8xf32>, vector<8x8xf32> -> vector<8x8xf32>
    %c0_59 = arith.constant 0 : index
    %c0_60 = arith.constant 0 : index
    %c0_61 = arith.constant 0 : index
    %159 = vector.load %arg5[%c0_59, %c0_60, %c0_61] : memref<8x8x32xf32, #tpu.memory_space<vmem>>, vector<1x8x32xf32>
    %160 = vector.shape_cast %159 : vector<1x8x32xf32> to vector<8x32xf32>
    %cst_62 = arith.constant dense<0.000000e+00> : vector<8x32xf32>
    %161 = tpu.matmul %158, %160, %cst_62 {dimension_numbers = #tpu.dot_dimension_numbers<[1], [0], [0], [1], [0, 0, 1, 1], [], []>} : vector<8x8xf32>, vector<8x32xf32>, vector<8x32xf32> -> vector<8x32xf32>
    %162 = arith.addf %138, %161 : vector<8x32xf32>
    %163 = vector.extract_strided_slice %137 {offsets = [0, 8], sizes = [8, 8], strides = [1, 1]} : vector<8x96xf32> to vector<8x8xf32>
    %164 = vector.extract_strided_slice %137 {offsets = [0, 40], sizes = [8, 8], strides = [1, 1]} : vector<8x96xf32> to vector<8x8xf32>
    %165 = vector.extract_strided_slice %137 {offsets = [0, 72], sizes = [8, 8], strides = [1, 1]} : vector<8x96xf32> to vector<8x8xf32>
    %166 = tpu.transpose %164, [1, 0] : vector<8x8xf32> -> vector<8x8xf32>
    %cst_63 = arith.constant dense<0.000000e+00> : vector<8x8xf32>
    %167 = tpu.matmul %163, %166, %cst_63 {dimension_numbers = #tpu.dot_dimension_numbers<[1], [0], [0], [1], [0, 0, 1, 1], [], []>} : vector<8x8xf32>, vector<8x8xf32>, vector<8x8xf32> -> vector<8x8xf32>
    %cst_64 = arith.constant dense<0xFF800000> : vector<8xf32>
    %168 = vector.multi_reduction <maximumf>, %167, %cst_64 [1] : vector<8x8xf32> to vector<8xf32>
    %169 = vector.shape_cast %168 : vector<8xf32> to vector<8x1xf32>
    %170 = vector.broadcast %169 : vector<8x1xf32> to vector<8x8xf32>
    %171 = arith.subf %167, %170 : vector<8x8xf32>
    %172 = math.exp %171 : vector<8x8xf32>
    %cst_65 = arith.constant dense<0.000000e+00> : vector<8xf32>
    %173 = vector.multi_reduction <add>, %172, %cst_65 [1] : vector<8x8xf32> to vector<8xf32>
    %174 = vector.shape_cast %173 : vector<8xf32> to vector<8x1xf32>
    %175 = tpu.reciprocal %174 {approx = true} : vector<8x1xf32> -> vector<8x1xf32>
    %176 = arith.mulf %174, %175 : vector<8x1xf32>
    %cst_66 = arith.constant 2.000000e+00 : f32
    %177 = vector.broadcast %cst_66 : f32 to vector<8x1xf32>
    %178 = arith.subf %177, %176 : vector<8x1xf32>
    %179 = arith.mulf %175, %178 : vector<8x1xf32>
    %180 = vector.broadcast %179 : vector<8x1xf32> to vector<8x8xf32>
    %181 = arith.mulf %172, %180 : vector<8x8xf32>
    %cst_67 = arith.constant dense<0.000000e+00> : vector<8x8xf32>
    %182 = tpu.matmul %181, %165, %cst_67 {dimension_numbers = #tpu.dot_dimension_numbers<[1], [0], [0], [1], [0, 0, 1, 1], [], []>} : vector<8x8xf32>, vector<8x8xf32>, vector<8x8xf32> -> vector<8x8xf32>
    %c1_68 = arith.constant 1 : index
    %c0_69 = arith.constant 0 : index
    %c0_70 = arith.constant 0 : index
    %183 = vector.load %arg5[%c1_68, %c0_69, %c0_70] : memref<8x8x32xf32, #tpu.memory_space<vmem>>, vector<1x8x32xf32>
    %184 = vector.shape_cast %183 : vector<1x8x32xf32> to vector<8x32xf32>
    %cst_71 = arith.constant dense<0.000000e+00> : vector<8x32xf32>
    %185 = tpu.matmul %182, %184, %cst_71 {dimension_numbers = #tpu.dot_dimension_numbers<[1], [0], [0], [1], [0, 0, 1, 1], [], []>} : vector<8x8xf32>, vector<8x32xf32>, vector<8x32xf32> -> vector<8x32xf32>
    %186 = arith.addf %162, %185 : vector<8x32xf32>
    %187 = vector.extract_strided_slice %137 {offsets = [0, 16], sizes = [8, 8], strides = [1, 1]} : vector<8x96xf32> to vector<8x8xf32>
    %188 = vector.extract_strided_slice %137 {offsets = [0, 48], sizes = [8, 8], strides = [1, 1]} : vector<8x96xf32> to vector<8x8xf32>
    %189 = vector.extract_strided_slice %137 {offsets = [0, 80], sizes = [8, 8], strides = [1, 1]} : vector<8x96xf32> to vector<8x8xf32>
    %190 = tpu.transpose %188, [1, 0] : vector<8x8xf32> -> vector<8x8xf32>
    %cst_72 = arith.constant dense<0.000000e+00> : vector<8x8xf32>
    %191 = tpu.matmul %187, %190, %cst_72 {dimension_numbers = #tpu.dot_dimension_numbers<[1], [0], [0], [1], [0, 0, 1, 1], [], []>} : vector<8x8xf32>, vector<8x8xf32>, vector<8x8xf32> -> vector<8x8xf32>
    %cst_73 = arith.constant dense<0xFF800000> : vector<8xf32>
    %192 = vector.multi_reduction <maximumf>, %191, %cst_73 [1] : vector<8x8xf32> to vector<8xf32>
    %193 = vector.shape_cast %192 : vector<8xf32> to vector<8x1xf32>
    %194 = vector.broadcast %193 : vector<8x1xf32> to vector<8x8xf32>
    %195 = arith.subf %191, %194 : vector<8x8xf32>
    %196 = math.exp %195 : vector<8x8xf32>
    %cst_74 = arith.constant dense<0.000000e+00> : vector<8xf32>
    %197 = vector.multi_reduction <add>, %196, %cst_74 [1] : vector<8x8xf32> to vector<8xf32>
    %198 = vector.shape_cast %197 : vector<8xf32> to vector<8x1xf32>
    %199 = tpu.reciprocal %198 {approx = true} : vector<8x1xf32> -> vector<8x1xf32>
    %200 = arith.mulf %198, %199 : vector<8x1xf32>
    %cst_75 = arith.constant 2.000000e+00 : f32
    %201 = vector.broadcast %cst_75 : f32 to vector<8x1xf32>
    %202 = arith.subf %201, %200 : vector<8x1xf32>
    %203 = arith.mulf %199, %202 : vector<8x1xf32>
    %204 = vector.broadcast %203 : vector<8x1xf32> to vector<8x8xf32>
    %205 = arith.mulf %196, %204 : vector<8x8xf32>
    %cst_76 = arith.constant dense<0.000000e+00> : vector<8x8xf32>
    %206 = tpu.matmul %205, %189, %cst_76 {dimension_numbers = #tpu.dot_dimension_numbers<[1], [0], [0], [1], [0, 0, 1, 1], [], []>} : vector<8x8xf32>, vector<8x8xf32>, vector<8x8xf32> -> vector<8x8xf32>
    %c2_77 = arith.constant 2 : index
    %c0_78 = arith.constant 0 : index
    %c0_79 = arith.constant 0 : index
    %207 = vector.load %arg5[%c2_77, %c0_78, %c0_79] : memref<8x8x32xf32, #tpu.memory_space<vmem>>, vector<1x8x32xf32>
    %208 = vector.shape_cast %207 : vector<1x8x32xf32> to vector<8x32xf32>
    %cst_80 = arith.constant dense<0.000000e+00> : vector<8x32xf32>
    %209 = tpu.matmul %206, %208, %cst_80 {dimension_numbers = #tpu.dot_dimension_numbers<[1], [0], [0], [1], [0, 0, 1, 1], [], []>} : vector<8x8xf32>, vector<8x32xf32>, vector<8x32xf32> -> vector<8x32xf32>
    %210 = arith.addf %186, %209 : vector<8x32xf32>
    %211 = vector.extract_strided_slice %137 {offsets = [0, 24], sizes = [8, 8], strides = [1, 1]} : vector<8x96xf32> to vector<8x8xf32>
    %212 = vector.extract_strided_slice %137 {offsets = [0, 56], sizes = [8, 8], strides = [1, 1]} : vector<8x96xf32> to vector<8x8xf32>
    %213 = vector.extract_strided_slice %137 {offsets = [0, 88], sizes = [8, 8], strides = [1, 1]} : vector<8x96xf32> to vector<8x8xf32>
    %214 = tpu.transpose %212, [1, 0] : vector<8x8xf32> -> vector<8x8xf32>
    %cst_81 = arith.constant dense<0.000000e+00> : vector<8x8xf32>
    %215 = tpu.matmul %211, %214, %cst_81 {dimension_numbers = #tpu.dot_dimension_numbers<[1], [0], [0], [1], [0, 0, 1, 1], [], []>} : vector<8x8xf32>, vector<8x8xf32>, vector<8x8xf32> -> vector<8x8xf32>
    %cst_82 = arith.constant dense<0xFF800000> : vector<8xf32>
    %216 = vector.multi_reduction <maximumf>, %215, %cst_82 [1] : vector<8x8xf32> to vector<8xf32>
    %217 = vector.shape_cast %216 : vector<8xf32> to vector<8x1xf32>
    %218 = vector.broadcast %217 : vector<8x1xf32> to vector<8x8xf32>
    %219 = arith.subf %215, %218 : vector<8x8xf32>
    %220 = math.exp %219 : vector<8x8xf32>
    %cst_83 = arith.constant dense<0.000000e+00> : vector<8xf32>
    %221 = vector.multi_reduction <add>, %220, %cst_83 [1] : vector<8x8xf32> to vector<8xf32>
    %222 = vector.shape_cast %221 : vector<8xf32> to vector<8x1xf32>
    %223 = tpu.reciprocal %222 {approx = true} : vector<8x1xf32> -> vector<8x1xf32>
    %224 = arith.mulf %222, %223 : vector<8x1xf32>
    %cst_84 = arith.constant 2.000000e+00 : f32
    %225 = vector.broadcast %cst_84 : f32 to vector<8x1xf32>
    %226 = arith.subf %225, %224 : vector<8x1xf32>
    %227 = arith.mulf %223, %226 : vector<8x1xf32>
    %228 = vector.broadcast %227 : vector<8x1xf32> to vector<8x8xf32>
    %229 = arith.mulf %220, %228 : vector<8x8xf32>
    %cst_85 = arith.constant dense<0.000000e+00> : vector<8x8xf32>
    %230 = tpu.matmul %229, %213, %cst_85 {dimension_numbers = #tpu.dot_dimension_numbers<[1], [0], [0], [1], [0, 0, 1, 1], [], []>} : vector<8x8xf32>, vector<8x8xf32>, vector<8x8xf32> -> vector<8x8xf32>
    %c3_86 = arith.constant 3 : index
    %c0_87 = arith.constant 0 : index
    %c0_88 = arith.constant 0 : index
    %231 = vector.load %arg5[%c3_86, %c0_87, %c0_88] : memref<8x8x32xf32, #tpu.memory_space<vmem>>, vector<1x8x32xf32>
    %232 = vector.shape_cast %231 : vector<1x8x32xf32> to vector<8x32xf32>
    %cst_89 = arith.constant dense<0.000000e+00> : vector<8x32xf32>
    %233 = tpu.matmul %230, %232, %cst_89 {dimension_numbers = #tpu.dot_dimension_numbers<[1], [0], [0], [1], [0, 0, 1, 1], [], []>} : vector<8x8xf32>, vector<8x32xf32>, vector<8x32xf32> -> vector<8x32xf32>
    %234 = arith.addf %210, %233 : vector<8x32xf32>
    %235 = tpu.concatenate %136, %234 in 0 : vector<8x32xf32>, vector<8x32xf32> -> vector<16x32xf32>
    %236 = arith.addf %0, %235 : vector<16x32xf32>
    %c0_90 = arith.constant 0 : index
    %c0_91 = arith.constant 0 : index
    %c0_92 = arith.constant 0 : index
    %237 = vector.load %arg6[%c0_90, %c0_91, %c0_92] : memref<2x1x32xf32, #tpu.memory_space<vmem>>, vector<1x1x32xf32>
    %238 = vector.shape_cast %237 : vector<1x1x32xf32> to vector<1x32xf32>
    %239 = vector.broadcast %238 : vector<1x32xf32> to vector<16x32xf32>
    %240 = arith.addf %236, %239 : vector<16x32xf32>
    %c0_93 = arith.constant 0 : index
    %c0_94 = arith.constant 0 : index
    %c0_95 = arith.constant 0 : index
    %241 = vector.load %arg7[%c0_93, %c0_94, %c0_95] : memref<2x1x32xf32, #tpu.memory_space<vmem>>, vector<1x1x32xf32>
    %242 = vector.shape_cast %241 : vector<1x1x32xf32> to vector<1x32xf32>
    %c0_96 = arith.constant 0 : index
    %c0_97 = arith.constant 0 : index
    %c0_98 = arith.constant 0 : index
    %243 = vector.load %arg8[%c0_96, %c0_97, %c0_98] : memref<2x1x32xf32, #tpu.memory_space<vmem>>, vector<1x1x32xf32>
    %244 = vector.shape_cast %243 : vector<1x1x32xf32> to vector<1x32xf32>
    %cst_99 = arith.constant dense<0.000000e+00> : vector<16xf32>
    %245 = vector.multi_reduction <add>, %240, %cst_99 [1] : vector<16x32xf32> to vector<16xf32>
    %246 = vector.shape_cast %245 : vector<16xf32> to vector<16x1xf32>
    %cst_100 = arith.constant 3.200000e+01 : f32
    %247 = vector.broadcast %cst_100 : f32 to vector<16x1xf32>
    %248 = arith.divf %246, %247 : vector<16x1xf32>
    %249 = vector.broadcast %248 : vector<16x1xf32> to vector<16x32xf32>
    %250 = arith.subf %240, %249 : vector<16x32xf32>
    %251 = arith.mulf %250, %250 : vector<16x32xf32>
    %cst_101 = arith.constant dense<0.000000e+00> : vector<16xf32>
    %252 = vector.multi_reduction <add>, %251, %cst_101 [1] : vector<16x32xf32> to vector<16xf32>
    %253 = vector.shape_cast %252 : vector<16xf32> to vector<16x1xf32>
    %cst_102 = arith.constant 3.100000e+01 : f32
    %254 = vector.broadcast %cst_102 : f32 to vector<16x1xf32>
    %255 = arith.divf %253, %254 : vector<16x1xf32>
    %256 = math.sqrt %255 : vector<16x1xf32>
    %cst_103 = arith.constant 9.99999997E-7 : f32
    %257 = vector.broadcast %cst_103 : f32 to vector<16x1xf32>
    %258 = arith.addf %256, %257 : vector<16x1xf32>
    %259 = tpu.reciprocal %258 {approx = true} : vector<16x1xf32> -> vector<16x1xf32>
    %260 = arith.mulf %258, %259 : vector<16x1xf32>
    %cst_104 = arith.constant 2.000000e+00 : f32
    %261 = vector.broadcast %cst_104 : f32 to vector<16x1xf32>
    %262 = arith.subf %261, %260 : vector<16x1xf32>
    %263 = arith.mulf %259, %262 : vector<16x1xf32>
    %264 = vector.broadcast %248 : vector<16x1xf32> to vector<16x32xf32>
    %265 = arith.subf %240, %264 : vector<16x32xf32>
    %266 = vector.broadcast %242 : vector<1x32xf32> to vector<16x32xf32>
    %267 = arith.mulf %266, %265 : vector<16x32xf32>
    %268 = vector.broadcast %263 : vector<16x1xf32> to vector<16x32xf32>
    %269 = arith.mulf %267, %268 : vector<16x32xf32>
    %270 = vector.broadcast %244 : vector<1x32xf32> to vector<16x32xf32>
    %271 = arith.addf %269, %270 : vector<16x32xf32>
    %c0_105 = arith.constant 0 : index
    %c0_106 = arith.constant 0 : index
    %c0_107 = arith.constant 0 : index
    %272 = vector.load %arg9[%c0_105, %c0_106, %c0_107] : memref<2x32x64xf32, #tpu.memory_space<vmem>>, vector<1x32x64xf32>
    %273 = vector.shape_cast %272 : vector<1x32x64xf32> to vector<32x64xf32>
    %cst_108 = arith.constant dense<0.000000e+00> : vector<16x64xf32>
    %274 = tpu.matmul %271, %273, %cst_108 {dimension_numbers = #tpu.dot_dimension_numbers<[1], [0], [0], [1], [0, 0, 1, 1], [], []>} : vector<16x32xf32>, vector<32x64xf32>, vector<16x64xf32> -> vector<16x64xf32>
    %c0_109 = arith.constant 0 : index
    %c0_110 = arith.constant 0 : index
    %c0_111 = arith.constant 0 : index
    %275 = vector.load %arg10[%c0_109, %c0_110, %c0_111] : memref<2x1x64xf32, #tpu.memory_space<vmem>>, vector<1x1x64xf32>
    %276 = vector.shape_cast %275 : vector<1x1x64xf32> to vector<1x64xf32>
    %277 = vector.broadcast %276 : vector<1x64xf32> to vector<16x64xf32>
    %278 = arith.addf %274, %277 : vector<16x64xf32>
    %cst_112 = arith.constant 0.000000e+00 : f32
    %279 = vector.broadcast %cst_112 : f32 to vector<16x64xf32>
    %280 = arith.maximumf %278, %279 : vector<16x64xf32>
    %c0_113 = arith.constant 0 : index
    %c0_114 = arith.constant 0 : index
    %c0_115 = arith.constant 0 : index
    %281 = vector.load %arg11[%c0_113, %c0_114, %c0_115] : memref<2x64x32xf32, #tpu.memory_space<vmem>>, vector<1x64x32xf32>
    %282 = vector.shape_cast %281 : vector<1x64x32xf32> to vector<64x32xf32>
    %cst_116 = arith.constant dense<0.000000e+00> : vector<16x32xf32>
    %283 = tpu.matmul %280, %282, %cst_116 {dimension_numbers = #tpu.dot_dimension_numbers<[1], [0], [0], [1], [0, 0, 1, 1], [], []>} : vector<16x64xf32>, vector<64x32xf32>, vector<16x32xf32> -> vector<16x32xf32>
    %284 = arith.addf %240, %283 : vector<16x32xf32>
    %c0_117 = arith.constant 0 : index
    %c0_118 = arith.constant 0 : index
    %c0_119 = arith.constant 0 : index
    %285 = vector.load %arg12[%c0_117, %c0_118, %c0_119] : memref<2x1x32xf32, #tpu.memory_space<vmem>>, vector<1x1x32xf32>
    %286 = vector.shape_cast %285 : vector<1x1x32xf32> to vector<1x32xf32>
    %287 = vector.broadcast %286 : vector<1x32xf32> to vector<16x32xf32>
    %288 = arith.addf %284, %287 : vector<16x32xf32>
    %c1_120 = arith.constant 1 : index
    %c0_121 = arith.constant 0 : index
    %c0_122 = arith.constant 0 : index
    %289 = vector.load %arg1[%c1_120, %c0_121, %c0_122] : memref<2x1x32xf32, #tpu.memory_space<vmem>>, vector<1x1x32xf32>
    %290 = vector.shape_cast %289 : vector<1x1x32xf32> to vector<1x32xf32>
    %c1_123 = arith.constant 1 : index
    %c0_124 = arith.constant 0 : index
    %c0_125 = arith.constant 0 : index
    %291 = vector.load %arg2[%c1_123, %c0_124, %c0_125] : memref<2x1x32xf32, #tpu.memory_space<vmem>>, vector<1x1x32xf32>
    %292 = vector.shape_cast %291 : vector<1x1x32xf32> to vector<1x32xf32>
    %cst_126 = arith.constant dense<0.000000e+00> : vector<16xf32>
    %293 = vector.multi_reduction <add>, %288, %cst_126 [1] : vector<16x32xf32> to vector<16xf32>
    %294 = vector.shape_cast %293 : vector<16xf32> to vector<16x1xf32>
    %cst_127 = arith.constant 3.200000e+01 : f32
    %295 = vector.broadcast %cst_127 : f32 to vector<16x1xf32>
    %296 = arith.divf %294, %295 : vector<16x1xf32>
    %297 = vector.broadcast %296 : vector<16x1xf32> to vector<16x32xf32>
    %298 = arith.subf %288, %297 : vector<16x32xf32>
    %299 = arith.mulf %298, %298 : vector<16x32xf32>
    %cst_128 = arith.constant dense<0.000000e+00> : vector<16xf32>
    %300 = vector.multi_reduction <add>, %299, %cst_128 [1] : vector<16x32xf32> to vector<16xf32>
    %301 = vector.shape_cast %300 : vector<16xf32> to vector<16x1xf32>
    %cst_129 = arith.constant 3.100000e+01 : f32
    %302 = vector.broadcast %cst_129 : f32 to vector<16x1xf32>
    %303 = arith.divf %301, %302 : vector<16x1xf32>
    %304 = math.sqrt %303 : vector<16x1xf32>
    %cst_130 = arith.constant 9.99999997E-7 : f32
    %305 = vector.broadcast %cst_130 : f32 to vector<16x1xf32>
    %306 = arith.addf %304, %305 : vector<16x1xf32>
    %307 = tpu.reciprocal %306 {approx = true} : vector<16x1xf32> -> vector<16x1xf32>
    %308 = arith.mulf %306, %307 : vector<16x1xf32>
    %cst_131 = arith.constant 2.000000e+00 : f32
    %309 = vector.broadcast %cst_131 : f32 to vector<16x1xf32>
    %310 = arith.subf %309, %308 : vector<16x1xf32>
    %311 = arith.mulf %307, %310 : vector<16x1xf32>
    %312 = vector.broadcast %296 : vector<16x1xf32> to vector<16x32xf32>
    %313 = arith.subf %288, %312 : vector<16x32xf32>
    %314 = vector.broadcast %290 : vector<1x32xf32> to vector<16x32xf32>
    %315 = arith.mulf %314, %313 : vector<16x32xf32>
    %316 = vector.broadcast %311 : vector<16x1xf32> to vector<16x32xf32>
    %317 = arith.mulf %315, %316 : vector<16x32xf32>
    %318 = vector.broadcast %292 : vector<1x32xf32> to vector<16x32xf32>
    %319 = arith.addf %317, %318 : vector<16x32xf32>
    %c1_132 = arith.constant 1 : index
    %c0_133 = arith.constant 0 : index
    %c0_134 = arith.constant 0 : index
    %320 = vector.load %arg3[%c1_132, %c0_133, %c0_134] : memref<2x32x96xf32, #tpu.memory_space<vmem>>, vector<1x32x96xf32>
    %321 = vector.shape_cast %320 : vector<1x32x96xf32> to vector<32x96xf32>
    %cst_135 = arith.constant dense<0.000000e+00> : vector<16x96xf32>
    %322 = tpu.matmul %319, %321, %cst_135 {dimension_numbers = #tpu.dot_dimension_numbers<[1], [0], [0], [1], [0, 0, 1, 1], [], []>} : vector<16x32xf32>, vector<32x96xf32>, vector<16x96xf32> -> vector<16x96xf32>
    %c1_136 = arith.constant 1 : index
    %c0_137 = arith.constant 0 : index
    %c0_138 = arith.constant 0 : index
    %323 = vector.load %arg4[%c1_136, %c0_137, %c0_138] : memref<2x1x96xf32, #tpu.memory_space<vmem>>, vector<1x1x96xf32>
    %324 = vector.shape_cast %323 : vector<1x1x96xf32> to vector<1x96xf32>
    %325 = vector.broadcast %324 : vector<1x96xf32> to vector<16x96xf32>
    %326 = arith.addf %322, %325 : vector<16x96xf32>
    %327 = vector.extract_strided_slice %326 {offsets = [0, 0], sizes = [8, 96], strides = [1, 1]} : vector<16x96xf32> to vector<8x96xf32>
    %cst_139 = arith.constant 0.000000e+00 : f32
    %328 = vector.broadcast %cst_139 : f32 to vector<8x32xf32>
    %329 = vector.extract_strided_slice %327 {offsets = [0, 0], sizes = [8, 8], strides = [1, 1]} : vector<8x96xf32> to vector<8x8xf32>
    %330 = vector.extract_strided_slice %327 {offsets = [0, 32], sizes = [8, 8], strides = [1, 1]} : vector<8x96xf32> to vector<8x8xf32>
    %331 = vector.extract_strided_slice %327 {offsets = [0, 64], sizes = [8, 8], strides = [1, 1]} : vector<8x96xf32> to vector<8x8xf32>
    %332 = tpu.transpose %330, [1, 0] : vector<8x8xf32> -> vector<8x8xf32>
    %cst_140 = arith.constant dense<0.000000e+00> : vector<8x8xf32>
    %333 = tpu.matmul %329, %332, %cst_140 {dimension_numbers = #tpu.dot_dimension_numbers<[1], [0], [0], [1], [0, 0, 1, 1], [], []>} : vector<8x8xf32>, vector<8x8xf32>, vector<8x8xf32> -> vector<8x8xf32>
    %cst_141 = arith.constant dense<0xFF800000> : vector<8xf32>
    %334 = vector.multi_reduction <maximumf>, %333, %cst_141 [1] : vector<8x8xf32> to vector<8xf32>
    %335 = vector.shape_cast %334 : vector<8xf32> to vector<8x1xf32>
    %336 = vector.broadcast %335 : vector<8x1xf32> to vector<8x8xf32>
    %337 = arith.subf %333, %336 : vector<8x8xf32>
    %338 = math.exp %337 : vector<8x8xf32>
    %cst_142 = arith.constant dense<0.000000e+00> : vector<8xf32>
    %339 = vector.multi_reduction <add>, %338, %cst_142 [1] : vector<8x8xf32> to vector<8xf32>
    %340 = vector.shape_cast %339 : vector<8xf32> to vector<8x1xf32>
    %341 = tpu.reciprocal %340 {approx = true} : vector<8x1xf32> -> vector<8x1xf32>
    %342 = arith.mulf %340, %341 : vector<8x1xf32>
    %cst_143 = arith.constant 2.000000e+00 : f32
    %343 = vector.broadcast %cst_143 : f32 to vector<8x1xf32>
    %344 = arith.subf %343, %342 : vector<8x1xf32>
    %345 = arith.mulf %341, %344 : vector<8x1xf32>
    %346 = vector.broadcast %345 : vector<8x1xf32> to vector<8x8xf32>
    %347 = arith.mulf %338, %346 : vector<8x8xf32>
    %cst_144 = arith.constant dense<0.000000e+00> : vector<8x8xf32>
    %348 = tpu.matmul %347, %331, %cst_144 {dimension_numbers = #tpu.dot_dimension_numbers<[1], [0], [0], [1], [0, 0, 1, 1], [], []>} : vector<8x8xf32>, vector<8x8xf32>, vector<8x8xf32> -> vector<8x8xf32>
    %c4 = arith.constant 4 : index
    %c0_145 = arith.constant 0 : index
    %c0_146 = arith.constant 0 : index
    %349 = vector.load %arg5[%c4, %c0_145, %c0_146] : memref<8x8x32xf32, #tpu.memory_space<vmem>>, vector<1x8x32xf32>
    %350 = vector.shape_cast %349 : vector<1x8x32xf32> to vector<8x32xf32>
    %cst_147 = arith.constant dense<0.000000e+00> : vector<8x32xf32>
    %351 = tpu.matmul %348, %350, %cst_147 {dimension_numbers = #tpu.dot_dimension_numbers<[1], [0], [0], [1], [0, 0, 1, 1], [], []>} : vector<8x8xf32>, vector<8x32xf32>, vector<8x32xf32> -> vector<8x32xf32>
    %352 = arith.addf %328, %351 : vector<8x32xf32>
    %353 = vector.extract_strided_slice %327 {offsets = [0, 8], sizes = [8, 8], strides = [1, 1]} : vector<8x96xf32> to vector<8x8xf32>
    %354 = vector.extract_strided_slice %327 {offsets = [0, 40], sizes = [8, 8], strides = [1, 1]} : vector<8x96xf32> to vector<8x8xf32>
    %355 = vector.extract_strided_slice %327 {offsets = [0, 72], sizes = [8, 8], strides = [1, 1]} : vector<8x96xf32> to vector<8x8xf32>
    %356 = tpu.transpose %354, [1, 0] : vector<8x8xf32> -> vector<8x8xf32>
    %cst_148 = arith.constant dense<0.000000e+00> : vector<8x8xf32>
    %357 = tpu.matmul %353, %356, %cst_148 {dimension_numbers = #tpu.dot_dimension_numbers<[1], [0], [0], [1], [0, 0, 1, 1], [], []>} : vector<8x8xf32>, vector<8x8xf32>, vector<8x8xf32> -> vector<8x8xf32>
    %cst_149 = arith.constant dense<0xFF800000> : vector<8xf32>
    %358 = vector.multi_reduction <maximumf>, %357, %cst_149 [1] : vector<8x8xf32> to vector<8xf32>
    %359 = vector.shape_cast %358 : vector<8xf32> to vector<8x1xf32>
    %360 = vector.broadcast %359 : vector<8x1xf32> to vector<8x8xf32>
    %361 = arith.subf %357, %360 : vector<8x8xf32>
    %362 = math.exp %361 : vector<8x8xf32>
    %cst_150 = arith.constant dense<0.000000e+00> : vector<8xf32>
    %363 = vector.multi_reduction <add>, %362, %cst_150 [1] : vector<8x8xf32> to vector<8xf32>
    %364 = vector.shape_cast %363 : vector<8xf32> to vector<8x1xf32>
    %365 = tpu.reciprocal %364 {approx = true} : vector<8x1xf32> -> vector<8x1xf32>
    %366 = arith.mulf %364, %365 : vector<8x1xf32>
    %cst_151 = arith.constant 2.000000e+00 : f32
    %367 = vector.broadcast %cst_151 : f32 to vector<8x1xf32>
    %368 = arith.subf %367, %366 : vector<8x1xf32>
    %369 = arith.mulf %365, %368 : vector<8x1xf32>
    %370 = vector.broadcast %369 : vector<8x1xf32> to vector<8x8xf32>
    %371 = arith.mulf %362, %370 : vector<8x8xf32>
    %cst_152 = arith.constant dense<0.000000e+00> : vector<8x8xf32>
    %372 = tpu.matmul %371, %355, %cst_152 {dimension_numbers = #tpu.dot_dimension_numbers<[1], [0], [0], [1], [0, 0, 1, 1], [], []>} : vector<8x8xf32>, vector<8x8xf32>, vector<8x8xf32> -> vector<8x8xf32>
    %c5 = arith.constant 5 : index
    %c0_153 = arith.constant 0 : index
    %c0_154 = arith.constant 0 : index
    %373 = vector.load %arg5[%c5, %c0_153, %c0_154] : memref<8x8x32xf32, #tpu.memory_space<vmem>>, vector<1x8x32xf32>
    %374 = vector.shape_cast %373 : vector<1x8x32xf32> to vector<8x32xf32>
    %cst_155 = arith.constant dense<0.000000e+00> : vector<8x32xf32>
    %375 = tpu.matmul %372, %374, %cst_155 {dimension_numbers = #tpu.dot_dimension_numbers<[1], [0], [0], [1], [0, 0, 1, 1], [], []>} : vector<8x8xf32>, vector<8x32xf32>, vector<8x32xf32> -> vector<8x32xf32>
    %376 = arith.addf %352, %375 : vector<8x32xf32>
    %377 = vector.extract_strided_slice %327 {offsets = [0, 16], sizes = [8, 8], strides = [1, 1]} : vector<8x96xf32> to vector<8x8xf32>
    %378 = vector.extract_strided_slice %327 {offsets = [0, 48], sizes = [8, 8], strides = [1, 1]} : vector<8x96xf32> to vector<8x8xf32>
    %379 = vector.extract_strided_slice %327 {offsets = [0, 80], sizes = [8, 8], strides = [1, 1]} : vector<8x96xf32> to vector<8x8xf32>
    %380 = tpu.transpose %378, [1, 0] : vector<8x8xf32> -> vector<8x8xf32>
    %cst_156 = arith.constant dense<0.000000e+00> : vector<8x8xf32>
    %381 = tpu.matmul %377, %380, %cst_156 {dimension_numbers = #tpu.dot_dimension_numbers<[1], [0], [0], [1], [0, 0, 1, 1], [], []>} : vector<8x8xf32>, vector<8x8xf32>, vector<8x8xf32> -> vector<8x8xf32>
    %cst_157 = arith.constant dense<0xFF800000> : vector<8xf32>
    %382 = vector.multi_reduction <maximumf>, %381, %cst_157 [1] : vector<8x8xf32> to vector<8xf32>
    %383 = vector.shape_cast %382 : vector<8xf32> to vector<8x1xf32>
    %384 = vector.broadcast %383 : vector<8x1xf32> to vector<8x8xf32>
    %385 = arith.subf %381, %384 : vector<8x8xf32>
    %386 = math.exp %385 : vector<8x8xf32>
    %cst_158 = arith.constant dense<0.000000e+00> : vector<8xf32>
    %387 = vector.multi_reduction <add>, %386, %cst_158 [1] : vector<8x8xf32> to vector<8xf32>
    %388 = vector.shape_cast %387 : vector<8xf32> to vector<8x1xf32>
    %389 = tpu.reciprocal %388 {approx = true} : vector<8x1xf32> -> vector<8x1xf32>
    %390 = arith.mulf %388, %389 : vector<8x1xf32>
    %cst_159 = arith.constant 2.000000e+00 : f32
    %391 = vector.broadcast %cst_159 : f32 to vector<8x1xf32>
    %392 = arith.subf %391, %390 : vector<8x1xf32>
    %393 = arith.mulf %389, %392 : vector<8x1xf32>
    %394 = vector.broadcast %393 : vector<8x1xf32> to vector<8x8xf32>
    %395 = arith.mulf %386, %394 : vector<8x8xf32>
    %cst_160 = arith.constant dense<0.000000e+00> : vector<8x8xf32>
    %396 = tpu.matmul %395, %379, %cst_160 {dimension_numbers = #tpu.dot_dimension_numbers<[1], [0], [0], [1], [0, 0, 1, 1], [], []>} : vector<8x8xf32>, vector<8x8xf32>, vector<8x8xf32> -> vector<8x8xf32>
    %c6 = arith.constant 6 : index
    %c0_161 = arith.constant 0 : index
    %c0_162 = arith.constant 0 : index
    %397 = vector.load %arg5[%c6, %c0_161, %c0_162] : memref<8x8x32xf32, #tpu.memory_space<vmem>>, vector<1x8x32xf32>
    %398 = vector.shape_cast %397 : vector<1x8x32xf32> to vector<8x32xf32>
    %cst_163 = arith.constant dense<0.000000e+00> : vector<8x32xf32>
    %399 = tpu.matmul %396, %398, %cst_163 {dimension_numbers = #tpu.dot_dimension_numbers<[1], [0], [0], [1], [0, 0, 1, 1], [], []>} : vector<8x8xf32>, vector<8x32xf32>, vector<8x32xf32> -> vector<8x32xf32>
    %400 = arith.addf %376, %399 : vector<8x32xf32>
    %401 = vector.extract_strided_slice %327 {offsets = [0, 24], sizes = [8, 8], strides = [1, 1]} : vector<8x96xf32> to vector<8x8xf32>
    %402 = vector.extract_strided_slice %327 {offsets = [0, 56], sizes = [8, 8], strides = [1, 1]} : vector<8x96xf32> to vector<8x8xf32>
    %403 = vector.extract_strided_slice %327 {offsets = [0, 88], sizes = [8, 8], strides = [1, 1]} : vector<8x96xf32> to vector<8x8xf32>
    %404 = tpu.transpose %402, [1, 0] : vector<8x8xf32> -> vector<8x8xf32>
    %cst_164 = arith.constant dense<0.000000e+00> : vector<8x8xf32>
    %405 = tpu.matmul %401, %404, %cst_164 {dimension_numbers = #tpu.dot_dimension_numbers<[1], [0], [0], [1], [0, 0, 1, 1], [], []>} : vector<8x8xf32>, vector<8x8xf32>, vector<8x8xf32> -> vector<8x8xf32>
    %cst_165 = arith.constant dense<0xFF800000> : vector<8xf32>
    %406 = vector.multi_reduction <maximumf>, %405, %cst_165 [1] : vector<8x8xf32> to vector<8xf32>
    %407 = vector.shape_cast %406 : vector<8xf32> to vector<8x1xf32>
    %408 = vector.broadcast %407 : vector<8x1xf32> to vector<8x8xf32>
    %409 = arith.subf %405, %408 : vector<8x8xf32>
    %410 = math.exp %409 : vector<8x8xf32>
    %cst_166 = arith.constant dense<0.000000e+00> : vector<8xf32>
    %411 = vector.multi_reduction <add>, %410, %cst_166 [1] : vector<8x8xf32> to vector<8xf32>
    %412 = vector.shape_cast %411 : vector<8xf32> to vector<8x1xf32>
    %413 = tpu.reciprocal %412 {approx = true} : vector<8x1xf32> -> vector<8x1xf32>
    %414 = arith.mulf %412, %413 : vector<8x1xf32>
    %cst_167 = arith.constant 2.000000e+00 : f32
    %415 = vector.broadcast %cst_167 : f32 to vector<8x1xf32>
    %416 = arith.subf %415, %414 : vector<8x1xf32>
    %417 = arith.mulf %413, %416 : vector<8x1xf32>
    %418 = vector.broadcast %417 : vector<8x1xf32> to vector<8x8xf32>
    %419 = arith.mulf %410, %418 : vector<8x8xf32>
    %cst_168 = arith.constant dense<0.000000e+00> : vector<8x8xf32>
    %420 = tpu.matmul %419, %403, %cst_168 {dimension_numbers = #tpu.dot_dimension_numbers<[1], [0], [0], [1], [0, 0, 1, 1], [], []>} : vector<8x8xf32>, vector<8x8xf32>, vector<8x8xf32> -> vector<8x8xf32>
    %c7 = arith.constant 7 : index
    %c0_169 = arith.constant 0 : index
    %c0_170 = arith.constant 0 : index
    %421 = vector.load %arg5[%c7, %c0_169, %c0_170] : memref<8x8x32xf32, #tpu.memory_space<vmem>>, vector<1x8x32xf32>
    %422 = vector.shape_cast %421 : vector<1x8x32xf32> to vector<8x32xf32>
    %cst_171 = arith.constant dense<0.000000e+00> : vector<8x32xf32>
    %423 = tpu.matmul %420, %422, %cst_171 {dimension_numbers = #tpu.dot_dimension_numbers<[1], [0], [0], [1], [0, 0, 1, 1], [], []>} : vector<8x8xf32>, vector<8x32xf32>, vector<8x32xf32> -> vector<8x32xf32>
    %424 = arith.addf %400, %423 : vector<8x32xf32>
    %425 = vector.extract_strided_slice %326 {offsets = [8, 0], sizes = [8, 96], strides = [1, 1]} : vector<16x96xf32> to vector<8x96xf32>
    %cst_172 = arith.constant 0.000000e+00 : f32
    %426 = vector.broadcast %cst_172 : f32 to vector<8x32xf32>
    %427 = vector.extract_strided_slice %425 {offsets = [0, 0], sizes = [8, 8], strides = [1, 1]} : vector<8x96xf32> to vector<8x8xf32>
    %428 = vector.extract_strided_slice %425 {offsets = [0, 32], sizes = [8, 8], strides = [1, 1]} : vector<8x96xf32> to vector<8x8xf32>
    %429 = vector.extract_strided_slice %425 {offsets = [0, 64], sizes = [8, 8], strides = [1, 1]} : vector<8x96xf32> to vector<8x8xf32>
    %430 = tpu.transpose %428, [1, 0] : vector<8x8xf32> -> vector<8x8xf32>
    %cst_173 = arith.constant dense<0.000000e+00> : vector<8x8xf32>
    %431 = tpu.matmul %427, %430, %cst_173 {dimension_numbers = #tpu.dot_dimension_numbers<[1], [0], [0], [1], [0, 0, 1, 1], [], []>} : vector<8x8xf32>, vector<8x8xf32>, vector<8x8xf32> -> vector<8x8xf32>
    %cst_174 = arith.constant dense<0xFF800000> : vector<8xf32>
    %432 = vector.multi_reduction <maximumf>, %431, %cst_174 [1] : vector<8x8xf32> to vector<8xf32>
    %433 = vector.shape_cast %432 : vector<8xf32> to vector<8x1xf32>
    %434 = vector.broadcast %433 : vector<8x1xf32> to vector<8x8xf32>
    %435 = arith.subf %431, %434 : vector<8x8xf32>
    %436 = math.exp %435 : vector<8x8xf32>
    %cst_175 = arith.constant dense<0.000000e+00> : vector<8xf32>
    %437 = vector.multi_reduction <add>, %436, %cst_175 [1] : vector<8x8xf32> to vector<8xf32>
    %438 = vector.shape_cast %437 : vector<8xf32> to vector<8x1xf32>
    %439 = tpu.reciprocal %438 {approx = true} : vector<8x1xf32> -> vector<8x1xf32>
    %440 = arith.mulf %438, %439 : vector<8x1xf32>
    %cst_176 = arith.constant 2.000000e+00 : f32
    %441 = vector.broadcast %cst_176 : f32 to vector<8x1xf32>
    %442 = arith.subf %441, %440 : vector<8x1xf32>
    %443 = arith.mulf %439, %442 : vector<8x1xf32>
    %444 = vector.broadcast %443 : vector<8x1xf32> to vector<8x8xf32>
    %445 = arith.mulf %436, %444 : vector<8x8xf32>
    %cst_177 = arith.constant dense<0.000000e+00> : vector<8x8xf32>
    %446 = tpu.matmul %445, %429, %cst_177 {dimension_numbers = #tpu.dot_dimension_numbers<[1], [0], [0], [1], [0, 0, 1, 1], [], []>} : vector<8x8xf32>, vector<8x8xf32>, vector<8x8xf32> -> vector<8x8xf32>
    %c4_178 = arith.constant 4 : index
    %c0_179 = arith.constant 0 : index
    %c0_180 = arith.constant 0 : index
    %447 = vector.load %arg5[%c4_178, %c0_179, %c0_180] : memref<8x8x32xf32, #tpu.memory_space<vmem>>, vector<1x8x32xf32>
    %448 = vector.shape_cast %447 : vector<1x8x32xf32> to vector<8x32xf32>
    %cst_181 = arith.constant dense<0.000000e+00> : vector<8x32xf32>
    %449 = tpu.matmul %446, %448, %cst_181 {dimension_numbers = #tpu.dot_dimension_numbers<[1], [0], [0], [1], [0, 0, 1, 1], [], []>} : vector<8x8xf32>, vector<8x32xf32>, vector<8x32xf32> -> vector<8x32xf32>
    %450 = arith.addf %426, %449 : vector<8x32xf32>
    %451 = vector.extract_strided_slice %425 {offsets = [0, 8], sizes = [8, 8], strides = [1, 1]} : vector<8x96xf32> to vector<8x8xf32>
    %452 = vector.extract_strided_slice %425 {offsets = [0, 40], sizes = [8, 8], strides = [1, 1]} : vector<8x96xf32> to vector<8x8xf32>
    %453 = vector.extract_strided_slice %425 {offsets = [0, 72], sizes = [8, 8], strides = [1, 1]} : vector<8x96xf32> to vector<8x8xf32>
    %454 = tpu.transpose %452, [1, 0] : vector<8x8xf32> -> vector<8x8xf32>
    %cst_182 = arith.constant dense<0.000000e+00> : vector<8x8xf32>
    %455 = tpu.matmul %451, %454, %cst_182 {dimension_numbers = #tpu.dot_dimension_numbers<[1], [0], [0], [1], [0, 0, 1, 1], [], []>} : vector<8x8xf32>, vector<8x8xf32>, vector<8x8xf32> -> vector<8x8xf32>
    %cst_183 = arith.constant dense<0xFF800000> : vector<8xf32>
    %456 = vector.multi_reduction <maximumf>, %455, %cst_183 [1] : vector<8x8xf32> to vector<8xf32>
    %457 = vector.shape_cast %456 : vector<8xf32> to vector<8x1xf32>
    %458 = vector.broadcast %457 : vector<8x1xf32> to vector<8x8xf32>
    %459 = arith.subf %455, %458 : vector<8x8xf32>
    %460 = math.exp %459 : vector<8x8xf32>
    %cst_184 = arith.constant dense<0.000000e+00> : vector<8xf32>
    %461 = vector.multi_reduction <add>, %460, %cst_184 [1] : vector<8x8xf32> to vector<8xf32>
    %462 = vector.shape_cast %461 : vector<8xf32> to vector<8x1xf32>
    %463 = tpu.reciprocal %462 {approx = true} : vector<8x1xf32> -> vector<8x1xf32>
    %464 = arith.mulf %462, %463 : vector<8x1xf32>
    %cst_185 = arith.constant 2.000000e+00 : f32
    %465 = vector.broadcast %cst_185 : f32 to vector<8x1xf32>
    %466 = arith.subf %465, %464 : vector<8x1xf32>
    %467 = arith.mulf %463, %466 : vector<8x1xf32>
    %468 = vector.broadcast %467 : vector<8x1xf32> to vector<8x8xf32>
    %469 = arith.mulf %460, %468 : vector<8x8xf32>
    %cst_186 = arith.constant dense<0.000000e+00> : vector<8x8xf32>
    %470 = tpu.matmul %469, %453, %cst_186 {dimension_numbers = #tpu.dot_dimension_numbers<[1], [0], [0], [1], [0, 0, 1, 1], [], []>} : vector<8x8xf32>, vector<8x8xf32>, vector<8x8xf32> -> vector<8x8xf32>
    %c5_187 = arith.constant 5 : index
    %c0_188 = arith.constant 0 : index
    %c0_189 = arith.constant 0 : index
    %471 = vector.load %arg5[%c5_187, %c0_188, %c0_189] : memref<8x8x32xf32, #tpu.memory_space<vmem>>, vector<1x8x32xf32>
    %472 = vector.shape_cast %471 : vector<1x8x32xf32> to vector<8x32xf32>
    %cst_190 = arith.constant dense<0.000000e+00> : vector<8x32xf32>
    %473 = tpu.matmul %470, %472, %cst_190 {dimension_numbers = #tpu.dot_dimension_numbers<[1], [0], [0], [1], [0, 0, 1, 1], [], []>} : vector<8x8xf32>, vector<8x32xf32>, vector<8x32xf32> -> vector<8x32xf32>
    %474 = arith.addf %450, %473 : vector<8x32xf32>
    %475 = vector.extract_strided_slice %425 {offsets = [0, 16], sizes = [8, 8], strides = [1, 1]} : vector<8x96xf32> to vector<8x8xf32>
    %476 = vector.extract_strided_slice %425 {offsets = [0, 48], sizes = [8, 8], strides = [1, 1]} : vector<8x96xf32> to vector<8x8xf32>
    %477 = vector.extract_strided_slice %425 {offsets = [0, 80], sizes = [8, 8], strides = [1, 1]} : vector<8x96xf32> to vector<8x8xf32>
    %478 = tpu.transpose %476, [1, 0] : vector<8x8xf32> -> vector<8x8xf32>
    %cst_191 = arith.constant dense<0.000000e+00> : vector<8x8xf32>
    %479 = tpu.matmul %475, %478, %cst_191 {dimension_numbers = #tpu.dot_dimension_numbers<[1], [0], [0], [1], [0, 0, 1, 1], [], []>} : vector<8x8xf32>, vector<8x8xf32>, vector<8x8xf32> -> vector<8x8xf32>
    %cst_192 = arith.constant dense<0xFF800000> : vector<8xf32>
    %480 = vector.multi_reduction <maximumf>, %479, %cst_192 [1] : vector<8x8xf32> to vector<8xf32>
    %481 = vector.shape_cast %480 : vector<8xf32> to vector<8x1xf32>
    %482 = vector.broadcast %481 : vector<8x1xf32> to vector<8x8xf32>
    %483 = arith.subf %479, %482 : vector<8x8xf32>
    %484 = math.exp %483 : vector<8x8xf32>
    %cst_193 = arith.constant dense<0.000000e+00> : vector<8xf32>
    %485 = vector.multi_reduction <add>, %484, %cst_193 [1] : vector<8x8xf32> to vector<8xf32>
    %486 = vector.shape_cast %485 : vector<8xf32> to vector<8x1xf32>
    %487 = tpu.reciprocal %486 {approx = true} : vector<8x1xf32> -> vector<8x1xf32>
    %488 = arith.mulf %486, %487 : vector<8x1xf32>
    %cst_194 = arith.constant 2.000000e+00 : f32
    %489 = vector.broadcast %cst_194 : f32 to vector<8x1xf32>
    %490 = arith.subf %489, %488 : vector<8x1xf32>
    %491 = arith.mulf %487, %490 : vector<8x1xf32>
    %492 = vector.broadcast %491 : vector<8x1xf32> to vector<8x8xf32>
    %493 = arith.mulf %484, %492 : vector<8x8xf32>
    %cst_195 = arith.constant dense<0.000000e+00> : vector<8x8xf32>
    %494 = tpu.matmul %493, %477, %cst_195 {dimension_numbers = #tpu.dot_dimension_numbers<[1], [0], [0], [1], [0, 0, 1, 1], [], []>} : vector<8x8xf32>, vector<8x8xf32>, vector<8x8xf32> -> vector<8x8xf32>
    %c6_196 = arith.constant 6 : index
    %c0_197 = arith.constant 0 : index
    %c0_198 = arith.constant 0 : index
    %495 = vector.load %arg5[%c6_196, %c0_197, %c0_198] : memref<8x8x32xf32, #tpu.memory_space<vmem>>, vector<1x8x32xf32>
    %496 = vector.shape_cast %495 : vector<1x8x32xf32> to vector<8x32xf32>
    %cst_199 = arith.constant dense<0.000000e+00> : vector<8x32xf32>
    %497 = tpu.matmul %494, %496, %cst_199 {dimension_numbers = #tpu.dot_dimension_numbers<[1], [0], [0], [1], [0, 0, 1, 1], [], []>} : vector<8x8xf32>, vector<8x32xf32>, vector<8x32xf32> -> vector<8x32xf32>
    %498 = arith.addf %474, %497 : vector<8x32xf32>
    %499 = vector.extract_strided_slice %425 {offsets = [0, 24], sizes = [8, 8], strides = [1, 1]} : vector<8x96xf32> to vector<8x8xf32>
    %500 = vector.extract_strided_slice %425 {offsets = [0, 56], sizes = [8, 8], strides = [1, 1]} : vector<8x96xf32> to vector<8x8xf32>
    %501 = vector.extract_strided_slice %425 {offsets = [0, 88], sizes = [8, 8], strides = [1, 1]} : vector<8x96xf32> to vector<8x8xf32>
    %502 = tpu.transpose %500, [1, 0] : vector<8x8xf32> -> vector<8x8xf32>
    %cst_200 = arith.constant dense<0.000000e+00> : vector<8x8xf32>
    %503 = tpu.matmul %499, %502, %cst_200 {dimension_numbers = #tpu.dot_dimension_numbers<[1], [0], [0], [1], [0, 0, 1, 1], [], []>} : vector<8x8xf32>, vector<8x8xf32>, vector<8x8xf32> -> vector<8x8xf32>
    %cst_201 = arith.constant dense<0xFF800000> : vector<8xf32>
    %504 = vector.multi_reduction <maximumf>, %503, %cst_201 [1] : vector<8x8xf32> to vector<8xf32>
    %505 = vector.shape_cast %504 : vector<8xf32> to vector<8x1xf32>
    %506 = vector.broadcast %505 : vector<8x1xf32> to vector<8x8xf32>
    %507 = arith.subf %503, %506 : vector<8x8xf32>
    %508 = math.exp %507 : vector<8x8xf32>
    %cst_202 = arith.constant dense<0.000000e+00> : vector<8xf32>
    %509 = vector.multi_reduction <add>, %508, %cst_202 [1] : vector<8x8xf32> to vector<8xf32>
    %510 = vector.shape_cast %509 : vector<8xf32> to vector<8x1xf32>
    %511 = tpu.reciprocal %510 {approx = true} : vector<8x1xf32> -> vector<8x1xf32>
    %512 = arith.mulf %510, %511 : vector<8x1xf32>
    %cst_203 = arith.constant 2.000000e+00 : f32
    %513 = vector.broadcast %cst_203 : f32 to vector<8x1xf32>
    %514 = arith.subf %513, %512 : vector<8x1xf32>
    %515 = arith.mulf %511, %514 : vector<8x1xf32>
    %516 = vector.broadcast %515 : vector<8x1xf32> to vector<8x8xf32>
    %517 = arith.mulf %508, %516 : vector<8x8xf32>
    %cst_204 = arith.constant dense<0.000000e+00> : vector<8x8xf32>
    %518 = tpu.matmul %517, %501, %cst_204 {dimension_numbers = #tpu.dot_dimension_numbers<[1], [0], [0], [1], [0, 0, 1, 1], [], []>} : vector<8x8xf32>, vector<8x8xf32>, vector<8x8xf32> -> vector<8x8xf32>
    %c7_205 = arith.constant 7 : index
    %c0_206 = arith.constant 0 : index
    %c0_207 = arith.constant 0 : index
    %519 = vector.load %arg5[%c7_205, %c0_206, %c0_207] : memref<8x8x32xf32, #tpu.memory_space<vmem>>, vector<1x8x32xf32>
    %520 = vector.shape_cast %519 : vector<1x8x32xf32> to vector<8x32xf32>
    %cst_208 = arith.constant dense<0.000000e+00> : vector<8x32xf32>
    %521 = tpu.matmul %518, %520, %cst_208 {dimension_numbers = #tpu.dot_dimension_numbers<[1], [0], [0], [1], [0, 0, 1, 1], [], []>} : vector<8x8xf32>, vector<8x32xf32>, vector<8x32xf32> -> vector<8x32xf32>
    %522 = arith.addf %498, %521 : vector<8x32xf32>
    %523 = tpu.concatenate %424, %522 in 0 : vector<8x32xf32>, vector<8x32xf32> -> vector<16x32xf32>
    %524 = arith.addf %288, %523 : vector<16x32xf32>
    %c1_209 = arith.constant 1 : index
    %c0_210 = arith.constant 0 : index
    %c0_211 = arith.constant 0 : index
    %525 = vector.load %arg6[%c1_209, %c0_210, %c0_211] : memref<2x1x32xf32, #tpu.memory_space<vmem>>, vector<1x1x32xf32>
    %526 = vector.shape_cast %525 : vector<1x1x32xf32> to vector<1x32xf32>
    %527 = vector.broadcast %526 : vector<1x32xf32> to vector<16x32xf32>
    %528 = arith.addf %524, %527 : vector<16x32xf32>
    %c1_212 = arith.constant 1 : index
    %c0_213 = arith.constant 0 : index
    %c0_214 = arith.constant 0 : index
    %529 = vector.load %arg7[%c1_212, %c0_213, %c0_214] : memref<2x1x32xf32, #tpu.memory_space<vmem>>, vector<1x1x32xf32>
    %530 = vector.shape_cast %529 : vector<1x1x32xf32> to vector<1x32xf32>
    %c1_215 = arith.constant 1 : index
    %c0_216 = arith.constant 0 : index
    %c0_217 = arith.constant 0 : index
    %531 = vector.load %arg8[%c1_215, %c0_216, %c0_217] : memref<2x1x32xf32, #tpu.memory_space<vmem>>, vector<1x1x32xf32>
    %532 = vector.shape_cast %531 : vector<1x1x32xf32> to vector<1x32xf32>
    %cst_218 = arith.constant dense<0.000000e+00> : vector<16xf32>
    %533 = vector.multi_reduction <add>, %528, %cst_218 [1] : vector<16x32xf32> to vector<16xf32>
    %534 = vector.shape_cast %533 : vector<16xf32> to vector<16x1xf32>
    %cst_219 = arith.constant 3.200000e+01 : f32
    %535 = vector.broadcast %cst_219 : f32 to vector<16x1xf32>
    %536 = arith.divf %534, %535 : vector<16x1xf32>
    %537 = vector.broadcast %536 : vector<16x1xf32> to vector<16x32xf32>
    %538 = arith.subf %528, %537 : vector<16x32xf32>
    %539 = arith.mulf %538, %538 : vector<16x32xf32>
    %cst_220 = arith.constant dense<0.000000e+00> : vector<16xf32>
    %540 = vector.multi_reduction <add>, %539, %cst_220 [1] : vector<16x32xf32> to vector<16xf32>
    %541 = vector.shape_cast %540 : vector<16xf32> to vector<16x1xf32>
    %cst_221 = arith.constant 3.100000e+01 : f32
    %542 = vector.broadcast %cst_221 : f32 to vector<16x1xf32>
    %543 = arith.divf %541, %542 : vector<16x1xf32>
    %544 = math.sqrt %543 : vector<16x1xf32>
    %cst_222 = arith.constant 9.99999997E-7 : f32
    %545 = vector.broadcast %cst_222 : f32 to vector<16x1xf32>
    %546 = arith.addf %544, %545 : vector<16x1xf32>
    %547 = tpu.reciprocal %546 {approx = true} : vector<16x1xf32> -> vector<16x1xf32>
    %548 = arith.mulf %546, %547 : vector<16x1xf32>
    %cst_223 = arith.constant 2.000000e+00 : f32
    %549 = vector.broadcast %cst_223 : f32 to vector<16x1xf32>
    %550 = arith.subf %549, %548 : vector<16x1xf32>
    %551 = arith.mulf %547, %550 : vector<16x1xf32>
    %552 = vector.broadcast %536 : vector<16x1xf32> to vector<16x32xf32>
    %553 = arith.subf %528, %552 : vector<16x32xf32>
    %554 = vector.broadcast %530 : vector<1x32xf32> to vector<16x32xf32>
    %555 = arith.mulf %554, %553 : vector<16x32xf32>
    %556 = vector.broadcast %551 : vector<16x1xf32> to vector<16x32xf32>
    %557 = arith.mulf %555, %556 : vector<16x32xf32>
    %558 = vector.broadcast %532 : vector<1x32xf32> to vector<16x32xf32>
    %559 = arith.addf %557, %558 : vector<16x32xf32>
    %c1_224 = arith.constant 1 : index
    %c0_225 = arith.constant 0 : index
    %c0_226 = arith.constant 0 : index
    %560 = vector.load %arg9[%c1_224, %c0_225, %c0_226] : memref<2x32x64xf32, #tpu.memory_space<vmem>>, vector<1x32x64xf32>
    %561 = vector.shape_cast %560 : vector<1x32x64xf32> to vector<32x64xf32>
    %cst_227 = arith.constant dense<0.000000e+00> : vector<16x64xf32>
    %562 = tpu.matmul %559, %561, %cst_227 {dimension_numbers = #tpu.dot_dimension_numbers<[1], [0], [0], [1], [0, 0, 1, 1], [], []>} : vector<16x32xf32>, vector<32x64xf32>, vector<16x64xf32> -> vector<16x64xf32>
    %c1_228 = arith.constant 1 : index
    %c0_229 = arith.constant 0 : index
    %c0_230 = arith.constant 0 : index
    %563 = vector.load %arg10[%c1_228, %c0_229, %c0_230] : memref<2x1x64xf32, #tpu.memory_space<vmem>>, vector<1x1x64xf32>
    %564 = vector.shape_cast %563 : vector<1x1x64xf32> to vector<1x64xf32>
    %565 = vector.broadcast %564 : vector<1x64xf32> to vector<16x64xf32>
    %566 = arith.addf %562, %565 : vector<16x64xf32>
    %cst_231 = arith.constant 0.000000e+00 : f32
    %567 = vector.broadcast %cst_231 : f32 to vector<16x64xf32>
    %568 = arith.maximumf %566, %567 : vector<16x64xf32>
    %c1_232 = arith.constant 1 : index
    %c0_233 = arith.constant 0 : index
    %c0_234 = arith.constant 0 : index
    %569 = vector.load %arg11[%c1_232, %c0_233, %c0_234] : memref<2x64x32xf32, #tpu.memory_space<vmem>>, vector<1x64x32xf32>
    %570 = vector.shape_cast %569 : vector<1x64x32xf32> to vector<64x32xf32>
    %cst_235 = arith.constant dense<0.000000e+00> : vector<16x32xf32>
    %571 = tpu.matmul %568, %570, %cst_235 {dimension_numbers = #tpu.dot_dimension_numbers<[1], [0], [0], [1], [0, 0, 1, 1], [], []>} : vector<16x64xf32>, vector<64x32xf32>, vector<16x32xf32> -> vector<16x32xf32>
    %572 = arith.addf %528, %571 : vector<16x32xf32>
    %c1_236 = arith.constant 1 : index
    %c0_237 = arith.constant 0 : index
    %c0_238 = arith.constant 0 : index
    %573 = vector.load %arg12[%c1_236, %c0_237, %c0_238] : memref<2x1x32xf32, #tpu.memory_space<vmem>>, vector<1x1x32xf32>
    %574 = vector.shape_cast %573 : vector<1x1x32xf32> to vector<1x32xf32>
    %575 = vector.broadcast %574 : vector<1x32xf32> to vector<16x32xf32>
    %576 = arith.addf %572, %575 : vector<16x32xf32>
    %c0_239 = arith.constant 0 : index
    %c0_240 = arith.constant 0 : index
    %577 = vector.load %arg13[%c0_239, %c0_240] : memref<1x32xf32, #tpu.memory_space<vmem>>, vector<1x32xf32>
    %c0_241 = arith.constant 0 : index
    %c0_242 = arith.constant 0 : index
    %578 = vector.load %arg14[%c0_241, %c0_242] : memref<1x32xf32, #tpu.memory_space<vmem>>, vector<1x32xf32>
    %cst_243 = arith.constant dense<0.000000e+00> : vector<16xf32>
    %579 = vector.multi_reduction <add>, %576, %cst_243 [1] : vector<16x32xf32> to vector<16xf32>
    %580 = vector.shape_cast %579 : vector<16xf32> to vector<16x1xf32>
    %cst_244 = arith.constant 3.200000e+01 : f32
    %581 = vector.broadcast %cst_244 : f32 to vector<16x1xf32>
    %582 = arith.divf %580, %581 : vector<16x1xf32>
    %583 = vector.broadcast %582 : vector<16x1xf32> to vector<16x32xf32>
    %584 = arith.subf %576, %583 : vector<16x32xf32>
    %585 = arith.mulf %584, %584 : vector<16x32xf32>
    %cst_245 = arith.constant dense<0.000000e+00> : vector<16xf32>
    %586 = vector.multi_reduction <add>, %585, %cst_245 [1] : vector<16x32xf32> to vector<16xf32>
    %587 = vector.shape_cast %586 : vector<16xf32> to vector<16x1xf32>
    %cst_246 = arith.constant 3.100000e+01 : f32
    %588 = vector.broadcast %cst_246 : f32 to vector<16x1xf32>
    %589 = arith.divf %587, %588 : vector<16x1xf32>
    %590 = math.sqrt %589 : vector<16x1xf32>
    %cst_247 = arith.constant 9.99999997E-7 : f32
    %591 = vector.broadcast %cst_247 : f32 to vector<16x1xf32>
    %592 = arith.addf %590, %591 : vector<16x1xf32>
    %593 = tpu.reciprocal %592 {approx = true} : vector<16x1xf32> -> vector<16x1xf32>
    %594 = arith.mulf %592, %593 : vector<16x1xf32>
    %cst_248 = arith.constant 2.000000e+00 : f32
    %595 = vector.broadcast %cst_248 : f32 to vector<16x1xf32>
    %596 = arith.subf %595, %594 : vector<16x1xf32>
    %597 = arith.mulf %593, %596 : vector<16x1xf32>
    %598 = vector.broadcast %582 : vector<16x1xf32> to vector<16x32xf32>
    %599 = arith.subf %576, %598 : vector<16x32xf32>
    %600 = vector.broadcast %577 : vector<1x32xf32> to vector<16x32xf32>
    %601 = arith.mulf %600, %599 : vector<16x32xf32>
    %602 = vector.broadcast %597 : vector<16x1xf32> to vector<16x32xf32>
    %603 = arith.mulf %601, %602 : vector<16x32xf32>
    %604 = vector.broadcast %578 : vector<1x32xf32> to vector<16x32xf32>
    %605 = arith.addf %603, %604 : vector<16x32xf32>
    %c0_249 = arith.constant 0 : index
    %c0_250 = arith.constant 0 : index
    %606 = vector.load %arg15[%c0_249, %c0_250] : memref<16x32xf32, #tpu.memory_space<vmem>>, vector<16x32xf32>
    tpu.vector_store %arg15[%c0_249, %c0_250], %605 {strides = array<i32>} : memref<16x32xf32, #tpu.memory_space<vmem>>, vector<16x32xf32>,
    return
  }
}

</mosaic_0001>

<llo_original>
// kernel: encoder_forward.1
$region0: #{encoder_forward.1}
  #allocation0 [shape = 'u32[]', space=smem, size = 0x4, offset = 0x4, fixed_abs, tag = 'smem constant byte address 0x4 - core index']
  #allocation1 [shape = 'u32[144,128]{1,0:T(1,128)}', space=vmem, size = 0x12000, scoped, tag = 'internal scratch']
  %s0 = inlined_call_operand.hbm [shape: f32[16,32], index: 0, kind: input, shape index: {}]
  %s1 = inlined_call_operand.vmem [shape: f32[2,1,32], index: 1, kind: input, shape index: {}]
  %s2 = inlined_call_operand.vmem [shape: f32[2,1,32], index: 2, kind: input, shape index: {}]
  %s3 = inlined_call_operand.vmem [shape: f32[2,32,96], index: 3, kind: input, shape index: {}]
  %s4 = inlined_call_operand.vmem [shape: f32[2,1,96], index: 4, kind: input, shape index: {}]
  %s5 = inlined_call_operand.vmem [shape: f32[8,8,32], index: 5, kind: input, shape index: {}]
  %s6 = inlined_call_operand.vmem [shape: f32[2,1,32], index: 6, kind: input, shape index: {}]
  %s7 = inlined_call_operand.vmem [shape: f32[2,1,32], index: 7, kind: input, shape index: {}]
  %s8 = inlined_call_operand.vmem [shape: f32[2,1,32], index: 8, kind: input, shape index: {}]
  %s9 = inlined_call_operand.vmem [shape: f32[2,32,64], index: 9, kind: input, shape index: {}]
  %s10 = inlined_call_operand.vmem [shape: f32[2,1,64], index: 10, kind: input, shape index: {}]
  %s11 = inlined_call_operand.vmem [shape: f32[2,64,32], index: 11, kind: input, shape index: {}]
  %s12 = inlined_call_operand.vmem [shape: f32[2,1,32], index: 12, kind: input, shape index: {}]
  %s13 = inlined_call_operand.vmem [shape: f32[1,32], index: 13, kind: input, shape index: {}]
  %s14 = inlined_call_operand.vmem [shape: f32[1,32], index: 14, kind: input, shape index: {}]
  %s15 = inlined_call_operand.hbm [shape: f32[16,32], index: 15, kind: output, shape index: {}]
  %s16 = sld [smem:[#allocation0]]
  $region74: #{encoder_forward.1} parent=0
    _
  %s18 = ssub.s32 1, %s16
  %s19 = scalar_select 0, %s18, %s16
  $region1: #{encoder_forward.1} parent=0
    #allocation2 [shape = 'u8[8192]{0}', space=vmem, size = 0x2000, scoped, tag = 'input window, operand 0, single buffered']
    #allocation3 [shape = 's32[1]{0}', space=sflag, size = 0x4, scoped, tag = 'scoped memory for encoder_forward.1']
    #allocation4 [shape = 's32[1]{0}', space=sflag, size = 0x4, scoped, tag = 'scoped memory for encoder_forward.1']
    #allocation5 [shape = 'u8[8192]{0}', space=vmem, size = 0x2000, scoped, tag = 'output window, operand 0, single buffered']
    %20 = vsyncpa [#allocation3], 0
    %21 = vsyncpa [#allocation4], 0
    // Predicated region
    $region2: #{encoder_forward.1} parent=1 // pred_check
      _
    $region3: #{encoder_forward.1} parent=1 // pred_check_branch
      %23 = sbr.rel (0) target = $region5
    $region4: #{encoder_forward.1} parent=1 // pred_region
      %s25 = ssub.s32 256, 256
      %26 = vsyncadd [#allocation3], %s25
      %s27 = sshll.u32 [#allocation2], 4
      %s28 = int_to_ptr.vmem [resolvable:$true] %s27
      %33 = dma.hbm_to_vmem [thread:$0]  %s0, 256, %s28, [#allocation3], 128, 128, 8
    $region5: #{encoder_forward.1} parent=1 // pred_fallthru
      _
    // Predicated region
    $region6: #{encoder_forward.1} parent=1 // pred_check
      _
    $region7: #{encoder_forward.1} parent=1 // pred_check_branch
      %35 = sbr.rel (0) target = $region9
    $region8: #{encoder_forward.1} parent=1 // pred_region
      _
    $region9: #{encoder_forward.1} parent=1 // pred_fallthru
      _
    // Predicated region
    $region10: #{encoder_forward.1} parent=1 // pred_check
      _
    $region11: #{encoder_forward.1} parent=1 // pred_check_branch
      %37 = sbr.rel (0) target = $region13
    $region12: #{encoder_forward.1} parent=1 // pred_region
      _
    $region13: #{encoder_forward.1} parent=1 // pred_fallthru
      _
    // Predicated region
    $region14: #{encoder_forward.1} parent=1 // pred_check
      _
    $region15: #{encoder_forward.1} parent=1 // pred_check_branch
      %39 = sbr.rel (0) target = $region17
    $region16: #{encoder_forward.1} parent=1 // pred_region
      _
    $region17: #{encoder_forward.1} parent=1 // pred_fallthru
      _
    // Predicated region
    $region18: #{encoder_forward.1} parent=1 // pred_check
      _
    $region19: #{encoder_forward.1} parent=1 // pred_check_branch
      %41 = sbr.rel (0) target = $region21
    $region20: #{encoder_forward.1} parent=1 // pred_region
      _
    $region21: #{encoder_forward.1} parent=1 // pred_fallthru
      _
    // Predicated region
    $region22: #{encoder_forward.1} parent=1 // pred_check
      _
    $region23: #{encoder_forward.1} parent=1 // pred_check_branch
      %43 = sbr.rel (0) target = $region25
    $region24: #{encoder_forward.1} parent=1 // pred_region
      _
    $region25: #{encoder_forward.1} parent=1 // pred_fallthru
      _
    // Predicated region
    $region26: #{encoder_forward.1} parent=1 // pred_check
      _
    $region27: #{encoder_forward.1} parent=1 // pred_check_branch
      %45 = sbr.rel (0) target = $region29
    $region28: #{encoder_forward.1} parent=1 // pred_region
      _
    $region29: #{encoder_forward.1} parent=1 // pred_fallthru
      _
    // Predicated region
    $region30: #{encoder_forward.1} parent=1 // pred_check
      _
    $region31: #{encoder_forward.1} parent=1 // pred_check_branch
      %47 = sbr.rel (0) target = $region33
    $region32: #{encoder_forward.1} parent=1 // pred_region
      _
    $region33: #{encoder_forward.1} parent=1 // pred_fallthru
      _
    // Predicated region
    $region34: #{encoder_forward.1} parent=1 // pred_check
      _
    $region35: #{encoder_forward.1} parent=1 // pred_check_branch
      %49 = sbr.rel (0) target = $region37
    $region36: #{encoder_forward.1} parent=1 // pred_region
      _
    $region37: #{encoder_forward.1} parent=1 // pred_fallthru
      _
    // Predicated region
    $region38: #{encoder_forward.1} parent=1 // pred_check
      _
    $region39: #{encoder_forward.1} parent=1 // pred_check_branch
      %51 = sbr.rel (0) target = $region41
    $region40: #{encoder_forward.1} parent=1 // pred_region
      _
    $region41: #{encoder_forward.1} parent=1 // pred_fallthru
      _
    // Predicated region
    $region42: #{encoder_forward.1} parent=1 // pred_check
      _
    $region43: #{encoder_forward.1} parent=1 // pred_check_branch
      %53 = sbr.rel (0) target = $region45
    $region44: #{encoder_forward.1} parent=1 // pred_region
      _
    $region45: #{encoder_forward.1} parent=1 // pred_fallthru
      _
    // Predicated region
    $region46: #{encoder_forward.1} parent=1 // pred_check
      _
    $region47: #{encoder_forward.1} parent=1 // pred_check_branch
      %55 = sbr.rel (0) target = $region49
    $region48: #{encoder_forward.1} parent=1 // pred_region
      _
    $region49: #{encoder_forward.1} parent=1 // pred_fallthru
      _
    // Predicated region
    $region50: #{encoder_forward.1} parent=1 // pred_check
      _
    $region51: #{encoder_forward.1} parent=1 // pred_check_branch
      %57 = sbr.rel (0) target = $region53
    $region52: #{encoder_forward.1} parent=1 // pred_region
      _
    $region53: #{encoder_forward.1} parent=1 // pred_fallthru
      _
    // Predicated region
    $region54: #{encoder_forward.1} parent=1 // pred_check
      _
    $region55: #{encoder_forward.1} parent=1 // pred_check_branch
      %59 = sbr.rel (0) target = $region57
    $region56: #{encoder_forward.1} parent=1 // pred_region
      _
    $region57: #{encoder_forward.1} parent=1 // pred_fallthru
      _
    // Predicated region
    $region58: #{encoder_forward.1} parent=1 // pred_check
      _
    $region59: #{encoder_forward.1} parent=1 // pred_check_branch
      %61 = sbr.rel (0) target = $region61
    $region60: #{encoder_forward.1} parent=1 // pred_region
      _
    $region61: #{encoder_forward.1} parent=1 // pred_fallthru
      _
    // Predicated region
    $region62: #{encoder_forward.1} parent=1 // pred_check
      _
    $region63: #{encoder_forward.1} parent=1 // pred_check_branch
      %63 = sbr.rel (0) target = $region65
    $region64: #{encoder_forward.1} parent=1 // pred_region
      %64 = dma.done [#allocation3], 256
    $region65: #{encoder_forward.1} parent=1 // pred_fallthru
      _
    %v65 = vld [vmem:[#allocation2] sm:$0xff]
    %v66 = vld [vmem:[#allocation2 + $0x8] sm:$0xff]
    %v67 = vld [vmem:[%s1] sm:$0x1]
    %v68 = vld [vmem:[%s2] sm:$0x1]
    %vm69 = vcmask 261120
    %v70 = vsel %vm69, %v65, 0.0
    %71 = vadd.xlane.f32.xlu0 %v70
    %v72 = vpop.xlane.xlu0 %71
    %v73 = vsel %vm69, %v66, 0.0
    %74 = vadd.xlane.f32.xlu0 %v73
    %v75 = vpop.xlane.xlu0 %74
    %v76 = vrcp.pop 32.0
    %v77 = vmul.f32 %v72, %v76
    %v78 = vmul.f32 %v75, %v76
    %v79 = vsub.f32 %v65, %v77
    %v80 = vsub.f32 %v66, %v78
    %v81 = vmul.f32 %v79, %v79
    %v82 = vmul.f32 %v80, %v80
    %v83 = vsel %vm69, %v81, 0.0
    %84 = vadd.xlane.f32.xlu0 %v83
    %v85 = vpop.xlane.xlu0 %84
    %v86 = vsel %vm69, %v82, 0.0
    %87 = vadd.xlane.f32.xlu0 %v86
    %v88 = vpop.xlane.xlu0 %87
    %v89 = vrcp.pop 31.0
    %v90 = vmul.f32 %v85, %v89
    %v91 = vmul.f32 %v88, %v89
    %v92 = vrsqrt.pop %v90
    %v93 = vmul.f32 %v90, %v92
    %vm94 = vcmp.eq.f32.partialorder %v90, inf
    %v95 = vsel %vm94, %v90, %v93
    %vm96 = vcmp.eq.f32.partialorder %v90, 0.0
    %v97 = vand.u32 %v90, 2147483648
    %v98 = vsel %vm96, %v97, %v95
    %v99 = vrsqrt.pop %v91
    %v100 = vmul.f32 %v91, %v99
    %vm101 = vcmp.eq.f32.partialorder %v91, inf
    %v102 = vsel %vm101, %v91, %v100
    %vm103 = vcmp.eq.f32.partialorder %v91, 0.0
    %v104 = vand.u32 %v91, 2147483648
    %v105 = vsel %vm103, %v104, %v102
    %v106 = vadd.f32 %v98, 1e-06
    %v107 = vadd.f32 %v105, 1e-06
    %v108 = vrcp.pop %v106
    %v109 = vrcp.pop %v107
    %v110 = vmul.f32 %v106, %v108
    %v111 = vmul.f32 %v107, %v109
    %v112 = vsub.f32 2.0, %v110
    %v113 = vsub.f32 2.0, %v111
    %v114 = vmul.f32 %v108, %v112
    %v115 = vmul.f32 %v109, %v113
    %v117 = vlaneseq
    %v118 = vshrl.u32 %v117, 7
    %v119 = vsub.s32 0, %v118
    %v120 = vrot.slane %v67, %v119
    %v122 = vmul.f32 %v120, %v79
    %v123 = vmul.f32 %v120, %v80
    %v124 = vmul.f32 %v122, %v114
    %v125 = vmul.f32 %v123, %v115
    %v127 = vlaneseq
    %v128 = vshrl.u32 %v127, 7
    %v129 = vsub.s32 0, %v128
    %v130 = vrot.slane %v68, %v129
    %v132 = vadd.f32 %v124, %v130
    %v133 = vadd.f32 %v125, %v130
    %v134 = vld [vmem:[%s3] sm:$0xff]
    %v135 = vld [vmem:[%s3 + $0x8] sm:$0xff]
    %v136 = vld [vmem:[%s3 + $0x10] sm:$0xff]
    %v137 = vld [vmem:[%s3 + $0x18] sm:$0xff]
    %v138 = vld [vmem:[%s4] sm:$0x1]
    %v140 = vlaneseq
    %v141 = vshrl.u32 %v140, 7
    %v142 = vsub.s32 0, %v141
    %v143 = vrot.slane %v138, %v142
    %v146 = vsel %vm69, %v132, 0
    %v149 = vsel %vm69, %v133, 0
    %151 = vmatprep.subr.mxu0 0.0
    %152 = vmatpush1.msra.mxu0 %v134
    %153 = vmatprep.subr.mxu0 0.0
    %154 = vmatpush1.msra.mxu0 %v135
    %155 = vmatprep.subr.mxu0 0.0
    %156 = vmatpush1.msra.mxu0 %v136
    %157 = vmatprep.subr.mxu0 0.0
    %158 = vmatpush1.msra.mxu0 %v137
    %159 = vmatprep.subr.mxu0 0.0
    %160 = vmatpush1.msra.mxu0 0.0
    %161 = vmatprep.subr.mxu0 0.0
    %162 = vmatpush1.msra.mxu0 0.0
    %163 = vmatprep.subr.mxu0 0.0
    %164 = vmatpush1.msra.mxu0 0.0
    %165 = vmatprep.subr.mxu0 0.0
    %166 = vmatpush1.msra.mxu0 0.0
    %167 = vmatprep.subr.mxu0 0.0
    %168 = vmatpush1.msra.mxu0 0.0
    %169 = vmatprep.subr.mxu0 0.0
    %170 = vmatpush1.msra.mxu0 0.0
    %171 = vmatprep.subr.mxu0 0.0
    %172 = vmatpush1.msra.mxu0 0.0
    %173 = vmatprep.subr.mxu0 0.0
    %174 = vmatpush1.msra.mxu0 0.0
    %175 = vmatprep.subr.mxu0 0.0
    %176 = vmatpush1.msra.mxu0 0.0
    %177 = vmatprep.subr.mxu0 0.0
    %178 = vmatpush1.msra.mxu0 0.0
    %179 = vmatprep.subr.mxu0 0.0
    %180 = vmatpush1.msra.mxu0 0.0
    %181 = vmatprep.subr.mxu0 0.0
    %182 = vmatpush1.msra.mxu0 0.0
    %183 = vmatprep.subr.mxu0 0.0
    %184 = vmatpush1.msra.mxu0 0.0
    %185 = vmatprep.subr.mxu0 0.0
    %186 = vmatpush1.msra.mxu0 0.0
    %187 = vmatprep.subr.mxu0 0.0
    %188 = vmatpush1.msra.mxu0 0.0
    %189 = vmatprep.subr.mxu0 0.0
    %190 = vmatpush1.msra.mxu0 0.0
    %191 = vmatprep.subr.mxu0 0.0
    %192 = vmatpush1.msra.mxu0 0.0
    %193 = vmatprep.subr.mxu0 0.0
    %194 = vmatpush1.msra.mxu0 0.0
    %195 = vmatprep.subr.mxu0 0.0
    %196 = vmatpush1.msra.mxu0 0.0
    %197 = vmatprep.subr.mxu0 0.0
    %198 = vmatpush1.msra.mxu0 0.0
    %199 = vmatprep.subr.mxu0 0.0
    %200 = vmatpush1.msra.mxu0 0.0
    %201 = vmatprep.subr.mxu0 0.0
    %202 = vmatpush1.msra.mxu0 0.0
    %203 = vmatprep.subr.mxu0 0.0
    %204 = vmatpush1.msra.mxu0 0.0
    %205 = vmatprep.subr.mxu0 0.0
    %206 = vmatpush1.msra.mxu0 0.0
    %207 = vmatprep.subr.mxu0 0.0
    %208 = vmatpush1.msra.mxu0 0.0
    %209 = vmatprep.subr.mxu0 0.0
    %210 = vmatpush1.msra.mxu0 0.0
    %211 = vmatprep.subr.mxu0 0.0
    %212 = vmatpush1.msra.mxu0 0.0
    %213 = vmatprep.subr.mxu0 0.0
    %214 = vmatpush1.msra.mxu0 0.0
    %215 = vmatprep.mubr.f32.mxu0 0.0
    %216 = vmatmul.mubr.f32.gmra.mrb[0].mxu0 %v146
    %v217 = vpop.f32.mrb[0].mxu0
    %v218 = vadd.f32 %v143, %v217
    %v219 = vpop.f32.mrb[0].mxu0
    %220 = vmatprep.mubr.f32.mxu0 0.0
    %221 = vmatmul.mubr.f32.gmra.mrb[0].mxu0 %v149
    %v222 = vpop.f32.mrb[0].mxu0
    %v223 = vadd.f32 %v143, %v222
    %v224 = vpop.f32.mrb[0].mxu0
    %225 = vdwg.mxu0
    %227 = vrot.lane.b32.xlu0 %v218, 96
    %v228 = vpop.permute.xlu0 %227
    %vm229 = vcmask 64512
    %v230 = vsel %vm229, %v218, 0
    %v232 = vsel %vm229, %v228, 0
    %234 = vmatprep.subr.mxu0 0.0
    %235 = vmatpush1.xpose.msra.mxu0 %v232
    %236 = vmatprep.subr.mxu0 0.0
    %237 = vmatpush1.xpose.msra.mxu0 0.0
    %238 = vmatprep.subr.mxu0 0.0
    %239 = vmatpush1.xpose.msra.mxu0 0.0
    %240 = vmatprep.subr.mxu0 0.0
    %241 = vmatpush1.xpose.msra.mxu0 0.0
    %242 = vmatprep.subr.mxu0 0.0
    %243 = vmatpush1.xpose.msra.mxu0 0.0
    %244 = vmatprep.subr.mxu0 0.0
    %245 = vmatpush1.xpose.msra.mxu0 0.0
    %246 = vmatprep.subr.mxu0 0.0
    %247 = vmatpush1.xpose.msra.mxu0 0.0
    %248 = vmatprep.subr.mxu0 0.0
    %249 = vmatpush1.xpose.msra.mxu0 0.0
    %250 = vmatprep.subr.mxu0 0.0
    %251 = vmatpush1.xpose.msra.mxu0 0.0
    %252 = vmatprep.subr.mxu0 0.0
    %253 = vmatpush1.xpose.msra.mxu0 0.0
    %254 = vmatprep.subr.mxu0 0.0
    %255 = vmatpush1.xpose.msra.mxu0 0.0
    %256 = vmatprep.subr.mxu0 0.0
    %257 = vmatpush1.xpose.msra.mxu0 0.0
    %258 = vmatprep.subr.mxu0 0.0
    %259 = vmatpush1.xpose.msra.mxu0 0.0
    %260 = vmatprep.subr.mxu0 0.0
    %261 = vmatpush1.xpose.msra.mxu0 0.0
    %262 = vmatprep.subr.mxu0 0.0
    %263 = vmatpush1.xpose.msra.mxu0 0.0
    %264 = vmatprep.subr.mxu0 0.0
    %265 = vmatpush1.xpose.msra.mxu0 0.0
    %266 = vmatprep.subr.mxu0 0.0
    %267 = vmatpush1.xpose.msra.mxu0 0.0
    %268 = vmatprep.subr.mxu0 0.0
    %269 = vmatpush1.xpose.msra.mxu0 0.0
    %270 = vmatprep.subr.mxu0 0.0
    %271 = vmatpush1.xpose.msra.mxu0 0.0
    %272 = vmatprep.subr.mxu0 0.0
    %273 = vmatpush1.xpose.msra.mxu0 0.0
    %274 = vmatprep.subr.mxu0 0.0
    %275 = vmatpush1.xpose.msra.mxu0 0.0
    %276 = vmatprep.subr.mxu0 0.0
    %277 = vmatpush1.xpose.msra.mxu0 0.0
    %278 = vmatprep.subr.mxu0 0.0
    %279 = vmatpush1.xpose.msra.mxu0 0.0
    %280 = vmatprep.subr.mxu0 0.0
    %281 = vmatpush1.xpose.msra.mxu0 0.0
    %282 = vmatprep.subr.mxu0 0.0
    %283 = vmatpush1.xpose.msra.mxu0 0.0
    %284 = vmatprep.subr.mxu0 0.0
    %285 = vmatpush1.xpose.msra.mxu0 0.0
    %286 = vmatprep.subr.mxu0 0.0
    %287 = vmatpush1.xpose.msra.mxu0 0.0
    %288 = vmatprep.subr.mxu0 0.0
    %289 = vmatpush1.xpose.msra.mxu0 0.0
    %290 = vmatprep.subr.mxu0 0.0
    %291 = vmatpush1.xpose.msra.mxu0 0.0
    %292 = vmatprep.subr.mxu0 0.0
    %293 = vmatpush1.xpose.msra.mxu0 0.0
    %294 = vmatprep.subr.mxu0 0.0
    %295 = vmatpush1.xpose.msra.mxu0 0.0
    %296 = vmatprep.subr.mxu0 0.0
    %297 = vmatpush1.xpose.msra.mxu0 0.0
    %298 = vmatprep.mubr.f32.mxu0 0.0
    %299 = vmatmul.mubr.f32.gmra.mrb[0].mxu0 %v230
    %v300 = vpop.f32.mrb[0].mxu0
    %v301 = vadd.f32 0.0, %v300
    %v302 = vpop.f32.mrb[0].mxu0
    %303 = vdwg.mxu0
    %v304 = vsel %vm229, %v301, -inf
    %305 = vmax.xlane.f32.xlu0 %v304
    %v306 = vpop.xlane.xlu0 %305
    %v307 = vsub.f32 %v301, %v306
    %v308 = vmul.f32 %v307, 1.442695
    %v309 = vpow.pop %v308
    %v310 = vsel %vm229, %v309, 0.0
    %311 = vadd.xlane.f32.xlu0 %v310
    %v312 = vpop.xlane.xlu0 %311
    %v313 = vrcp.pop %v312
    %v314 = vmul.f32 %v312, %v313
    %v315 = vsub.f32 2.0, %v314
    %v316 = vmul.f32 %v313, %v315
    %v317 = vmul.f32 %v309, %v316
    %318 = vrot.lane.b32.xlu0 %v218, 64
    %v319 = vpop.permute.xlu0 %318
    %v322 = vsel %vm229, %v317, 0
    %324 = vmatprep.subr.mxu0 0.0
    %325 = vmatpush1.msra.mxu0 %v319
    %326 = vmatprep.subr.mxu0 0.0
    %327 = vmatpush1.msra.mxu0 0.0
    %328 = vmatprep.subr.mxu0 0.0
    %329 = vmatpush1.msra.mxu0 0.0
    %330 = vmatprep.subr.mxu0 0.0
    %331 = vmatpush1.msra.mxu0 0.0
    %332 = vmatprep.subr.mxu0 0.0
    %333 = vmatpush1.msra.mxu0 0.0
    %334 = vmatprep.subr.mxu0 0.0
    %335 = vmatpush1.msra.mxu0 0.0
    %336 = vmatprep.subr.mxu0 0.0
    %337 = vmatpush1.msra.mxu0 0.0
    %338 = vmatprep.subr.mxu0 0.0
    %339 = vmatpush1.msra.mxu0 0.0
    %340 = vmatprep.subr.mxu0 0.0
    %341 = vmatpush1.msra.mxu0 0.0
    %342 = vmatprep.subr.mxu0 0.0
    %343 = vmatpush1.msra.mxu0 0.0
    %344 = vmatprep.subr.mxu0 0.0
    %345 = vmatpush1.msra.mxu0 0.0
    %346 = vmatprep.subr.mxu0 0.0
    %347 = vmatpush1.msra.mxu0 0.0
    %348 = vmatprep.subr.mxu0 0.0
    %349 = vmatpush1.msra.mxu0 0.0
    %350 = vmatprep.subr.mxu0 0.0
    %351 = vmatpush1.msra.mxu0 0.0
    %352 = vmatprep.subr.mxu0 0.0
    %353 = vmatpush1.msra.mxu0 0.0
    %354 = vmatprep.subr.mxu0 0.0
    %355 = vmatpush1.msra.mxu0 0.0
    %356 = vmatprep.subr.mxu0 0.0
    %357 = vmatpush1.msra.mxu0 0.0
    %358 = vmatprep.subr.mxu0 0.0
    %359 = vmatpush1.msra.mxu0 0.0
    %360 = vmatprep.subr.mxu0 0.0
    %361 = vmatpush1.msra.mxu0 0.0
    %362 = vmatprep.subr.mxu0 0.0
    %363 = vmatpush1.msra.mxu0 0.0
    %364 = vmatprep.subr.mxu0 0.0
    %365 = vmatpush1.msra.mxu0 0.0
    %366 = vmatprep.subr.mxu0 0.0
    %367 = vmatpush1.msra.mxu0 0.0
    %368 = vmatprep.subr.mxu0 0.0
    %369 = vmatpush1.msra.mxu0 0.0
    %370 = vmatprep.subr.mxu0 0.0
    %371 = vmatpush1.msra.mxu0 0.0
    %372 = vmatprep.subr.mxu0 0.0
    %373 = vmatpush1.msra.mxu0 0.0
    %374 = vmatprep.subr.mxu0 0.0
    %375 = vmatpush1.msra.mxu0 0.0
    %376 = vmatprep.subr.mxu0 0.0
    %377 = vmatpush1.msra.mxu0 0.0
    %378 = vmatprep.subr.mxu0 0.0
    %379 = vmatpush1.msra.mxu0 0.0
    %380 = vmatprep.subr.mxu0 0.0
    %381 = vmatpush1.msra.mxu0 0.0
    %382 = vmatprep.subr.mxu0 0.0
    %383 = vmatpush1.msra.mxu0 0.0
    %384 = vmatprep.subr.mxu0 0.0
    %385 = vmatpush1.msra.mxu0 0.0
    %386 = vmatprep.subr.mxu0 0.0
    %387 = vmatpush1.msra.mxu0 0.0
    %388 = vmatprep.mubr.f32.mxu0 0.0
    %389 = vmatmul.mubr.f32.gmra.mrb[0].mxu0 %v322
    %v390 = vpop.f32.mrb[0].mxu0
    %v391 = vadd.f32 0.0, %v390
    %v392 = vpop.f32.mrb[0].mxu0
    %393 = vdwg.mxu0
    %v394 = vld [vmem:[%s5] sm:$0xff]
    %395 = vrot.lane.b32.xlu0 %v218, 120
    %v396 = vpop.permute.xlu0 %395
    %397 = vrot.lane.b32.xlu0 %v218, 88
    %v398 = vpop.permute.xlu0 %397
    %v399 = vsel %vm229, %v396, 0
    %v401 = vsel %vm229, %v398, 0
    %403 = vmatprep.subr.mxu0 0.0
    %404 = vmatpush1.xpose.msra.mxu0 %v401
    %405 = vmatprep.subr.mxu0 0.0
    %406 = vmatpush1.xpose.msra.mxu0 0.0
    %407 = vmatprep.subr.mxu0 0.0
    %408 = vmatpush1.xpose.msra.mxu0 0.0
    %409 = vmatprep.subr.mxu0 0.0
    %410 = vmatpush1.xpose.msra.mxu0 0.0
    %411 = vmatprep.subr.mxu0 0.0
    %412 = vmatpush1.xpose.msra.mxu0 0.0
    %413 = vmatprep.subr.mxu0 0.0
    %414 = vmatpush1.xpose.msra.mxu0 0.0
    %415 = vmatprep.subr.mxu0 0.0
    %416 = vmatpush1.xpose.msra.mxu0 0.0
    %417 = vmatprep.subr.mxu0 0.0
    %418 = vmatpush1.xpose.msra.mxu0 0.0
    %419 = vmatprep.subr.mxu0 0.0
    %420 = vmatpush1.xpose.msra.mxu0 0.0
    %421 = vmatprep.subr.mxu0 0.0
    %422 = vmatpush1.xpose.msra.mxu0 0.0
    %423 = vmatprep.subr.mxu0 0.0
    %424 = vmatpush1.xpose.msra.mxu0 0.0
    %425 = vmatprep.subr.mxu0 0.0
    %426 = vmatpush1.xpose.msra.mxu0 0.0
    %427 = vmatprep.subr.mxu0 0.0
    %428 = vmatpush1.xpose.msra.mxu0 0.0
    %429 = vmatprep.subr.mxu0 0.0
    %430 = vmatpush1.xpose.msra.mxu0 0.0
    %431 = vmatprep.subr.mxu0 0.0
    %432 = vmatpush1.xpose.msra.mxu0 0.0
    %433 = vmatprep.subr.mxu0 0.0
    %434 = vmatpush1.xpose.msra.mxu0 0.0
    %435 = vmatprep.subr.mxu0 0.0
    %436 = vmatpush1.xpose.msra.mxu0 0.0
    %437 = vmatprep.subr.mxu0 0.0
    %438 = vmatpush1.xpose.msra.mxu0 0.0
    %439 = vmatprep.subr.mxu0 0.0
    %440 = vmatpush1.xpose.msra.mxu0 0.0
    %441 = vmatprep.subr.mxu0 0.0
    %442 = vmatpush1.xpose.msra.mxu0 0.0
    %443 = vmatprep.subr.mxu0 0.0
    %444 = vmatpush1.xpose.msra.mxu0 0.0
    %445 = vmatprep.subr.mxu0 0.0
    %446 = vmatpush1.xpose.msra.mxu0 0.0
    %447 = vmatprep.subr.mxu0 0.0
    %448 = vmatpush1.xpose.msra.mxu0 0.0
    %449 = vmatprep.subr.mxu0 0.0
    %450 = vmatpush1.xpose.msra.mxu0 0.0
    %451 = vmatprep.subr.mxu0 0.0
    %452 = vmatpush1.xpose.msra.mxu0 0.0
    %453 = vmatprep.subr.mxu0 0.0
    %454 = vmatpush1.xpose.msra.mxu0 0.0
    %455 = vmatprep.subr.mxu0 0.0
    %456 = vmatpush1.xpose.msra.mxu0 0.0
    %457 = vmatprep.subr.mxu0 0.0
    %458 = vmatpush1.xpose.msra.mxu0 0.0
    %459 = vmatprep.subr.mxu0 0.0
    %460 = vmatpush1.xpose.msra.mxu0 0.0
    %461 = vmatprep.subr.mxu0 0.0
    %462 = vmatpush1.xpose.msra.mxu0 0.0
    %463 = vmatprep.subr.mxu0 0.0
    %464 = vmatpush1.xpose.msra.mxu0 0.0
    %465 = vmatprep.subr.mxu0 0.0
    %466 = vmatpush1.xpose.msra.mxu0 0.0
    %467 = vmatprep.mubr.f32.mxu0 0.0
    %468 = vmatmul.mubr.f32.gmra.mrb[0].mxu0 %v399
    %v469 = vpop.f32.mrb[0].mxu0
    %v470 = vadd.f32 0.0, %v469
    %v471 = vpop.f32.mrb[0].mxu0
    %472 = vdwg.mxu0
    %v473 = vsel %vm229, %v470, -inf
    %474 = vmax.xlane.f32.xlu0 %v473
    %v475 = vpop.xlane.xlu0 %474
    %v476 = vsub.f32 %v470, %v475
    %v477 = vmul.f32 %v476, 1.442695
    %v478 = vpow.pop %v477
    %v479 = vsel %vm229, %v478, 0.0
    %480 = vadd.xlane.f32.xlu0 %v479
    %v481 = vpop.xlane.xlu0 %480
    %v482 = vrcp.pop %v481
    %v483 = vmul.f32 %v481, %v482
    %v484 = vsub.f32 2.0, %v483
    %v485 = vmul.f32 %v482, %v484
    %v486 = vmul.f32 %v478, %v485
    %487 = vrot.lane.b32.xlu0 %v218, 56
    %v488 = vpop.permute.xlu0 %487
    %v491 = vsel %vm229, %v486, 0
    %493 = vmatprep.subr.mxu0 0.0
    %494 = vmatpush1.msra.mxu0 %v488
    %495 = vmatprep.subr.mxu0 0.0
    %496 = vmatpush1.msra.mxu0 0.0
    %497 = vmatprep.subr.mxu0 0.0
    %498 = vmatpush1.msra.mxu0 0.0
    %499 = vmatprep.subr.mxu0 0.0
    %500 = vmatpush1.msra.mxu0 0.0
    %501 = vmatprep.subr.mxu0 0.0
    %502 = vmatpush1.msra.mxu0 0.0
    %503 = vmatprep.subr.mxu0 0.0
    %504 = vmatpush1.msra.mxu0 0.0
    %505 = vmatprep.subr.mxu0 0.0
    %506 = vmatpush1.msra.mxu0 0.0
    %507 = vmatprep.subr.mxu0 0.0
    %508 = vmatpush1.msra.mxu0 0.0
    %509 = vmatprep.subr.mxu0 0.0
    %510 = vmatpush1.msra.mxu0 0.0
    %511 = vmatprep.subr.mxu0 0.0
    %512 = vmatpush1.msra.mxu0 0.0
    %513 = vmatprep.subr.mxu0 0.0
    %514 = vmatpush1.msra.mxu0 0.0
    %515 = vmatprep.subr.mxu0 0.0
    %516 = vmatpush1.msra.mxu0 0.0
    %517 = vmatprep.subr.mxu0 0.0
    %518 = vmatpush1.msra.mxu0 0.0
    %519 = vmatprep.subr.mxu0 0.0
    %520 = vmatpush1.msra.mxu0 0.0
    %521 = vmatprep.subr.mxu0 0.0
    %522 = vmatpush1.msra.mxu0 0.0
    %523 = vmatprep.subr.mxu0 0.0
    %524 = vmatpush1.msra.mxu0 0.0
    %525 = vmatprep.subr.mxu0 0.0
    %526 = vmatpush1.msra.mxu0 0.0
    %527 = vmatprep.subr.mxu0 0.0
    %528 = vmatpush1.msra.mxu0 0.0
    %529 = vmatprep.subr.mxu0 0.0
    %530 = vmatpush1.msra.mxu0 0.0
    %531 = vmatprep.subr.mxu0 0.0
    %532 = vmatpush1.msra.mxu0 0.0
    %533 = vmatprep.subr.mxu0 0.0
    %534 = vmatpush1.msra.mxu0 0.0
    %535 = vmatprep.subr.mxu0 0.0
    %536 = vmatpush1.msra.mxu0 0.0
    %537 = vmatprep.subr.mxu0 0.0
    %538 = vmatpush1.msra.mxu0 0.0
    %539 = vmatprep.subr.mxu0 0.0
    %540 = vmatpush1.msra.mxu0 0.0
    %541 = vmatprep.subr.mxu0 0.0
    %542 = vmatpush1.msra.mxu0 0.0
    %543 = vmatprep.subr.mxu0 0.0
    %544 = vmatpush1.msra.mxu0 0.0
    %545 = vmatprep.subr.mxu0 0.0
    %546 = vmatpush1.msra.mxu0 0.0
    %547 = vmatprep.subr.mxu0 0.0
    %548 = vmatpush1.msra.mxu0 0.0
    %549 = vmatprep.subr.mxu0 0.0
    %550 = vmatpush1.msra.mxu0 0.0
    %551 = vmatprep.subr.mxu0 0.0
    %552 = vmatpush1.msra.mxu0 0.0
    %553 = vmatprep.subr.mxu0 0.0
    %554 = vmatpush1.msra.mxu0 0.0
    %555 = vmatprep.subr.mxu0 0.0
    %556 = vmatpush1.msra.mxu0 0.0
    %557 = vmatprep.mubr.f32.mxu0 0.0
    %558 = vmatmul.mubr.f32.gmra.mrb[0].mxu0 %v491
    %v559 = vpop.f32.mrb[0].mxu0
    %v560 = vadd.f32 0.0, %v559
    %v561 = vpop.f32.mrb[0].mxu0
    %562 = vdwg.mxu0
    %s563 = scalar_lea.vmem %s5, 8
    %v564 = vld [vmem:[%s563] sm:$0xff]
    %v566 = vsel %vm229, %v560, 0
    %568 = vmatprep.subr.mxu0 0.0
    %569 = vmatpush1.msra.mxu0 %v564
    %570 = vmatprep.subr.mxu0 0.0
    %571 = vmatpush1.msra.mxu0 0.0
    %572 = vmatprep.subr.mxu0 0.0
    %573 = vmatpush1.msra.mxu0 0.0
    %574 = vmatprep.subr.mxu0 0.0
    %575 = vmatpush1.msra.mxu0 0.0
    %576 = vmatprep.subr.mxu0 0.0
    %577 = vmatpush1.msra.mxu0 0.0
    %578 = vmatprep.subr.mxu0 0.0
    %579 = vmatpush1.msra.mxu0 0.0
    %580 = vmatprep.subr.mxu0 0.0
    %581 = vmatpush1.msra.mxu0 0.0
    %582 = vmatprep.subr.mxu0 0.0
    %583 = vmatpush1.msra.mxu0 0.0
    %584 = vmatprep.subr.mxu0 0.0
    %585 = vmatpush1.msra.mxu0 0.0
    %586 = vmatprep.subr.mxu0 0.0
    %587 = vmatpush1.msra.mxu0 0.0
    %588 = vmatprep.subr.mxu0 0.0
    %589 = vmatpush1.msra.mxu0 0.0
    %590 = vmatprep.subr.mxu0 0.0
    %591 = vmatpush1.msra.mxu0 0.0
    %592 = vmatprep.subr.mxu0 0.0
    %593 = vmatpush1.msra.mxu0 0.0
    %594 = vmatprep.subr.mxu0 0.0
    %595 = vmatpush1.msra.mxu0 0.0
    %596 = vmatprep.subr.mxu0 0.0
    %597 = vmatpush1.msra.mxu0 0.0
    %598 = vmatprep.subr.mxu0 0.0
    %599 = vmatpush1.msra.mxu0 0.0
    %600 = vmatprep.subr.mxu0 0.0
    %601 = vmatpush1.msra.mxu0 0.0
    %602 = vmatprep.subr.mxu0 0.0
    %603 = vmatpush1.msra.mxu0 0.0
    %604 = vmatprep.subr.mxu0 0.0
    %605 = vmatpush1.msra.mxu0 0.0
    %606 = vmatprep.subr.mxu0 0.0
    %607 = vmatpush1.msra.mxu0 0.0
    %608 = vmatprep.subr.mxu0 0.0
    %609 = vmatpush1.msra.mxu0 0.0
    %610 = vmatprep.subr.mxu0 0.0
    %611 = vmatpush1.msra.mxu0 0.0
    %612 = vmatprep.subr.mxu0 0.0
    %613 = vmatpush1.msra.mxu0 0.0
    %614 = vmatprep.subr.mxu0 0.0
    %615 = vmatpush1.msra.mxu0 0.0
    %616 = vmatprep.subr.mxu0 0.0
    %617 = vmatpush1.msra.mxu0 0.0
    %618 = vmatprep.subr.mxu0 0.0
    %619 = vmatpush1.msra.mxu0 0.0
    %620 = vmatprep.subr.mxu0 0.0
    %621 = vmatpush1.msra.mxu0 0.0
    %622 = vmatprep.subr.mxu0 0.0
    %623 = vmatpush1.msra.mxu0 0.0
    %624 = vmatprep.subr.mxu0 0.0
    %625 = vmatpush1.msra.mxu0 0.0
    %626 = vmatprep.subr.mxu0 0.0
    %627 = vmatpush1.msra.mxu0 0.0
    %628 = vmatprep.subr.mxu0 0.0
    %629 = vmatpush1.msra.mxu0 0.0
    %630 = vmatprep.subr.mxu0 0.0
    %631 = vmatpush1.msra.mxu0 0.0
    %632 = vmatprep.mubr.f32.mxu0 0.0
    %633 = vmatmul.mubr.f32.gmra.mrb[0].mxu0 %v566
    %v634 = vpop.f32.mrb[0].mxu0
    %v635 = vadd.f32 0.0, %v634
    %v636 = vpop.f32.mrb[0].mxu0
    %637 = vdwg.mxu0
    %v639 = vsel %vm229, %v391, 0
    %641 = vmatprep.subr.mxu0 0.0
    %642 = vmatpush1.msra.mxu0 %v394
    %643 = vmatprep.subr.mxu0 0.0
    %644 = vmatpush1.msra.mxu0 0.0
    %645 = vmatprep.subr.mxu0 0.0
    %646 = vmatpush1.msra.mxu0 0.0
    %647 = vmatprep.subr.mxu0 0.0
    %648 = vmatpush1.msra.mxu0 0.0
    %649 = vmatprep.subr.mxu0 0.0
    %650 = vmatpush1.msra.mxu0 0.0
    %651 = vmatprep.subr.mxu0 0.0
    %652 = vmatpush1.msra.mxu0 0.0
    %653 = vmatprep.subr.mxu0 0.0
    %654 = vmatpush1.msra.mxu0 0.0
    %655 = vmatprep.subr.mxu0 0.0
    %656 = vmatpush1.msra.mxu0 0.0
    %657 = vmatprep.subr.mxu0 0.0
    %658 = vmatpush1.msra.mxu0 0.0
    %659 = vmatprep.subr.mxu0 0.0
    %660 = vmatpush1.msra.mxu0 0.0
    %661 = vmatprep.subr.mxu0 0.0
    %662 = vmatpush1.msra.mxu0 0.0
    %663 = vmatprep.subr.mxu0 0.0
    %664 = vmatpush1.msra.mxu0 0.0
    %665 = vmatprep.subr.mxu0 0.0
    %666 = vmatpush1.msra.mxu0 0.0
    %667 = vmatprep.subr.mxu0 0.0
    %668 = vmatpush1.msra.mxu0 0.0
    %669 = vmatprep.subr.mxu0 0.0
    %670 = vmatpush1.msra.mxu0 0.0
    %671 = vmatprep.subr.mxu0 0.0
    %672 = vmatpush1.msra.mxu0 0.0
    %673 = vmatprep.subr.mxu0 0.0
    %674 = vmatpush1.msra.mxu0 0.0
    %675 = vmatprep.subr.mxu0 0.0
    %676 = vmatpush1.msra.mxu0 0.0
    %677 = vmatprep.subr.mxu0 0.0
    %678 = vmatpush1.msra.mxu0 0.0
    %679 = vmatprep.subr.mxu0 0.0
    %680 = vmatpush1.msra.mxu0 0.0
    %681 = vmatprep.subr.mxu0 0.0
    %682 = vmatpush1.msra.mxu0 0.0
    %683 = vmatprep.subr.mxu0 0.0
    %684 = vmatpush1.msra.mxu0 0.0
    %685 = vmatprep.subr.mxu0 0.0
    %686 = vmatpush1.msra.mxu0 0.0
    %687 = vmatprep.subr.mxu0 0.0
    %688 = vmatpush1.msra.mxu0 0.0
    %689 = vmatprep.subr.mxu0 0.0
    %690 = vmatpush1.msra.mxu0 0.0
    %691 = vmatprep.subr.mxu0 0.0
    %692 = vmatpush1.msra.mxu0 0.0
    %693 = vmatprep.subr.mxu0 0.0
    %694 = vmatpush1.msra.mxu0 0.0
    %695 = vmatprep.subr.mxu0 0.0
    %696 = vmatpush1.msra.mxu0 0.0
    %697 = vmatprep.subr.mxu0 0.0
    %698 = vmatpush1.msra.mxu0 0.0
    %699 = vmatprep.subr.mxu0 0.0
    %700 = vmatpush1.msra.mxu0 0.0
    %701 = vmatprep.subr.mxu0 0.0
    %702 = vmatpush1.msra.mxu0 0.0
    %703 = vmatprep.subr.mxu0 0.0
    %704 = vmatpush1.msra.mxu0 0.0
    %705 = vmatprep.mubr.f32.mxu0 0.0
    %706 = vmatmul.mubr.f32.gmra.mrb[0].mxu0 %v639
    %v707 = vpop.f32.mrb[0].mxu0
    %v708 = vadd.f32 %v635, %v707
    %v709 = vpop.f32.mrb[0].mxu0
    %710 = vdwg.mxu0
    %711 = vrot.lane.b32.xlu0 %v218, 112
    %v712 = vpop.permute.xlu0 %711
    %713 = vrot.lane.b32.xlu0 %v218, 80
    %v714 = vpop.permute.xlu0 %713
    %v715 = vsel %vm229, %v712, 0
    %v717 = vsel %vm229, %v714, 0
    %719 = vmatprep.subr.mxu0 0.0
    %720 = vmatpush1.xpose.msra.mxu0 %v717
    %721 = vmatprep.subr.mxu0 0.0
    %722 = vmatpush1.xpose.msra.mxu0 0.0
    %723 = vmatprep.subr.mxu0 0.0
    %724 = vmatpush1.xpose.msra.mxu0 0.0
    %725 = vmatprep.subr.mxu0 0.0
    %726 = vmatpush1.xpose.msra.mxu0 0.0
    %727 = vmatprep.subr.mxu0 0.0
    %728 = vmatpush1.xpose.msra.mxu0 0.0
    %729 = vmatprep.subr.mxu0 0.0
    %730 = vmatpush1.xpose.msra.mxu0 0.0
    %731 = vmatprep.subr.mxu0 0.0
    %732 = vmatpush1.xpose.msra.mxu0 0.0
    %733 = vmatprep.subr.mxu0 0.0
    %734 = vmatpush1.xpose.msra.mxu0 0.0
    %735 = vmatprep.subr.mxu0 0.0
    %736 = vmatpush1.xpose.msra.mxu0 0.0
    %737 = vmatprep.subr.mxu0 0.0
    %738 = vmatpush1.xpose.msra.mxu0 0.0
    %739 = vmatprep.subr.mxu0 0.0
    %740 = vmatpush1.xpose.msra.mxu0 0.0
    %741 = vmatprep.subr.mxu0 0.0
    %742 = vmatpush1.xpose.msra.mxu0 0.0
    %743 = vmatprep.subr.mxu0 0.0
    %744 = vmatpush1.xpose.msra.mxu0 0.0
    %745 = vmatprep.subr.mxu0 0.0
    %746 = vmatpush1.xpose.msra.mxu0 0.0
    %747 = vmatprep.subr.mxu0 0.0
    %748 = vmatpush1.xpose.msra.mxu0 0.0
    %749 = vmatprep.subr.mxu0 0.0
    %750 = vmatpush1.xpose.msra.mxu0 0.0
    %751 = vmatprep.subr.mxu0 0.0
    %752 = vmatpush1.xpose.msra.mxu0 0.0
    %753 = vmatprep.subr.mxu0 0.0
    %754 = vmatpush1.xpose.msra.mxu0 0.0
    %755 = vmatprep.subr.mxu0 0.0
    %756 = vmatpush1.xpose.msra.mxu0 0.0
    %757 = vmatprep.subr.mxu0 0.0
    %758 = vmatpush1.xpose.msra.mxu0 0.0
    %759 = vmatprep.subr.mxu0 0.0
    %760 = vmatpush1.xpose.msra.mxu0 0.0
    %761 = vmatprep.subr.mxu0 0.0
    %762 = vmatpush1.xpose.msra.mxu0 0.0
    %763 = vmatprep.subr.mxu0 0.0
    %764 = vmatpush1.xpose.msra.mxu0 0.0
    %765 = vmatprep.subr.mxu0 0.0
    %766 = vmatpush1.xpose.msra.mxu0 0.0
    %767 = vmatprep.subr.mxu0 0.0
    %768 = vmatpush1.xpose.msra.mxu0 0.0
    %769 = vmatprep.subr.mxu0 0.0
    %770 = vmatpush1.xpose.msra.mxu0 0.0
    %771 = vmatprep.subr.mxu0 0.0
    %772 = vmatpush1.xpose.msra.mxu0 0.0
    %773 = vmatprep.subr.mxu0 0.0
    %774 = vmatpush1.xpose.msra.mxu0 0.0
    %775 = vmatprep.subr.mxu0 0.0
    %776 = vmatpush1.xpose.msra.mxu0 0.0
    %777 = vmatprep.subr.mxu0 0.0
    %778 = vmatpush1.xpose.msra.mxu0 0.0
    %779 = vmatprep.subr.mxu0 0.0
    %780 = vmatpush1.xpose.msra.mxu0 0.0
    %781 = vmatprep.subr.mxu0 0.0
    %782 = vmatpush1.xpose.msra.mxu0 0.0
    %783 = vmatprep.mubr.f32.mxu0 0.0
    %784 = vmatmul.mubr.f32.gmra.mrb[0].mxu0 %v715
    %v785 = vpop.f32.mrb[0].mxu0
    %v786 = vadd.f32 0.0, %v785
    %v787 = vpop.f32.mrb[0].mxu0
    %788 = vdwg.mxu0
    %v789 = vsel %vm229, %v786, -inf
    %790 = vmax.xlane.f32.xlu0 %v789
    %v791 = vpop.xlane.xlu0 %790
    %v792 = vsub.f32 %v786, %v791
    %v793 = vmul.f32 %v792, 1.442695
    %v794 = vpow.pop %v793
    %v795 = vsel %vm229, %v794, 0.0
    %796 = vadd.xlane.f32.xlu0 %v795
    %v797 = vpop.xlane.xlu0 %796
    %v798 = vrcp.pop %v797
    %v799 = vmul.f32 %v797, %v798
    %v800 = vsub.f32 2.0, %v799
    %v801 = vmul.f32 %v798, %v800
    %v802 = vmul.f32 %v794, %v801
    %803 = vrot.lane.b32.xlu0 %v218, 48
    %v804 = vpop.permute.xlu0 %803
    %v807 = vsel %vm229, %v802, 0
    %809 = vmatprep.subr.mxu0 0.0
    %810 = vmatpush1.msra.mxu0 %v804
    %811 = vmatprep.subr.mxu0 0.0
    %812 = vmatpush1.msra.mxu0 0.0
    %813 = vmatprep.subr.mxu0 0.0
    %814 = vmatpush1.msra.mxu0 0.0
    %815 = vmatprep.subr.mxu0 0.0
    %816 = vmatpush1.msra.mxu0 0.0
    %817 = vmatprep.subr.mxu0 0.0
    %818 = vmatpush1.msra.mxu0 0.0
    %819 = vmatprep.subr.mxu0 0.0
    %820 = vmatpush1.msra.mxu0 0.0
    %821 = vmatprep.subr.mxu0 0.0
    %822 = vmatpush1.msra.mxu0 0.0
    %823 = vmatprep.subr.mxu0 0.0
    %824 = vmatpush1.msra.mxu0 0.0
    %825 = vmatprep.subr.mxu0 0.0
    %826 = vmatpush1.msra.mxu0 0.0
    %827 = vmatprep.subr.mxu0 0.0
    %828 = vmatpush1.msra.mxu0 0.0
    %829 = vmatprep.subr.mxu0 0.0
    %830 = vmatpush1.msra.mxu0 0.0
    %831 = vmatprep.subr.mxu0 0.0
    %832 = vmatpush1.msra.mxu0 0.0
    %833 = vmatprep.subr.mxu0 0.0
    %834 = vmatpush1.msra.mxu0 0.0
    %835 = vmatprep.subr.mxu0 0.0
    %836 = vmatpush1.msra.mxu0 0.0
    %837 = vmatprep.subr.mxu0 0.0
    %838 = vmatpush1.msra.mxu0 0.0
    %839 = vmatprep.subr.mxu0 0.0
    %840 = vmatpush1.msra.mxu0 0.0
    %841 = vmatprep.subr.mxu0 0.0
    %842 = vmatpush1.msra.mxu0 0.0
    %843 = vmatprep.subr.mxu0 0.0
    %844 = vmatpush1.msra.mxu0 0.0
    %845 = vmatprep.subr.mxu0 0.0
    %846 = vmatpush1.msra.mxu0 0.0
    %847 = vmatprep.subr.mxu0 0.0
    %848 = vmatpush1.msra.mxu0 0.0
    %849 = vmatprep.subr.mxu0 0.0
    %850 = vmatpush1.msra.mxu0 0.0
    %851 = vmatprep.subr.mxu0 0.0
    %852 = vmatpush1.msra.mxu0 0.0
    %853 = vmatprep.subr.mxu0 0.0
    %854 = vmatpush1.msra.mxu0 0.0
    %855 = vmatprep.subr.mxu0 0.0
    %856 = vmatpush1.msra.mxu0 0.0
    %857 = vmatprep.subr.mxu0 0.0
    %858 = vmatpush1.msra.mxu0 0.0
    %859 = vmatprep.subr.mxu0 0.0
    %860 = vmatpush1.msra.mxu0 0.0
    %861 = vmatprep.subr.mxu0 0.0
    %862 = vmatpush1.msra.mxu0 0.0
    %863 = vmatprep.subr.mxu0 0.0
    %864 = vmatpush1.msra.mxu0 0.0
    %865 = vmatprep.subr.mxu0 0.0
    %866 = vmatpush1.msra.mxu0 0.0
    %867 = vmatprep.subr.mxu0 0.0
    %868 = vmatpush1.msra.mxu0 0.0
    %869 = vmatprep.subr.mxu0 0.0
    %870 = vmatpush1.msra.mxu0 0.0
    %871 = vmatprep.subr.mxu0 0.0
    %872 = vmatpush1.msra.mxu0 0.0
    %873 = vmatprep.mubr.f32.mxu0 0.0
    %874 = vmatmul.mubr.f32.gmra.mrb[0].mxu0 %v807
    %v875 = vpop.f32.mrb[0].mxu0
    %v876 = vadd.f32 0.0, %v875
    %v877 = vpop.f32.mrb[0].mxu0
    %878 = vdwg.mxu0
    %s879 = scalar_lea.vmem %s5, 16
    %v880 = vld [vmem:[%s879] sm:$0xff]
    %v882 = vsel %vm229, %v876, 0
    %884 = vmatprep.subr.mxu0 0.0
    %885 = vmatpush1.msra.mxu0 %v880
    %886 = vmatprep.subr.mxu0 0.0
    %887 = vmatpush1.msra.mxu0 0.0
    %888 = vmatprep.subr.mxu0 0.0
    %889 = vmatpush1.msra.mxu0 0.0
    %890 = vmatprep.subr.mxu0 0.0
    %891 = vmatpush1.msra.mxu0 0.0
    %892 = vmatprep.subr.mxu0 0.0
    %893 = vmatpush1.msra.mxu0 0.0
    %894 = vmatprep.subr.mxu0 0.0
    %895 = vmatpush1.msra.mxu0 0.0
    %896 = vmatprep.subr.mxu0 0.0
    %897 = vmatpush1.msra.mxu0 0.0
    %898 = vmatprep.subr.mxu0 0.0
    %899 = vmatpush1.msra.mxu0 0.0
    %900 = vmatprep.subr.mxu0 0.0
    %901 = vmatpush1.msra.mxu0 0.0
    %902 = vmatprep.subr.mxu0 0.0
    %903 = vmatpush1.msra.mxu0 0.0
    %904 = vmatprep.subr.mxu0 0.0
    %905 = vmatpush1.msra.mxu0 0.0
    %906 = vmatprep.subr.mxu0 0.0
    %907 = vmatpush1.msra.mxu0 0.0
    %908 = vmatprep.subr.mxu0 0.0
    %909 = vmatpush1.msra.mxu0 0.0
    %910 = vmatprep.subr.mxu0 0.0
    %911 = vmatpush1.msra.mxu0 0.0
    %912 = vmatprep.subr.mxu0 0.0
    %913 = vmatpush1.msra.mxu0 0.0
    %914 = vmatprep.subr.mxu0 0.0
    %915 = vmatpush1.msra.mxu0 0.0
    %916 = vmatprep.subr.mxu0 0.0
    %917 = vmatpush1.msra.mxu0 0.0
    %918 = vmatprep.subr.mxu0 0.0
    %919 = vmatpush1.msra.mxu0 0.0
    %920 = vmatprep.subr.mxu0 0.0
    %921 = vmatpush1.msra.mxu0 0.0
    %922 = vmatprep.subr.mxu0 0.0
    %923 = vmatpush1.msra.mxu0 0.0
    %924 = vmatprep.subr.mxu0 0.0
    %925 = vmatpush1.msra.mxu0 0.0
    %926 = vmatprep.subr.mxu0 0.0
    %927 = vmatpush1.msra.mxu0 0.0
    %928 = vmatprep.subr.mxu0 0.0
    %929 = vmatpush1.msra.mxu0 0.0
    %930 = vmatprep.subr.mxu0 0.0
    %931 = vmatpush1.msra.mxu0 0.0
    %932 = vmatprep.subr.mxu0 0.0
    %933 = vmatpush1.msra.mxu0 0.0
    %934 = vmatprep.subr.mxu0 0.0
    %935 = vmatpush1.msra.mxu0 0.0
    %936 = vmatprep.subr.mxu0 0.0
    %937 = vmatpush1.msra.mxu0 0.0
    %938 = vmatprep.subr.mxu0 0.0
    %939 = vmatpush1.msra.mxu0 0.0
    %940 = vmatprep.subr.mxu0 0.0
    %941 = vmatpush1.msra.mxu0 0.0
    %942 = vmatprep.subr.mxu0 0.0
    %943 = vmatpush1.msra.mxu0 0.0
    %944 = vmatprep.subr.mxu0 0.0
    %945 = vmatpush1.msra.mxu0 0.0
    %946 = vmatprep.subr.mxu0 0.0
    %947 = vmatpush1.msra.mxu0 0.0
    %948 = vmatprep.mubr.f32.mxu0 0.0
    %949 = vmatmul.mubr.f32.gmra.mrb[0].mxu0 %v882
    %v950 = vpop.f32.mrb[0].mxu0
    %v951 = vadd.f32 0.0, %v950
    %v952 = vpop.f32.mrb[0].mxu0
    %953 = vdwg.mxu0
    %v954 = vadd.f32 %v708, %v951
    %955 = vrot.lane.b32.xlu0 %v218, 104
    %v956 = vpop.permute.xlu0 %955
    %957 = vrot.lane.b32.xlu0 %v218, 72
    %v958 = vpop.permute.xlu0 %957
    %v959 = vsel %vm229, %v956, 0
    %v961 = vsel %vm229, %v958, 0
    %963 = vmatprep.subr.mxu0 0.0
    %964 = vmatpush1.xpose.msra.mxu0 %v961
    %965 = vmatprep.subr.mxu0 0.0
    %966 = vmatpush1.xpose.msra.mxu0 0.0
    %967 = vmatprep.subr.mxu0 0.0
    %968 = vmatpush1.xpose.msra.mxu0 0.0
    %969 = vmatprep.subr.mxu0 0.0
    %970 = vmatpush1.xpose.msra.mxu0 0.0
    %971 = vmatprep.subr.mxu0 0.0
    %972 = vmatpush1.xpose.msra.mxu0 0.0
    %973 = vmatprep.subr.mxu0 0.0
    %974 = vmatpush1.xpose.msra.mxu0 0.0
    %975 = vmatprep.subr.mxu0 0.0
    %976 = vmatpush1.xpose.msra.mxu0 0.0
    %977 = vmatprep.subr.mxu0 0.0
    %978 = vmatpush1.xpose.msra.mxu0 0.0
    %979 = vmatprep.subr.mxu0 0.0
    %980 = vmatpush1.xpose.msra.mxu0 0.0
    %981 = vmatprep.subr.mxu0 0.0
    %982 = vmatpush1.xpose.msra.mxu0 0.0
    %983 = vmatprep.subr.mxu0 0.0
    %984 = vmatpush1.xpose.msra.mxu0 0.0
    %985 = vmatprep.subr.mxu0 0.0
    %986 = vmatpush1.xpose.msra.mxu0 0.0
    %987 = vmatprep.subr.mxu0 0.0
    %988 = vmatpush1.xpose.msra.mxu0 0.0
    %989 = vmatprep.subr.mxu0 0.0
    %990 = vmatpush1.xpose.msra.mxu0 0.0
    %991 = vmatprep.subr.mxu0 0.0
    %992 = vmatpush1.xpose.msra.mxu0 0.0
    %993 = vmatprep.subr.mxu0 0.0
    %994 = vmatpush1.xpose.msra.mxu0 0.0
    %995 = vmatprep.subr.mxu0 0.0
    %996 = vmatpush1.xpose.msra.mxu0 0.0
    %997 = vmatprep.subr.mxu0 0.0
    %998 = vmatpush1.xpose.msra.mxu0 0.0
    %999 = vmatprep.subr.mxu0 0.0
    %1000 = vmatpush1.xpose.msra.mxu0 0.0
    %1001 = vmatprep.subr.mxu0 0.0
    %1002 = vmatpush1.xpose.msra.mxu0 0.0
    %1003 = vmatprep.subr.mxu0 0.0
    %1004 = vmatpush1.xpose.msra.mxu0 0.0
    %1005 = vmatprep.subr.mxu0 0.0
    %1006 = vmatpush1.xpose.msra.mxu0 0.0
    %1007 = vmatprep.subr.mxu0 0.0
    %1008 = vmatpush1.xpose.msra.mxu0 0.0
    %1009 = vmatprep.subr.mxu0 0.0
    %1010 = vmatpush1.xpose.msra.mxu0 0.0
    %1011 = vmatprep.subr.mxu0 0.0
    %1012 = vmatpush1.xpose.msra.mxu0 0.0
    %1013 = vmatprep.subr.mxu0 0.0
    %1014 = vmatpush1.xpose.msra.mxu0 0.0
    %1015 = vmatprep.subr.mxu0 0.0
    %1016 = vmatpush1.xpose.msra.mxu0 0.0
    %1017 = vmatprep.subr.mxu0 0.0
    %1018 = vmatpush1.xpose.msra.mxu0 0.0
    %1019 = vmatprep.subr.mxu0 0.0
    %1020 = vmatpush1.xpose.msra.mxu0 0.0
    %1021 = vmatprep.subr.mxu0 0.0
    %1022 = vmatpush1.xpose.msra.mxu0 0.0
    %1023 = vmatprep.subr.mxu0 0.0
    %1024 = vmatpush1.xpose.msra.mxu0 0.0
    %1025 = vmatprep.subr.mxu0 0.0
    %1026 = vmatpush1.xpose.msra.mxu0 0.0
    %1027 = vmatprep.mubr.f32.mxu0 0.0
    %1028 = vmatmul.mubr.f32.gmra.mrb[0].mxu0 %v959
    %v1029 = vpop.f32.mrb[0].mxu0
    %v1030 = vadd.f32 0.0, %v1029
    %v1031 = vpop.f32.mrb[0].mxu0
    %1032 = vdwg.mxu0
    %v1033 = vsel %vm229, %v1030, -inf
    %1034 = vmax.xlane.f32.xlu0 %v1033
    %v1035 = vpop.xlane.xlu0 %1034
    %v1036 = vsub.f32 %v1030, %v1035
    %v1037 = vmul.f32 %v1036, 1.442695
    %v1038 = vpow.pop %v1037
    %v1039 = vsel %vm229, %v1038, 0.0
    %1040 = vadd.xlane.f32.xlu0 %v1039
    %v1041 = vpop.xlane.xlu0 %1040
    %v1042 = vrcp.pop %v1041
    %v1043 = vmul.f32 %v1041, %v1042
    %v1044 = vsub.f32 2.0, %v1043
    %v1045 = vmul.f32 %v1042, %v1044
    %v1046 = vmul.f32 %v1038, %v1045
    %1047 = vrot.lane.b32.xlu0 %v218, 40
    %v1048 = vpop.permute.xlu0 %1047
    %v1051 = vsel %vm229, %v1046, 0
    %1053 = vmatprep.subr.mxu0 0.0
    %1054 = vmatpush1.msra.mxu0 %v1048
    %1055 = vmatprep.subr.mxu0 0.0
    %1056 = vmatpush1.msra.mxu0 0.0
    %1057 = vmatprep.subr.mxu0 0.0
    %1058 = vmatpush1.msra.mxu0 0.0
    %1059 = vmatprep.subr.mxu0 0.0
    %1060 = vmatpush1.msra.mxu0 0.0
    %1061 = vmatprep.subr.mxu0 0.0
    %1062 = vmatpush1.msra.mxu0 0.0
    %1063 = vmatprep.subr.mxu0 0.0
    %1064 = vmatpush1.msra.mxu0 0.0
    %1065 = vmatprep.subr.mxu0 0.0
    %1066 = vmatpush1.msra.mxu0 0.0
    %1067 = vmatprep.subr.mxu0 0.0
    %1068 = vmatpush1.msra.mxu0 0.0
    %1069 = vmatprep.subr.mxu0 0.0
    %1070 = vmatpush1.msra.mxu0 0.0
    %1071 = vmatprep.subr.mxu0 0.0
    %1072 = vmatpush1.msra.mxu0 0.0
    %1073 = vmatprep.subr.mxu0 0.0
    %1074 = vmatpush1.msra.mxu0 0.0
    %1075 = vmatprep.subr.mxu0 0.0
    %1076 = vmatpush1.msra.mxu0 0.0
    %1077 = vmatprep.subr.mxu0 0.0
    %1078 = vmatpush1.msra.mxu0 0.0
    %1079 = vmatprep.subr.mxu0 0.0
    %1080 = vmatpush1.msra.mxu0 0.0
    %1081 = vmatprep.subr.mxu0 0.0
    %1082 = vmatpush1.msra.mxu0 0.0
    %1083 = vmatprep.subr.mxu0 0.0
    %1084 = vmatpush1.msra.mxu0 0.0
    %1085 = vmatprep.subr.mxu0 0.0
    %1086 = vmatpush1.msra.mxu0 0.0
    %1087 = vmatprep.subr.mxu0 0.0
    %1088 = vmatpush1.msra.mxu0 0.0
    %1089 = vmatprep.subr.mxu0 0.0
    %1090 = vmatpush1.msra.mxu0 0.0
    %1091 = vmatprep.subr.mxu0 0.0
    %1092 = vmatpush1.msra.mxu0 0.0
    %1093 = vmatprep.subr.mxu0 0.0
    %1094 = vmatpush1.msra.mxu0 0.0
    %1095 = vmatprep.subr.mxu0 0.0
    %1096 = vmatpush1.msra.mxu0 0.0
    %1097 = vmatprep.subr.mxu0 0.0
    %1098 = vmatpush1.msra.mxu0 0.0
    %1099 = vmatprep.subr.mxu0 0.0
    %1100 = vmatpush1.msra.mxu0 0.0
    %1101 = vmatprep.subr.mxu0 0.0
    %1102 = vmatpush1.msra.mxu0 0.0
    %1103 = vmatprep.subr.mxu0 0.0
    %1104 = vmatpush1.msra.mxu0 0.0
    %1105 = vmatprep.subr.mxu0 0.0
    %1106 = vmatpush1.msra.mxu0 0.0
    %1107 = vmatprep.subr.mxu0 0.0
    %1108 = vmatpush1.msra.mxu0 0.0
    %1109 = vmatprep.subr.mxu0 0.0
    %1110 = vmatpush1.msra.mxu0 0.0
    %1111 = vmatprep.subr.mxu0 0.0
    %1112 = vmatpush1.msra.mxu0 0.0
    %1113 = vmatprep.subr.mxu0 0.0
    %1114 = vmatpush1.msra.mxu0 0.0
    %1115 = vmatprep.subr.mxu0 0.0
    %1116 = vmatpush1.msra.mxu0 0.0
    %1117 = vmatprep.mubr.f32.mxu0 0.0
    %1118 = vmatmul.mubr.f32.gmra.mrb[0].mxu0 %v1051
    %v1119 = vpop.f32.mrb[0].mxu0
    %v1120 = vadd.f32 0.0, %v1119
    %v1121 = vpop.f32.mrb[0].mxu0
    %1122 = vdwg.mxu0
    %s1123 = scalar_lea.vmem %s5, 24
    %v1124 = vld [vmem:[%s1123] sm:$0xff]
    %v1126 = vsel %vm229, %v1120, 0
    %1128 = vmatprep.subr.mxu0 0.0
    %1129 = vmatpush1.msra.mxu0 %v1124
    %1130 = vmatprep.subr.mxu0 0.0
    %1131 = vmatpush1.msra.mxu0 0.0
    %1132 = vmatprep.subr.mxu0 0.0
    %1133 = vmatpush1.msra.mxu0 0.0
    %1134 = vmatprep.subr.mxu0 0.0
    %1135 = vmatpush1.msra.mxu0 0.0
    %1136 = vmatprep.subr.mxu0 0.0
    %1137 = vmatpush1.msra.mxu0 0.0
    %1138 = vmatprep.subr.mxu0 0.0
    %1139 = vmatpush1.msra.mxu0 0.0
    %1140 = vmatprep.subr.mxu0 0.0
    %1141 = vmatpush1.msra.mxu0 0.0
    %1142 = vmatprep.subr.mxu0 0.0
    %1143 = vmatpush1.msra.mxu0 0.0
    %1144 = vmatprep.subr.mxu0 0.0
    %1145 = vmatpush1.msra.mxu0 0.0
    %1146 = vmatprep.subr.mxu0 0.0
    %1147 = vmatpush1.msra.mxu0 0.0
    %1148 = vmatprep.subr.mxu0 0.0
    %1149 = vmatpush1.msra.mxu0 0.0
    %1150 = vmatprep.subr.mxu0 0.0
    %1151 = vmatpush1.msra.mxu0 0.0
    %1152 = vmatprep.subr.mxu0 0.0
    %1153 = vmatpush1.msra.mxu0 0.0
    %1154 = vmatprep.subr.mxu0 0.0
    %1155 = vmatpush1.msra.mxu0 0.0
    %1156 = vmatprep.subr.mxu0 0.0
    %1157 = vmatpush1.msra.mxu0 0.0
    %1158 = vmatprep.subr.mxu0 0.0
    %1159 = vmatpush1.msra.mxu0 0.0
    %1160 = vmatprep.subr.mxu0 0.0
    %1161 = vmatpush1.msra.mxu0 0.0
    %1162 = vmatprep.subr.mxu0 0.0
    %1163 = vmatpush1.msra.mxu0 0.0
    %1164 = vmatprep.subr.mxu0 0.0
    %1165 = vmatpush1.msra.mxu0 0.0
    %1166 = vmatprep.subr.mxu0 0.0
    %1167 = vmatpush1.msra.mxu0 0.0
    %1168 = vmatprep.subr.mxu0 0.0
    %1169 = vmatpush1.msra.mxu0 0.0
    %1170 = vmatprep.subr.mxu0 0.0
    %1171 = vmatpush1.msra.mxu0 0.0
    %1172 = vmatprep.subr.mxu0 0.0
    %1173 = vmatpush1.msra.mxu0 0.0
    %1174 = vmatprep.subr.mxu0 0.0
    %1175 = vmatpush1.msra.mxu0 0.0
    %1176 = vmatprep.subr.mxu0 0.0
    %1177 = vmatpush1.msra.mxu0 0.0
    %1178 = vmatprep.subr.mxu0 0.0
    %1179 = vmatpush1.msra.mxu0 0.0
    %1180 = vmatprep.subr.mxu0 0.0
    %1181 = vmatpush1.msra.mxu0 0.0
    %1182 = vmatprep.subr.mxu0 0.0
    %1183 = vmatpush1.msra.mxu0 0.0
    %1184 = vmatprep.subr.mxu0 0.0
    %1185 = vmatpush1.msra.mxu0 0.0
    %1186 = vmatprep.subr.mxu0 0.0
    %1187 = vmatpush1.msra.mxu0 0.0
    %1188 = vmatprep.subr.mxu0 0.0
    %1189 = vmatpush1.msra.mxu0 0.0
    %1190 = vmatprep.subr.mxu0 0.0
    %1191 = vmatpush1.msra.mxu0 0.0
    %1192 = vmatprep.mubr.f32.mxu0 0.0
    %1193 = vmatmul.mubr.f32.gmra.mrb[0].mxu0 %v1126
    %v1194 = vpop.f32.mrb[0].mxu0
    %v1195 = vadd.f32 0.0, %v1194
    %v1196 = vpop.f32.mrb[0].mxu0
    %1197 = vdwg.mxu0
    %v1198 = vadd.f32 %v954, %v1195
    %1200 = vrot.lane.b32.xlu0 %v223, 96
    %v1201 = vpop.permute.xlu0 %1200
    %v1202 = vsel %vm229, %v223, 0
    %v1204 = vsel %vm229, %v1201, 0
    %1206 = vmatprep.subr.mxu0 0.0
    %1207 = vmatpush1.xpose.msra.mxu0 %v1204
    %1208 = vmatprep.subr.mxu0 0.0
    %1209 = vmatpush1.xpose.msra.mxu0 0.0
    %1210 = vmatprep.subr.mxu0 0.0
    %1211 = vmatpush1.xpose.msra.mxu0 0.0
    %1212 = vmatprep.subr.mxu0 0.0
    %1213 = vmatpush1.xpose.msra.mxu0 0.0
    %1214 = vmatprep.subr.mxu0 0.0
    %1215 = vmatpush1.xpose.msra.mxu0 0.0
    %1216 = vmatprep.subr.mxu0 0.0
    %1217 = vmatpush1.xpose.msra.mxu0 0.0
    %1218 = vmatprep.subr.mxu0 0.0
    %1219 = vmatpush1.xpose.msra.mxu0 0.0
    %1220 = vmatprep.subr.mxu0 0.0
    %1221 = vmatpush1.xpose.msra.mxu0 0.0
    %1222 = vmatprep.subr.mxu0 0.0
    %1223 = vmatpush1.xpose.msra.mxu0 0.0
    %1224 = vmatprep.subr.mxu0 0.0
    %1225 = vmatpush1.xpose.msra.mxu0 0.0
    %1226 = vmatprep.subr.mxu0 0.0
    %1227 = vmatpush1.xpose.msra.mxu0 0.0
    %1228 = vmatprep.subr.mxu0 0.0
    %1229 = vmatpush1.xpose.msra.mxu0 0.0
    %1230 = vmatprep.subr.mxu0 0.0
    %1231 = vmatpush1.xpose.msra.mxu0 0.0
    %1232 = vmatprep.subr.mxu0 0.0
    %1233 = vmatpush1.xpose.msra.mxu0 0.0
    %1234 = vmatprep.subr.mxu0 0.0
    %1235 = vmatpush1.xpose.msra.mxu0 0.0
    %1236 = vmatprep.subr.mxu0 0.0
    %1237 = vmatpush1.xpose.msra.mxu0 0.0
    %1238 = vmatprep.subr.mxu0 0.0
    %1239 = vmatpush1.xpose.msra.mxu0 0.0
    %1240 = vmatprep.subr.mxu0 0.0
    %1241 = vmatpush1.xpose.msra.mxu0 0.0
    %1242 = vmatprep.subr.mxu0 0.0
    %1243 = vmatpush1.xpose.msra.mxu0 0.0
    %1244 = vmatprep.subr.mxu0 0.0
    %1245 = vmatpush1.xpose.msra.mxu0 0.0
    %1246 = vmatprep.subr.mxu0 0.0
    %1247 = vmatpush1.xpose.msra.mxu0 0.0
    %1248 = vmatprep.subr.mxu0 0.0
    %1249 = vmatpush1.xpose.msra.mxu0 0.0
    %1250 = vmatprep.subr.mxu0 0.0
    %1251 = vmatpush1.xpose.msra.mxu0 0.0
    %1252 = vmatprep.subr.mxu0 0.0
    %1253 = vmatpush1.xpose.msra.mxu0 0.0
    %1254 = vmatprep.subr.mxu0 0.0
    %1255 = vmatpush1.xpose.msra.mxu0 0.0
    %1256 = vmatprep.subr.mxu0 0.0
    %1257 = vmatpush1.xpose.msra.mxu0 0.0
    %1258 = vmatprep.subr.mxu0 0.0
    %1259 = vmatpush1.xpose.msra.mxu0 0.0
    %1260 = vmatprep.subr.mxu0 0.0
    %1261 = vmatpush1.xpose.msra.mxu0 0.0
    %1262 = vmatprep.subr.mxu0 0.0
    %1263 = vmatpush1.xpose.msra.mxu0 0.0
    %1264 = vmatprep.subr.mxu0 0.0
    %1265 = vmatpush1.xpose.msra.mxu0 0.0
    %1266 = vmatprep.subr.mxu0 0.0
    %1267 = vmatpush1.xpose.msra.mxu0 0.0
    %1268 = vmatprep.subr.mxu0 0.0
    %1269 = vmatpush1.xpose.msra.mxu0 0.0
    %1270 = vmatprep.mubr.f32.mxu0 0.0
    %1271 = vmatmul.mubr.f32.gmra.mrb[0].mxu0 %v1202
    %v1272 = vpop.f32.mrb[0].mxu0
    %v1273 = vadd.f32 0.0, %v1272
    %v1274 = vpop.f32.mrb[0].mxu0
    %1275 = vdwg.mxu0
    %v1276 = vsel %vm229, %v1273, -inf
    %1277 = vmax.xlane.f32.xlu0 %v1276
    %v1278 = vpop.xlane.xlu0 %1277
    %v1279 = vsub.f32 %v1273, %v1278
    %v1280 = vmul.f32 %v1279, 1.442695
    %v1281 = vpow.pop %v1280
    %v1282 = vsel %vm229, %v1281, 0.0
    %1283 = vadd.xlane.f32.xlu0 %v1282
    %v1284 = vpop.xlane.xlu0 %1283
    %v1285 = vrcp.pop %v1284
    %v1286 = vmul.f32 %v1284, %v1285
    %v1287 = vsub.f32 2.0, %v1286
    %v1288 = vmul.f32 %v1285, %v1287
    %v1289 = vmul.f32 %v1281, %v1288
    %1290 = vrot.lane.b32.xlu0 %v223, 64
    %v1291 = vpop.permute.xlu0 %1290
    %v1294 = vsel %vm229, %v1289, 0
    %1296 = vmatprep.subr.mxu0 0.0
    %1297 = vmatpush1.msra.mxu0 %v1291
    %1298 = vmatprep.subr.mxu0 0.0
    %1299 = vmatpush1.msra.mxu0 0.0
    %1300 = vmatprep.subr.mxu0 0.0
    %1301 = vmatpush1.msra.mxu0 0.0
    %1302 = vmatprep.subr.mxu0 0.0
    %1303 = vmatpush1.msra.mxu0 0.0
    %1304 = vmatprep.subr.mxu0 0.0
    %1305 = vmatpush1.msra.mxu0 0.0
    %1306 = vmatprep.subr.mxu0 0.0
    %1307 = vmatpush1.msra.mxu0 0.0
    %1308 = vmatprep.subr.mxu0 0.0
    %1309 = vmatpush1.msra.mxu0 0.0
    %1310 = vmatprep.subr.mxu0 0.0
    %1311 = vmatpush1.msra.mxu0 0.0
    %1312 = vmatprep.subr.mxu0 0.0
    %1313 = vmatpush1.msra.mxu0 0.0
    %1314 = vmatprep.subr.mxu0 0.0
    %1315 = vmatpush1.msra.mxu0 0.0
    %1316 = vmatprep.subr.mxu0 0.0
    %1317 = vmatpush1.msra.mxu0 0.0
    %1318 = vmatprep.subr.mxu0 0.0
    %1319 = vmatpush1.msra.mxu0 0.0
    %1320 = vmatprep.subr.mxu0 0.0
    %1321 = vmatpush1.msra.mxu0 0.0
    %1322 = vmatprep.subr.mxu0 0.0
    %1323 = vmatpush1.msra.mxu0 0.0
    %1324 = vmatprep.subr.mxu0 0.0
    %1325 = vmatpush1.msra.mxu0 0.0
    %1326 = vmatprep.subr.mxu0 0.0
    %1327 = vmatpush1.msra.mxu0 0.0
    %1328 = vmatprep.subr.mxu0 0.0
    %1329 = vmatpush1.msra.mxu0 0.0
    %1330 = vmatprep.subr.mxu0 0.0
    %1331 = vmatpush1.msra.mxu0 0.0
    %1332 = vmatprep.subr.mxu0 0.0
    %1333 = vmatpush1.msra.mxu0 0.0
    %1334 = vmatprep.subr.mxu0 0.0
    %1335 = vmatpush1.msra.mxu0 0.0
    %1336 = vmatprep.subr.mxu0 0.0
    %1337 = vmatpush1.msra.mxu0 0.0
    %1338 = vmatprep.subr.mxu0 0.0
    %1339 = vmatpush1.msra.mxu0 0.0
    %1340 = vmatprep.subr.mxu0 0.0
    %1341 = vmatpush1.msra.mxu0 0.0
    %1342 = vmatprep.subr.mxu0 0.0
    %1343 = vmatpush1.msra.mxu0 0.0
    %1344 = vmatprep.subr.mxu0 0.0
    %1345 = vmatpush1.msra.mxu0 0.0
    %1346 = vmatprep.subr.mxu0 0.0
    %1347 = vmatpush1.msra.mxu0 0.0
    %1348 = vmatprep.subr.mxu0 0.0
    %1349 = vmatpush1.msra.mxu0 0.0
    %1350 = vmatprep.subr.mxu0 0.0
    %1351 = vmatpush1.msra.mxu0 0.0
    %1352 = vmatprep.subr.mxu0 0.0
    %1353 = vmatpush1.msra.mxu0 0.0
    %1354 = vmatprep.subr.mxu0 0.0
    %1355 = vmatpush1.msra.mxu0 0.0
    %1356 = vmatprep.subr.mxu0 0.0
    %1357 = vmatpush1.msra.mxu0 0.0
    %1358 = vmatprep.subr.mxu0 0.0
    %1359 = vmatpush1.msra.mxu0 0.0
    %1360 = vmatprep.mubr.f32.mxu0 0.0
    %1361 = vmatmul.mubr.f32.gmra.mrb[0].mxu0 %v1294
    %v1362 = vpop.f32.mrb[0].mxu0
    %v1363 = vadd.f32 0.0, %v1362
    %v1364 = vpop.f32.mrb[0].mxu0
    %1365 = vdwg.mxu0
    %1366 = vrot.lane.b32.xlu0 %v223, 120
    %v1367 = vpop.permute.xlu0 %1366
    %1368 = vrot.lane.b32.xlu0 %v223, 88
    %v1369 = vpop.permute.xlu0 %1368
    %v1370 = vsel %vm229, %v1367, 0
    %v1372 = vsel %vm229, %v1369, 0
    %1374 = vmatprep.subr.mxu0 0.0
    %1375 = vmatpush1.xpose.msra.mxu0 %v1372
    %1376 = vmatprep.subr.mxu0 0.0
    %1377 = vmatpush1.xpose.msra.mxu0 0.0
    %1378 = vmatprep.subr.mxu0 0.0
    %1379 = vmatpush1.xpose.msra.mxu0 0.0
    %1380 = vmatprep.subr.mxu0 0.0
    %1381 = vmatpush1.xpose.msra.mxu0 0.0
    %1382 = vmatprep.subr.mxu0 0.0
    %1383 = vmatpush1.xpose.msra.mxu0 0.0
    %1384 = vmatprep.subr.mxu0 0.0
    %1385 = vmatpush1.xpose.msra.mxu0 0.0
    %1386 = vmatprep.subr.mxu0 0.0
    %1387 = vmatpush1.xpose.msra.mxu0 0.0
    %1388 = vmatprep.subr.mxu0 0.0
    %1389 = vmatpush1.xpose.msra.mxu0 0.0
    %1390 = vmatprep.subr.mxu0 0.0
    %1391 = vmatpush1.xpose.msra.mxu0 0.0
    %1392 = vmatprep.subr.mxu0 0.0
    %1393 = vmatpush1.xpose.msra.mxu0 0.0
    %1394 = vmatprep.subr.mxu0 0.0
    %1395 = vmatpush1.xpose.msra.mxu0 0.0
    %1396 = vmatprep.subr.mxu0 0.0
    %1397 = vmatpush1.xpose.msra.mxu0 0.0
    %1398 = vmatprep.subr.mxu0 0.0
    %1399 = vmatpush1.xpose.msra.mxu0 0.0
    %1400 = vmatprep.subr.mxu0 0.0
    %1401 = vmatpush1.xpose.msra.mxu0 0.0
    %1402 = vmatprep.subr.mxu0 0.0
    %1403 = vmatpush1.xpose.msra.mxu0 0.0
    %1404 = vmatprep.subr.mxu0 0.0
    %1405 = vmatpush1.xpose.msra.mxu0 0.0
    %1406 = vmatprep.subr.mxu0 0.0
    %1407 = vmatpush1.xpose.msra.mxu0 0.0
    %1408 = vmatprep.subr.mxu0 0.0
    %1409 = vmatpush1.xpose.msra.mxu0 0.0
    %1410 = vmatprep.subr.mxu0 0.0
    %1411 = vmatpush1.xpose.msra.mxu0 0.0
    %1412 = vmatprep.subr.mxu0 0.0
    %1413 = vmatpush1.xpose.msra.mxu0 0.0
    %1414 = vmatprep.subr.mxu0 0.0
    %1415 = vmatpush1.xpose.msra.mxu0 0.0
    %1416 = vmatprep.subr.mxu0 0.0
    %1417 = vmatpush1.xpose.msra.mxu0 0.0
    %1418 = vmatprep.subr.mxu0 0.0
    %1419 = vmatpush1.xpose.msra.mxu0 0.0
    %1420 = vmatprep.subr.mxu0 0.0
    %1421 = vmatpush1.xpose.msra.mxu0 0.0
    %1422 = vmatprep.subr.mxu0 0.0
    %1423 = vmatpush1.xpose.msra.mxu0 0.0
    %1424 = vmatprep.subr.mxu0 0.0
    %1425 = vmatpush1.xpose.msra.mxu0 0.0
    %1426 = vmatprep.subr.mxu0 0.0
    %1427 = vmatpush1.xpose.msra.mxu0 0.0
    %1428 = vmatprep.subr.mxu0 0.0
    %1429 = vmatpush1.xpose.msra.mxu0 0.0
    %1430 = vmatprep.subr.mxu0 0.0
    %1431 = vmatpush1.xpose.msra.mxu0 0.0
    %1432 = vmatprep.subr.mxu0 0.0
    %1433 = vmatpush1.xpose.msra.mxu0 0.0
    %1434 = vmatprep.subr.mxu0 0.0
    %1435 = vmatpush1.xpose.msra.mxu0 0.0
    %1436 = vmatprep.subr.mxu0 0.0
    %1437 = vmatpush1.xpose.msra.mxu0 0.0
    %1438 = vmatprep.mubr.f32.mxu0 0.0
    %1439 = vmatmul.mubr.f32.gmra.mrb[0].mxu0 %v1370
    %v1440 = vpop.f32.mrb[0].mxu0
    %v1441 = vadd.f32 0.0, %v1440
    %v1442 = vpop.f32.mrb[0].mxu0
    %1443 = vdwg.mxu0
    %v1444 = vsel %vm229, %v1441, -inf
    %1445 = vmax.xlane.f32.xlu0 %v1444
    %v1446 = vpop.xlane.xlu0 %1445
    %v1447 = vsub.f32 %v1441, %v1446
    %v1448 = vmul.f32 %v1447, 1.442695
    %v1449 = vpow.pop %v1448
    %v1450 = vsel %vm229, %v1449, 0.0
    %1451 = vadd.xlane.f32.xlu0 %v1450
    %v1452 = vpop.xlane.xlu0 %1451
    %v1453 = vrcp.pop %v1452
    %v1454 = vmul.f32 %v1452, %v1453
    %v1455 = vsub.f32 2.0, %v1454
    %v1456 = vmul.f32 %v1453, %v1455
    %v1457 = vmul.f32 %v1449, %v1456
    %1458 = vrot.lane.b32.xlu0 %v223, 56
    %v1459 = vpop.permute.xlu0 %1458
    %v1462 = vsel %vm229, %v1457, 0
    %1464 = vmatprep.subr.mxu0 0.0
    %1465 = vmatpush1.msra.mxu0 %v1459
    %1466 = vmatprep.subr.mxu0 0.0
    %1467 = vmatpush1.msra.mxu0 0.0
    %1468 = vmatprep.subr.mxu0 0.0
    %1469 = vmatpush1.msra.mxu0 0.0
    %1470 = vmatprep.subr.mxu0 0.0
    %1471 = vmatpush1.msra.mxu0 0.0
    %1472 = vmatprep.subr.mxu0 0.0
    %1473 = vmatpush1.msra.mxu0 0.0
    %1474 = vmatprep.subr.mxu0 0.0
    %1475 = vmatpush1.msra.mxu0 0.0
    %1476 = vmatprep.subr.mxu0 0.0
    %1477 = vmatpush1.msra.mxu0 0.0
    %1478 = vmatprep.subr.mxu0 0.0
    %1479 = vmatpush1.msra.mxu0 0.0
    %1480 = vmatprep.subr.mxu0 0.0
    %1481 = vmatpush1.msra.mxu0 0.0
    %1482 = vmatprep.subr.mxu0 0.0
    %1483 = vmatpush1.msra.mxu0 0.0
    %1484 = vmatprep.subr.mxu0 0.0
    %1485 = vmatpush1.msra.mxu0 0.0
    %1486 = vmatprep.subr.mxu0 0.0
    %1487 = vmatpush1.msra.mxu0 0.0
    %1488 = vmatprep.subr.mxu0 0.0
    %1489 = vmatpush1.msra.mxu0 0.0
    %1490 = vmatprep.subr.mxu0 0.0
    %1491 = vmatpush1.msra.mxu0 0.0
    %1492 = vmatprep.subr.mxu0 0.0
    %1493 = vmatpush1.msra.mxu0 0.0
    %1494 = vmatprep.subr.mxu0 0.0
    %1495 = vmatpush1.msra.mxu0 0.0
    %1496 = vmatprep.subr.mxu0 0.0
    %1497 = vmatpush1.msra.mxu0 0.0
    %1498 = vmatprep.subr.mxu0 0.0
    %1499 = vmatpush1.msra.mxu0 0.0
    %1500 = vmatprep.subr.mxu0 0.0
    %1501 = vmatpush1.msra.mxu0 0.0
    %1502 = vmatprep.subr.mxu0 0.0
    %1503 = vmatpush1.msra.mxu0 0.0
    %1504 = vmatprep.subr.mxu0 0.0
    %1505 = vmatpush1.msra.mxu0 0.0
    %1506 = vmatprep.subr.mxu0 0.0
    %1507 = vmatpush1.msra.mxu0 0.0
    %1508 = vmatprep.subr.mxu0 0.0
    %1509 = vmatpush1.msra.mxu0 0.0
    %1510 = vmatprep.subr.mxu0 0.0
    %1511 = vmatpush1.msra.mxu0 0.0
    %1512 = vmatprep.subr.mxu0 0.0
    %1513 = vmatpush1.msra.mxu0 0.0
    %1514 = vmatprep.subr.mxu0 0.0
    %1515 = vmatpush1.msra.mxu0 0.0
    %1516 = vmatprep.subr.mxu0 0.0
    %1517 = vmatpush1.msra.mxu0 0.0
    %1518 = vmatprep.subr.mxu0 0.0
    %1519 = vmatpush1.msra.mxu0 0.0
    %1520 = vmatprep.subr.mxu0 0.0
    %1521 = vmatpush1.msra.mxu0 0.0
    %1522 = vmatprep.subr.mxu0 0.0
    %1523 = vmatpush1.msra.mxu0 0.0
    %1524 = vmatprep.subr.mxu0 0.0
    %1525 = vmatpush1.msra.mxu0 0.0
    %1526 = vmatprep.subr.mxu0 0.0
    %1527 = vmatpush1.msra.mxu0 0.0
    %1528 = vmatprep.mubr.f32.mxu0 0.0
    %1529 = vmatmul.mubr.f32.gmra.mrb[0].mxu0 %v1462
    %v1530 = vpop.f32.mrb[0].mxu0
    %v1531 = vadd.f32 0.0, %v1530
    %v1532 = vpop.f32.mrb[0].mxu0
    %1533 = vdwg.mxu0
    %v1535 = vsel %vm229, %v1531, 0
    %1537 = vmatprep.subr.mxu0 0.0
    %1538 = vmatpush1.msra.mxu0 %v564
    %1539 = vmatprep.subr.mxu0 0.0
    %1540 = vmatpush1.msra.mxu0 0.0
    %1541 = vmatprep.subr.mxu0 0.0
    %1542 = vmatpush1.msra.mxu0 0.0
    %1543 = vmatprep.subr.mxu0 0.0
    %1544 = vmatpush1.msra.mxu0 0.0
    %1545 = vmatprep.subr.mxu0 0.0
    %1546 = vmatpush1.msra.mxu0 0.0
    %1547 = vmatprep.subr.mxu0 0.0
    %1548 = vmatpush1.msra.mxu0 0.0
    %1549 = vmatprep.subr.mxu0 0.0
    %1550 = vmatpush1.msra.mxu0 0.0
    %1551 = vmatprep.subr.mxu0 0.0
    %1552 = vmatpush1.msra.mxu0 0.0
    %1553 = vmatprep.subr.mxu0 0.0
    %1554 = vmatpush1.msra.mxu0 0.0
    %1555 = vmatprep.subr.mxu0 0.0
    %1556 = vmatpush1.msra.mxu0 0.0
    %1557 = vmatprep.subr.mxu0 0.0
    %1558 = vmatpush1.msra.mxu0 0.0
    %1559 = vmatprep.subr.mxu0 0.0
    %1560 = vmatpush1.msra.mxu0 0.0
    %1561 = vmatprep.subr.mxu0 0.0
    %1562 = vmatpush1.msra.mxu0 0.0
    %1563 = vmatprep.subr.mxu0 0.0
    %1564 = vmatpush1.msra.mxu0 0.0
    %1565 = vmatprep.subr.mxu0 0.0
    %1566 = vmatpush1.msra.mxu0 0.0
    %1567 = vmatprep.subr.mxu0 0.0
    %1568 = vmatpush1.msra.mxu0 0.0
    %1569 = vmatprep.subr.mxu0 0.0
    %1570 = vmatpush1.msra.mxu0 0.0
    %1571 = vmatprep.subr.mxu0 0.0
    %1572 = vmatpush1.msra.mxu0 0.0
    %1573 = vmatprep.subr.mxu0 0.0
    %1574 = vmatpush1.msra.mxu0 0.0
    %1575 = vmatprep.subr.mxu0 0.0
    %1576 = vmatpush1.msra.mxu0 0.0
    %1577 = vmatprep.subr.mxu0 0.0
    %1578 = vmatpush1.msra.mxu0 0.0
    %1579 = vmatprep.subr.mxu0 0.0
    %1580 = vmatpush1.msra.mxu0 0.0
    %1581 = vmatprep.subr.mxu0 0.0
    %1582 = vmatpush1.msra.mxu0 0.0
    %1583 = vmatprep.subr.mxu0 0.0
    %1584 = vmatpush1.msra.mxu0 0.0
    %1585 = vmatprep.subr.mxu0 0.0
    %1586 = vmatpush1.msra.mxu0 0.0
    %1587 = vmatprep.subr.mxu0 0.0
    %1588 = vmatpush1.msra.mxu0 0.0
    %1589 = vmatprep.subr.mxu0 0.0
    %1590 = vmatpush1.msra.mxu0 0.0
    %1591 = vmatprep.subr.mxu0 0.0
    %1592 = vmatpush1.msra.mxu0 0.0
    %1593 = vmatprep.subr.mxu0 0.0
    %1594 = vmatpush1.msra.mxu0 0.0
    %1595 = vmatprep.subr.mxu0 0.0
    %1596 = vmatpush1.msra.mxu0 0.0
    %1597 = vmatprep.subr.mxu0 0.0
    %1598 = vmatpush1.msra.mxu0 0.0
    %1599 = vmatprep.subr.mxu0 0.0
    %1600 = vmatpush1.msra.mxu0 0.0
    %1601 = vmatprep.mubr.f32.mxu0 0.0
    %1602 = vmatmul.mubr.f32.gmra.mrb[0].mxu0 %v1535
    %v1603 = vpop.f32.mrb[0].mxu0
    %v1604 = vadd.f32 0.0, %v1603
    %v1605 = vpop.f32.mrb[0].mxu0
    %1606 = vdwg.mxu0
    %v1608 = vsel %vm229, %v1363, 0
    %1610 = vmatprep.subr.mxu0 0.0
    %1611 = vmatpush1.msra.mxu0 %v394
    %1612 = vmatprep.subr.mxu0 0.0
    %1613 = vmatpush1.msra.mxu0 0.0
    %1614 = vmatprep.subr.mxu0 0.0
    %1615 = vmatpush1.msra.mxu0 0.0
    %1616 = vmatprep.subr.mxu0 0.0
    %1617 = vmatpush1.msra.mxu0 0.0
    %1618 = vmatprep.subr.mxu0 0.0
    %1619 = vmatpush1.msra.mxu0 0.0
    %1620 = vmatprep.subr.mxu0 0.0
    %1621 = vmatpush1.msra.mxu0 0.0
    %1622 = vmatprep.subr.mxu0 0.0
    %1623 = vmatpush1.msra.mxu0 0.0
    %1624 = vmatprep.subr.mxu0 0.0
    %1625 = vmatpush1.msra.mxu0 0.0
    %1626 = vmatprep.subr.mxu0 0.0
    %1627 = vmatpush1.msra.mxu0 0.0
    %1628 = vmatprep.subr.mxu0 0.0
    %1629 = vmatpush1.msra.mxu0 0.0
    %1630 = vmatprep.subr.mxu0 0.0
    %1631 = vmatpush1.msra.mxu0 0.0
    %1632 = vmatprep.subr.mxu0 0.0
    %1633 = vmatpush1.msra.mxu0 0.0
    %1634 = vmatprep.subr.mxu0 0.0
    %1635 = vmatpush1.msra.mxu0 0.0
    %1636 = vmatprep.subr.mxu0 0.0
    %1637 = vmatpush1.msra.mxu0 0.0
    %1638 = vmatprep.subr.mxu0 0.0
    %1639 = vmatpush1.msra.mxu0 0.0
    %1640 = vmatprep.subr.mxu0 0.0
    %1641 = vmatpush1.msra.mxu0 0.0
    %1642 = vmatprep.subr.mxu0 0.0
    %1643 = vmatpush1.msra.mxu0 0.0
    %1644 = vmatprep.subr.mxu0 0.0
    %1645 = vmatpush1.msra.mxu0 0.0
    %1646 = vmatprep.subr.mxu0 0.0
    %1647 = vmatpush1.msra.mxu0 0.0
    %1648 = vmatprep.subr.mxu0 0.0
    %1649 = vmatpush1.msra.mxu0 0.0
    %1650 = vmatprep.subr.mxu0 0.0
    %1651 = vmatpush1.msra.mxu0 0.0
    %1652 = vmatprep.subr.mxu0 0.0
    %1653 = vmatpush1.msra.mxu0 0.0
    %1654 = vmatprep.subr.mxu0 0.0
    %1655 = vmatpush1.msra.mxu0 0.0
    %1656 = vmatprep.subr.mxu0 0.0
    %1657 = vmatpush1.msra.mxu0 0.0
    %1658 = vmatprep.subr.mxu0 0.0
    %1659 = vmatpush1.msra.mxu0 0.0
    %1660 = vmatprep.subr.mxu0 0.0
    %1661 = vmatpush1.msra.mxu0 0.0
    %1662 = vmatprep.subr.mxu0 0.0
    %1663 = vmatpush1.msra.mxu0 0.0
    %1664 = vmatprep.subr.mxu0 0.0
    %1665 = vmatpush1.msra.mxu0 0.0
    %1666 = vmatprep.subr.mxu0 0.0
    %1667 = vmatpush1.msra.mxu0 0.0
    %1668 = vmatprep.subr.mxu0 0.0
    %1669 = vmatpush1.msra.mxu0 0.0
    %1670 = vmatprep.subr.mxu0 0.0
    %1671 = vmatpush1.msra.mxu0 0.0
    %1672 = vmatprep.subr.mxu0 0.0
    %1673 = vmatpush1.msra.mxu0 0.0
    %1674 = vmatprep.mubr.f32.mxu0 0.0
    %1675 = vmatmul.mubr.f32.gmra.mrb[0].mxu0 %v1608
    %v1676 = vpop.f32.mrb[0].mxu0
    %v1677 = vadd.f32 %v1604, %v1676
    %v1678 = vpop.f32.mrb[0].mxu0
    %1679 = vdwg.mxu0
    %1680 = vrot.lane.b32.xlu0 %v223, 112
    %v1681 = vpop.permute.xlu0 %1680
    %1682 = vrot.lane.b32.xlu0 %v223, 80
    %v1683 = vpop.permute.xlu0 %1682
    %v1684 = vsel %vm229, %v1681, 0
    %v1686 = vsel %vm229, %v1683, 0
    %1688 = vmatprep.subr.mxu0 0.0
    %1689 = vmatpush1.xpose.msra.mxu0 %v1686
    %1690 = vmatprep.subr.mxu0 0.0
    %1691 = vmatpush1.xpose.msra.mxu0 0.0
    %1692 = vmatprep.subr.mxu0 0.0
    %1693 = vmatpush1.xpose.msra.mxu0 0.0
    %1694 = vmatprep.subr.mxu0 0.0
    %1695 = vmatpush1.xpose.msra.mxu0 0.0
    %1696 = vmatprep.subr.mxu0 0.0
    %1697 = vmatpush1.xpose.msra.mxu0 0.0
    %1698 = vmatprep.subr.mxu0 0.0
    %1699 = vmatpush1.xpose.msra.mxu0 0.0
    %1700 = vmatprep.subr.mxu0 0.0
    %1701 = vmatpush1.xpose.msra.mxu0 0.0
    %1702 = vmatprep.subr.mxu0 0.0
    %1703 = vmatpush1.xpose.msra.mxu0 0.0
    %1704 = vmatprep.subr.mxu0 0.0
    %1705 = vmatpush1.xpose.msra.mxu0 0.0
    %1706 = vmatprep.subr.mxu0 0.0
    %1707 = vmatpush1.xpose.msra.mxu0 0.0
    %1708 = vmatprep.subr.mxu0 0.0
    %1709 = vmatpush1.xpose.msra.mxu0 0.0
    %1710 = vmatprep.subr.mxu0 0.0
    %1711 = vmatpush1.xpose.msra.mxu0 0.0
    %1712 = vmatprep.subr.mxu0 0.0
    %1713 = vmatpush1.xpose.msra.mxu0 0.0
    %1714 = vmatprep.subr.mxu0 0.0
    %1715 = vmatpush1.xpose.msra.mxu0 0.0
    %1716 = vmatprep.subr.mxu0 0.0
    %1717 = vmatpush1.xpose.msra.mxu0 0.0
    %1718 = vmatprep.subr.mxu0 0.0
    %1719 = vmatpush1.xpose.msra.mxu0 0.0
    %1720 = vmatprep.subr.mxu0 0.0
    %1721 = vmatpush1.xpose.msra.mxu0 0.0
    %1722 = vmatprep.subr.mxu0 0.0
    %1723 = vmatpush1.xpose.msra.mxu0 0.0
    %1724 = vmatprep.subr.mxu0 0.0
    %1725 = vmatpush1.xpose.msra.mxu0 0.0
    %1726 = vmatprep.subr.mxu0 0.0
    %1727 = vmatpush1.xpose.msra.mxu0 0.0
    %1728 = vmatprep.subr.mxu0 0.0
    %1729 = vmatpush1.xpose.msra.mxu0 0.0
    %1730 = vmatprep.subr.mxu0 0.0
    %1731 = vmatpush1.xpose.msra.mxu0 0.0
    %1732 = vmatprep.subr.mxu0 0.0
    %1733 = vmatpush1.xpose.msra.mxu0 0.0
    %1734 = vmatprep.subr.mxu0 0.0
    %1735 = vmatpush1.xpose.msra.mxu0 0.0
    %1736 = vmatprep.subr.mxu0 0.0
    %1737 = vmatpush1.xpose.msra.mxu0 0.0
    %1738 = vmatprep.subr.mxu0 0.0
    %1739 = vmatpush1.xpose.msra.mxu0 0.0
    %1740 = vmatprep.subr.mxu0 0.0
    %1741 = vmatpush1.xpose.msra.mxu0 0.0
    %1742 = vmatprep.subr.mxu0 0.0
    %1743 = vmatpush1.xpose.msra.mxu0 0.0
    %1744 = vmatprep.subr.mxu0 0.0
    %1745 = vmatpush1.xpose.msra.mxu0 0.0
    %1746 = vmatprep.subr.mxu0 0.0
    %1747 = vmatpush1.xpose.msra.mxu0 0.0
    %1748 = vmatprep.subr.mxu0 0.0
    %1749 = vmatpush1.xpose.msra.mxu0 0.0
    %1750 = vmatprep.subr.mxu0 0.0
    %1751 = vmatpush1.xpose.msra.mxu0 0.0
    %1752 = vmatprep.mubr.f32.mxu0 0.0
    %1753 = vmatmul.mubr.f32.gmra.mrb[0].mxu0 %v1684
    %v1754 = vpop.f32.mrb[0].mxu0
    %v1755 = vadd.f32 0.0, %v1754
    %v1756 = vpop.f32.mrb[0].mxu0
    %1757 = vdwg.mxu0
    %v1758 = vsel %vm229, %v1755, -inf
    %1759 = vmax.xlane.f32.xlu0 %v1758
    %v1760 = vpop.xlane.xlu0 %1759
    %v1761 = vsub.f32 %v1755, %v1760
    %v1762 = vmul.f32 %v1761, 1.442695
    %v1763 = vpow.pop %v1762
    %v1764 = vsel %vm229, %v1763, 0.0
    %1765 = vadd.xlane.f32.xlu0 %v1764
    %v1766 = vpop.xlane.xlu0 %1765
    %v1767 = vrcp.pop %v1766
    %v1768 = vmul.f32 %v1766, %v1767
    %v1769 = vsub.f32 2.0, %v1768
    %v1770 = vmul.f32 %v1767, %v1769
    %v1771 = vmul.f32 %v1763, %v1770
    %1772 = vrot.lane.b32.xlu0 %v223, 48
    %v1773 = vpop.permute.xlu0 %1772
    %v1776 = vsel %vm229, %v1771, 0
    %1778 = vmatprep.subr.mxu0 0.0
    %1779 = vmatpush1.msra.mxu0 %v1773
    %1780 = vmatprep.subr.mxu0 0.0
    %1781 = vmatpush1.msra.mxu0 0.0
    %1782 = vmatprep.subr.mxu0 0.0
    %1783 = vmatpush1.msra.mxu0 0.0
    %1784 = vmatprep.subr.mxu0 0.0
    %1785 = vmatpush1.msra.mxu0 0.0
    %1786 = vmatprep.subr.mxu0 0.0
    %1787 = vmatpush1.msra.mxu0 0.0
    %1788 = vmatprep.subr.mxu0 0.0
    %1789 = vmatpush1.msra.mxu0 0.0
    %1790 = vmatprep.subr.mxu0 0.0
    %1791 = vmatpush1.msra.mxu0 0.0
    %1792 = vmatprep.subr.mxu0 0.0
    %1793 = vmatpush1.msra.mxu0 0.0
    %1794 = vmatprep.subr.mxu0 0.0
    %1795 = vmatpush1.msra.mxu0 0.0
    %1796 = vmatprep.subr.mxu0 0.0
    %1797 = vmatpush1.msra.mxu0 0.0
    %1798 = vmatprep.subr.mxu0 0.0
    %1799 = vmatpush1.msra.mxu0 0.0
    %1800 = vmatprep.subr.mxu0 0.0
    %1801 = vmatpush1.msra.mxu0 0.0
    %1802 = vmatprep.subr.mxu0 0.0
    %1803 = vmatpush1.msra.mxu0 0.0
    %1804 = vmatprep.subr.mxu0 0.0
    %1805 = vmatpush1.msra.mxu0 0.0
    %1806 = vmatprep.subr.mxu0 0.0
    %1807 = vmatpush1.msra.mxu0 0.0
    %1808 = vmatprep.subr.mxu0 0.0
    %1809 = vmatpush1.msra.mxu0 0.0
    %1810 = vmatprep.subr.mxu0 0.0
    %1811 = vmatpush1.msra.mxu0 0.0
    %1812 = vmatprep.subr.mxu0 0.0
    %1813 = vmatpush1.msra.mxu0 0.0
    %1814 = vmatprep.subr.mxu0 0.0
    %1815 = vmatpush1.msra.mxu0 0.0
    %1816 = vmatprep.subr.mxu0 0.0
    %1817 = vmatpush1.msra.mxu0 0.0
    %1818 = vmatprep.subr.mxu0 0.0
    %1819 = vmatpush1.msra.mxu0 0.0
    %1820 = vmatprep.subr.mxu0 0.0
    %1821 = vmatpush1.msra.mxu0 0.0
    %1822 = vmatprep.subr.mxu0 0.0
    %1823 = vmatpush1.msra.mxu0 0.0
    %1824 = vmatprep.subr.mxu0 0.0
    %1825 = vmatpush1.msra.mxu0 0.0
    %1826 = vmatprep.subr.mxu0 0.0
    %1827 = vmatpush1.msra.mxu0 0.0
    %1828 = vmatprep.subr.mxu0 0.0
    %1829 = vmatpush1.msra.mxu0 0.0
    %1830 = vmatprep.subr.mxu0 0.0
    %1831 = vmatpush1.msra.mxu0 0.0
    %1832 = vmatprep.subr.mxu0 0.0
    %1833 = vmatpush1.msra.mxu0 0.0
    %1834 = vmatprep.subr.mxu0 0.0
    %1835 = vmatpush1.msra.mxu0 0.0
    %1836 = vmatprep.subr.mxu0 0.0
    %1837 = vmatpush1.msra.mxu0 0.0
    %1838 = vmatprep.subr.mxu0 0.0
    %1839 = vmatpush1.msra.mxu0 0.0
    %1840 = vmatprep.subr.mxu0 0.0
    %1841 = vmatpush1.msra.mxu0 0.0
    %1842 = vmatprep.mubr.f32.mxu0 0.0
    %1843 = vmatmul.mubr.f32.gmra.mrb[0].mxu0 %v1776
    %v1844 = vpop.f32.mrb[0].mxu0
    %v1845 = vadd.f32 0.0, %v1844
    %v1846 = vpop.f32.mrb[0].mxu0
    %1847 = vdwg.mxu0
    %v1849 = vsel %vm229, %v1845, 0
    %1851 = vmatprep.subr.mxu0 0.0
    %1852 = vmatpush1.msra.mxu0 %v880
    %1853 = vmatprep.subr.mxu0 0.0
    %1854 = vmatpush1.msra.mxu0 0.0
    %1855 = vmatprep.subr.mxu0 0.0
    %1856 = vmatpush1.msra.mxu0 0.0
    %1857 = vmatprep.subr.mxu0 0.0
    %1858 = vmatpush1.msra.mxu0 0.0
    %1859 = vmatprep.subr.mxu0 0.0
    %1860 = vmatpush1.msra.mxu0 0.0
    %1861 = vmatprep.subr.mxu0 0.0
    %1862 = vmatpush1.msra.mxu0 0.0
    %1863 = vmatprep.subr.mxu0 0.0
    %1864 = vmatpush1.msra.mxu0 0.0
    %1865 = vmatprep.subr.mxu0 0.0
    %1866 = vmatpush1.msra.mxu0 0.0
    %1867 = vmatprep.subr.mxu0 0.0
    %1868 = vmatpush1.msra.mxu0 0.0
    %1869 = vmatprep.subr.mxu0 0.0
    %1870 = vmatpush1.msra.mxu0 0.0
    %1871 = vmatprep.subr.mxu0 0.0
    %1872 = vmatpush1.msra.mxu0 0.0
    %1873 = vmatprep.subr.mxu0 0.0
    %1874 = vmatpush1.msra.mxu0 0.0
    %1875 = vmatprep.subr.mxu0 0.0
    %1876 = vmatpush1.msra.mxu0 0.0
    %1877 = vmatprep.subr.mxu0 0.0
    %1878 = vmatpush1.msra.mxu0 0.0
    %1879 = vmatprep.subr.mxu0 0.0
    %1880 = vmatpush1.msra.mxu0 0.0
    %1881 = vmatprep.subr.mxu0 0.0
    %1882 = vmatpush1.msra.mxu0 0.0
    %1883 = vmatprep.subr.mxu0 0.0
    %1884 = vmatpush1.msra.mxu0 0.0
    %1885 = vmatprep.subr.mxu0 0.0
    %1886 = vmatpush1.msra.mxu0 0.0
    %1887 = vmatprep.subr.mxu0 0.0
    %1888 = vmatpush1.msra.mxu0 0.0
    %1889 = vmatprep.subr.mxu0 0.0
    %1890 = vmatpush1.msra.mxu0 0.0
    %1891 = vmatprep.subr.mxu0 0.0
    %1892 = vmatpush1.msra.mxu0 0.0
    %1893 = vmatprep.subr.mxu0 0.0
    %1894 = vmatpush1.msra.mxu0 0.0
    %1895 = vmatprep.subr.mxu0 0.0
    %1896 = vmatpush1.msra.mxu0 0.0
    %1897 = vmatprep.subr.mxu0 0.0
    %1898 = vmatpush1.msra.mxu0 0.0
    %1899 = vmatprep.subr.mxu0 0.0
    %1900 = vmatpush1.msra.mxu0 0.0
    %1901 = vmatprep.subr.mxu0 0.0
    %1902 = vmatpush1.msra.mxu0 0.0
    %1903 = vmatprep.subr.mxu0 0.0
    %1904 = vmatpush1.msra.mxu0 0.0
    %1905 = vmatprep.subr.mxu0 0.0
    %1906 = vmatpush1.msra.mxu0 0.0
    %1907 = vmatprep.subr.mxu0 0.0
    %1908 = vmatpush1.msra.mxu0 0.0
    %1909 = vmatprep.subr.mxu0 0.0
    %1910 = vmatpush1.msra.mxu0 0.0
    %1911 = vmatprep.subr.mxu0 0.0
    %1912 = vmatpush1.msra.mxu0 0.0
    %1913 = vmatprep.subr.mxu0 0.0
    %1914 = vmatpush1.msra.mxu0 0.0
    %1915 = vmatprep.mubr.f32.mxu0 0.0
    %1916 = vmatmul.mubr.f32.gmra.mrb[0].mxu0 %v1849
    %v1917 = vpop.f32.mrb[0].mxu0
    %v1918 = vadd.f32 0.0, %v1917
    %v1919 = vpop.f32.mrb[0].mxu0
    %1920 = vdwg.mxu0
    %v1921 = vadd.f32 %v1677, %v1918
    %1922 = vrot.lane.b32.xlu0 %v223, 104
    %v1923 = vpop.permute.xlu0 %1922
    %1924 = vrot.lane.b32.xlu0 %v223, 72
    %v1925 = vpop.permute.xlu0 %1924
    %v1926 = vsel %vm229, %v1923, 0
    %v1928 = vsel %vm229, %v1925, 0
    %1930 = vmatprep.subr.mxu0 0.0
    %1931 = vmatpush1.xpose.msra.mxu0 %v1928
    %1932 = vmatprep.subr.mxu0 0.0
    %1933 = vmatpush1.xpose.msra.mxu0 0.0
    %1934 = vmatprep.subr.mxu0 0.0
    %1935 = vmatpush1.xpose.msra.mxu0 0.0
    %1936 = vmatprep.subr.mxu0 0.0
    %1937 = vmatpush1.xpose.msra.mxu0 0.0
    %1938 = vmatprep.subr.mxu0 0.0
    %1939 = vmatpush1.xpose.msra.mxu0 0.0
    %1940 = vmatprep.subr.mxu0 0.0
    %1941 = vmatpush1.xpose.msra.mxu0 0.0
    %1942 = vmatprep.subr.mxu0 0.0
    %1943 = vmatpush1.xpose.msra.mxu0 0.0
    %1944 = vmatprep.subr.mxu0 0.0
    %1945 = vmatpush1.xpose.msra.mxu0 0.0
    %1946 = vmatprep.subr.mxu0 0.0
    %1947 = vmatpush1.xpose.msra.mxu0 0.0
    %1948 = vmatprep.subr.mxu0 0.0
    %1949 = vmatpush1.xpose.msra.mxu0 0.0
    %1950 = vmatprep.subr.mxu0 0.0
    %1951 = vmatpush1.xpose.msra.mxu0 0.0
    %1952 = vmatprep.subr.mxu0 0.0
    %1953 = vmatpush1.xpose.msra.mxu0 0.0
    %1954 = vmatprep.subr.mxu0 0.0
    %1955 = vmatpush1.xpose.msra.mxu0 0.0
    %1956 = vmatprep.subr.mxu0 0.0
    %1957 = vmatpush1.xpose.msra.mxu0 0.0
    %1958 = vmatprep.subr.mxu0 0.0
    %1959 = vmatpush1.xpose.msra.mxu0 0.0
    %1960 = vmatprep.subr.mxu0 0.0
    %1961 = vmatpush1.xpose.msra.mxu0 0.0
    %1962 = vmatprep.subr.mxu0 0.0
    %1963 = vmatpush1.xpose.msra.mxu0 0.0
    %1964 = vmatprep.subr.mxu0 0.0
    %1965 = vmatpush1.xpose.msra.mxu0 0.0
    %1966 = vmatprep.subr.mxu0 0.0
    %1967 = vmatpush1.xpose.msra.mxu0 0.0
    %1968 = vmatprep.subr.mxu0 0.0
    %1969 = vmatpush1.xpose.msra.mxu0 0.0
    %1970 = vmatprep.subr.mxu0 0.0
    %1971 = vmatpush1.xpose.msra.mxu0 0.0
    %1972 = vmatprep.subr.mxu0 0.0
    %1973 = vmatpush1.xpose.msra.mxu0 0.0
    %1974 = vmatprep.subr.mxu0 0.0
    %1975 = vmatpush1.xpose.msra.mxu0 0.0
    %1976 = vmatprep.subr.mxu0 0.0
    %1977 = vmatpush1.xpose.msra.mxu0 0.0
    %1978 = vmatprep.subr.mxu0 0.0
    %1979 = vmatpush1.xpose.msra.mxu0 0.0
    %1980 = vmatprep.subr.mxu0 0.0
    %1981 = vmatpush1.xpose.msra.mxu0 0.0
    %1982 = vmatprep.subr.mxu0 0.0
    %1983 = vmatpush1.xpose.msra.mxu0 0.0
    %1984 = vmatprep.subr.mxu0 0.0
    %1985 = vmatpush1.xpose.msra.mxu0 0.0
    %1986 = vmatprep.subr.mxu0 0.0
    %1987 = vmatpush1.xpose.msra.mxu0 0.0
    %1988 = vmatprep.subr.mxu0 0.0
    %1989 = vmatpush1.xpose.msra.mxu0 0.0
    %1990 = vmatprep.subr.mxu0 0.0
    %1991 = vmatpush1.xpose.msra.mxu0 0.0
    %1992 = vmatprep.subr.mxu0 0.0
    %1993 = vmatpush1.xpose.msra.mxu0 0.0
    %1994 = vmatprep.mubr.f32.mxu0 0.0
    %1995 = vmatmul.mubr.f32.gmra.mrb[0].mxu0 %v1926
    %v1996 = vpop.f32.mrb[0].mxu0
    %v1997 = vadd.f32 0.0, %v1996
    %v1998 = vpop.f32.mrb[0].mxu0
    %1999 = vdwg.mxu0
    %v2000 = vsel %vm229, %v1997, -inf
    %2001 = vmax.xlane.f32.xlu0 %v2000
    %v2002 = vpop.xlane.xlu0 %2001
    %v2003 = vsub.f32 %v1997, %v2002
    %v2004 = vmul.f32 %v2003, 1.442695
    %v2005 = vpow.pop %v2004
    %v2006 = vsel %vm229, %v2005, 0.0
    %2007 = vadd.xlane.f32.xlu0 %v2006
    %v2008 = vpop.xlane.xlu0 %2007
    %v2009 = vrcp.pop %v2008
    %v2010 = vmul.f32 %v2008, %v2009
    %v2011 = vsub.f32 2.0, %v2010
    %v2012 = vmul.f32 %v2009, %v2011
    %v2013 = vmul.f32 %v2005, %v2012
    %2014 = vrot.lane.b32.xlu0 %v223, 40
    %v2015 = vpop.permute.xlu0 %2014
    %v2018 = vsel %vm229, %v2013, 0
    %2020 = vmatprep.subr.mxu0 0.0
    %2021 = vmatpush1.msra.mxu0 %v2015
    %2022 = vmatprep.subr.mxu0 0.0
    %2023 = vmatpush1.msra.mxu0 0.0
    %2024 = vmatprep.subr.mxu0 0.0
    %2025 = vmatpush1.msra.mxu0 0.0
    %2026 = vmatprep.subr.mxu0 0.0
    %2027 = vmatpush1.msra.mxu0 0.0
    %2028 = vmatprep.subr.mxu0 0.0
    %2029 = vmatpush1.msra.mxu0 0.0
    %2030 = vmatprep.subr.mxu0 0.0
    %2031 = vmatpush1.msra.mxu0 0.0
    %2032 = vmatprep.subr.mxu0 0.0
    %2033 = vmatpush1.msra.mxu0 0.0
    %2034 = vmatprep.subr.mxu0 0.0
    %2035 = vmatpush1.msra.mxu0 0.0
    %2036 = vmatprep.subr.mxu0 0.0
    %2037 = vmatpush1.msra.mxu0 0.0
    %2038 = vmatprep.subr.mxu0 0.0
    %2039 = vmatpush1.msra.mxu0 0.0
    %2040 = vmatprep.subr.mxu0 0.0
    %2041 = vmatpush1.msra.mxu0 0.0
    %2042 = vmatprep.subr.mxu0 0.0
    %2043 = vmatpush1.msra.mxu0 0.0
    %2044 = vmatprep.subr.mxu0 0.0
    %2045 = vmatpush1.msra.mxu0 0.0
    %2046 = vmatprep.subr.mxu0 0.0
    %2047 = vmatpush1.msra.mxu0 0.0
    %2048 = vmatprep.subr.mxu0 0.0
    %2049 = vmatpush1.msra.mxu0 0.0
    %2050 = vmatprep.subr.mxu0 0.0
    %2051 = vmatpush1.msra.mxu0 0.0
    %2052 = vmatprep.subr.mxu0 0.0
    %2053 = vmatpush1.msra.mxu0 0.0
    %2054 = vmatprep.subr.mxu0 0.0
    %2055 = vmatpush1.msra.mxu0 0.0
    %2056 = vmatprep.subr.mxu0 0.0
    %2057 = vmatpush1.msra.mxu0 0.0
    %2058 = vmatprep.subr.mxu0 0.0
    %2059 = vmatpush1.msra.mxu0 0.0
    %2060 = vmatprep.subr.mxu0 0.0
    %2061 = vmatpush1.msra.mxu0 0.0
    %2062 = vmatprep.subr.mxu0 0.0
    %2063 = vmatpush1.msra.mxu0 0.0
    %2064 = vmatprep.subr.mxu0 0.0
    %2065 = vmatpush1.msra.mxu0 0.0
    %2066 = vmatprep.subr.mxu0 0.0
    %2067 = vmatpush1.msra.mxu0 0.0
    %2068 = vmatprep.subr.mxu0 0.0
    %2069 = vmatpush1.msra.mxu0 0.0
    %2070 = vmatprep.subr.mxu0 0.0
    %2071 = vmatpush1.msra.mxu0 0.0
    %2072 = vmatprep.subr.mxu0 0.0
    %2073 = vmatpush1.msra.mxu0 0.0
    %2074 = vmatprep.subr.mxu0 0.0
    %2075 = vmatpush1.msra.mxu0 0.0
    %2076 = vmatprep.subr.mxu0 0.0
    %2077 = vmatpush1.msra.mxu0 0.0
    %2078 = vmatprep.subr.mxu0 0.0
    %2079 = vmatpush1.msra.mxu0 0.0
    %2080 = vmatprep.subr.mxu0 0.0
    %2081 = vmatpush1.msra.mxu0 0.0
    %2082 = vmatprep.subr.mxu0 0.0
    %2083 = vmatpush1.msra.mxu0 0.0
    %2084 = vmatprep.mubr.f32.mxu0 0.0
    %2085 = vmatmul.mubr.f32.gmra.mrb[0].mxu0 %v2018
    %v2086 = vpop.f32.mrb[0].mxu0
    %v2087 = vadd.f32 0.0, %v2086
    %v2088 = vpop.f32.mrb[0].mxu0
    %2089 = vdwg.mxu0
    %v2091 = vsel %vm229, %v2087, 0
    %2093 = vmatprep.subr.mxu0 0.0
    %2094 = vmatpush1.msra.mxu0 %v1124
    %2095 = vmatprep.subr.mxu0 0.0
    %2096 = vmatpush1.msra.mxu0 0.0
    %2097 = vmatprep.subr.mxu0 0.0
    %2098 = vmatpush1.msra.mxu0 0.0
    %2099 = vmatprep.subr.mxu0 0.0
    %2100 = vmatpush1.msra.mxu0 0.0
    %2101 = vmatprep.subr.mxu0 0.0
    %2102 = vmatpush1.msra.mxu0 0.0
    %2103 = vmatprep.subr.mxu0 0.0
    %2104 = vmatpush1.msra.mxu0 0.0
    %2105 = vmatprep.subr.mxu0 0.0
    %2106 = vmatpush1.msra.mxu0 0.0
    %2107 = vmatprep.subr.mxu0 0.0
    %2108 = vmatpush1.msra.mxu0 0.0
    %2109 = vmatprep.subr.mxu0 0.0
    %2110 = vmatpush1.msra.mxu0 0.0
    %2111 = vmatprep.subr.mxu0 0.0
    %2112 = vmatpush1.msra.mxu0 0.0
    %2113 = vmatprep.subr.mxu0 0.0
    %2114 = vmatpush1.msra.mxu0 0.0
    %2115 = vmatprep.subr.mxu0 0.0
    %2116 = vmatpush1.msra.mxu0 0.0
    %2117 = vmatprep.subr.mxu0 0.0
    %2118 = vmatpush1.msra.mxu0 0.0
    %2119 = vmatprep.subr.mxu0 0.0
    %2120 = vmatpush1.msra.mxu0 0.0
    %2121 = vmatprep.subr.mxu0 0.0
    %2122 = vmatpush1.msra.mxu0 0.0
    %2123 = vmatprep.subr.mxu0 0.0
    %2124 = vmatpush1.msra.mxu0 0.0
    %2125 = vmatprep.subr.mxu0 0.0
    %2126 = vmatpush1.msra.mxu0 0.0
    %2127 = vmatprep.subr.mxu0 0.0
    %2128 = vmatpush1.msra.mxu0 0.0
    %2129 = vmatprep.subr.mxu0 0.0
    %2130 = vmatpush1.msra.mxu0 0.0
    %2131 = vmatprep.subr.mxu0 0.0
    %2132 = vmatpush1.msra.mxu0 0.0
    %2133 = vmatprep.subr.mxu0 0.0
    %2134 = vmatpush1.msra.mxu0 0.0
    %2135 = vmatprep.subr.mxu0 0.0
    %2136 = vmatpush1.msra.mxu0 0.0
    %2137 = vmatprep.subr.mxu0 0.0
    %2138 = vmatpush1.msra.mxu0 0.0
    %2139 = vmatprep.subr.mxu0 0.0
    %2140 = vmatpush1.msra.mxu0 0.0
    %2141 = vmatprep.subr.mxu0 0.0
    %2142 = vmatpush1.msra.mxu0 0.0
    %2143 = vmatprep.subr.mxu0 0.0
    %2144 = vmatpush1.msra.mxu0 0.0
    %2145 = vmatprep.subr.mxu0 0.0
    %2146 = vmatpush1.msra.mxu0 0.0
    %2147 = vmatprep.subr.mxu0 0.0
    %2148 = vmatpush1.msra.mxu0 0.0
    %2149 = vmatprep.subr.mxu0 0.0
    %2150 = vmatpush1.msra.mxu0 0.0
    %2151 = vmatprep.subr.mxu0 0.0
    %2152 = vmatpush1.msra.mxu0 0.0
    %2153 = vmatprep.subr.mxu0 0.0
    %2154 = vmatpush1.msra.mxu0 0.0
    %2155 = vmatprep.subr.mxu0 0.0
    %2156 = vmatpush1.msra.mxu0 0.0
    %2157 = vmatprep.mubr.f32.mxu0 0.0
    %2158 = vmatmul.mubr.f32.gmra.mrb[0].mxu0 %v2091
    %v2159 = vpop.f32.mrb[0].mxu0
    %v2160 = vadd.f32 0.0, %v2159
    %v2161 = vpop.f32.mrb[0].mxu0
    %2162 = vdwg.mxu0
    %v2163 = vadd.f32 %v1921, %v2160
    %v2164 = vadd.f32 %v65, %v1198
    %v2165 = vadd.f32 %v66, %v2163
    %v2166 = vld [vmem:[%s6] sm:$0x1]
    %v2168 = vlaneseq
    %v2169 = vshrl.u32 %v2168, 7
    %v2170 = vsub.s32 0, %v2169
    %v2171 = vrot.slane %v2166, %v2170
    %v2173 = vadd.f32 %v2164, %v2171
    %v2174 = vadd.f32 %v2165, %v2171
    %v2175 = vld [vmem:[%s7] sm:$0x1]
    %v2176 = vld [vmem:[%s8] sm:$0x1]
    %v2177 = vsel %vm69, %v2173, 0.0
    %2178 = vadd.xlane.f32.xlu0 %v2177
    %v2179 = vpop.xlane.xlu0 %2178
    %v2180 = vsel %vm69, %v2174, 0.0
    %2181 = vadd.xlane.f32.xlu0 %v2180
    %v2182 = vpop.xlane.xlu0 %2181
    %v2183 = vmul.f32 %v2179, %v76
    %v2184 = vmul.f32 %v2182, %v76
    %v2185 = vsub.f32 %v2173, %v2183
    %v2186 = vsub.f32 %v2174, %v2184
    %v2187 = vmul.f32 %v2185, %v2185
    %v2188 = vmul.f32 %v2186, %v2186
    %v2189 = vsel %vm69, %v2187, 0.0
    %2190 = vadd.xlane.f32.xlu0 %v2189
    %v2191 = vpop.xlane.xlu0 %2190
    %v2192 = vsel %vm69, %v2188, 0.0
    %2193 = vadd.xlane.f32.xlu0 %v2192
    %v2194 = vpop.xlane.xlu0 %2193
    %v2195 = vmul.f32 %v2191, %v89
    %v2196 = vmul.f32 %v2194, %v89
    %v2197 = vrsqrt.pop %v2195
    %v2198 = vmul.f32 %v2195, %v2197
    %vm2199 = vcmp.eq.f32.partialorder %v2195, inf
    %v2200 = vsel %vm2199, %v2195, %v2198
    %vm2201 = vcmp.eq.f32.partialorder %v2195, 0.0
    %v2202 = vand.u32 %v2195, 2147483648
    %v2203 = vsel %vm2201, %v2202, %v2200
    %v2204 = vrsqrt.pop %v2196
    %v2205 = vmul.f32 %v2196, %v2204
    %vm2206 = vcmp.eq.f32.partialorder %v2196, inf
    %v2207 = vsel %vm2206, %v2196, %v2205
    %vm2208 = vcmp.eq.f32.partialorder %v2196, 0.0
    %v2209 = vand.u32 %v2196, 2147483648
    %v2210 = vsel %vm2208, %v2209, %v2207
    %v2211 = vadd.f32 %v2203, 1e-06
    %v2212 = vadd.f32 %v2210, 1e-06
    %v2213 = vrcp.pop %v2211
    %v2214 = vrcp.pop %v2212
    %v2215 = vmul.f32 %v2211, %v2213
    %v2216 = vmul.f32 %v2212, %v2214
    %v2217 = vsub.f32 2.0, %v2215
    %v2218 = vsub.f32 2.0, %v2216
    %v2219 = vmul.f32 %v2213, %v2217
    %v2220 = vmul.f32 %v2214, %v2218
    %v2222 = vlaneseq
    %v2223 = vshrl.u32 %v2222, 7
    %v2224 = vsub.s32 0, %v2223
    %v2225 = vrot.slane %v2175, %v2224
    %v2227 = vmul.f32 %v2225, %v2185
    %v2228 = vmul.f32 %v2225, %v2186
    %v2229 = vmul.f32 %v2227, %v2219
    %v2230 = vmul.f32 %v2228, %v2220
    %v2232 = vlaneseq
    %v2233 = vshrl.u32 %v2232, 7
    %v2234 = vsub.s32 0, %v2233
    %v2235 = vrot.slane %v2176, %v2234
    %v2237 = vadd.f32 %v2229, %v2235
    %v2238 = vadd.f32 %v2230, %v2235
    %v2239 = vld [vmem:[%s9] sm:$0xff]
    %v2240 = vld [vmem:[%s9 + $0x8] sm:$0xff]
    %v2241 = vld [vmem:[%s9 + $0x10] sm:$0xff]
    %v2242 = vld [vmem:[%s9 + $0x18] sm:$0xff]
    %v2243 = vld [vmem:[%s10] sm:$0x1]
    %v2245 = vlaneseq
    %v2246 = vshrl.u32 %v2245, 7
    %v2247 = vsub.s32 0, %v2246
    %v2248 = vrot.slane %v2243, %v2247
    %v2251 = vsel %vm69, %v2237, 0
    %v2254 = vsel %vm69, %v2238, 0
    %2256 = vmatprep.subr.mxu0 0.0
    %2257 = vmatpush1.msra.mxu0 %v2239
    %2258 = vmatprep.subr.mxu0 0.0
    %2259 = vmatpush1.msra.mxu0 %v2240
    %2260 = vmatprep.subr.mxu0 0.0
    %2261 = vmatpush1.msra.mxu0 %v2241
    %2262 = vmatprep.subr.mxu0 0.0
    %2263 = vmatpush1.msra.mxu0 %v2242
    %2264 = vmatprep.subr.mxu0 0.0
    %2265 = vmatpush1.msra.mxu0 0.0
    %2266 = vmatprep.subr.mxu0 0.0
    %2267 = vmatpush1.msra.mxu0 0.0
    %2268 = vmatprep.subr.mxu0 0.0
    %2269 = vmatpush1.msra.mxu0 0.0
    %2270 = vmatprep.subr.mxu0 0.0
    %2271 = vmatpush1.msra.mxu0 0.0
    %2272 = vmatprep.subr.mxu0 0.0
    %2273 = vmatpush1.msra.mxu0 0.0
    %2274 = vmatprep.subr.mxu0 0.0
    %2275 = vmatpush1.msra.mxu0 0.0
    %2276 = vmatprep.subr.mxu0 0.0
    %2277 = vmatpush1.msra.mxu0 0.0
    %2278 = vmatprep.subr.mxu0 0.0
    %2279 = vmatpush1.msra.mxu0 0.0
    %2280 = vmatprep.subr.mxu0 0.0
    %2281 = vmatpush1.msra.mxu0 0.0
    %2282 = vmatprep.subr.mxu0 0.0
    %2283 = vmatpush1.msra.mxu0 0.0
    %2284 = vmatprep.subr.mxu0 0.0
    %2285 = vmatpush1.msra.mxu0 0.0
    %2286 = vmatprep.subr.mxu0 0.0
    %2287 = vmatpush1.msra.mxu0 0.0
    %2288 = vmatprep.subr.mxu0 0.0
    %2289 = vmatpush1.msra.mxu0 0.0
    %2290 = vmatprep.subr.mxu0 0.0
    %2291 = vmatpush1.msra.mxu0 0.0
    %2292 = vmatprep.subr.mxu0 0.0
    %2293 = vmatpush1.msra.mxu0 0.0
    %2294 = vmatprep.subr.mxu0 0.0
    %2295 = vmatpush1.msra.mxu0 0.0
    %2296 = vmatprep.subr.mxu0 0.0
    %2297 = vmatpush1.msra.mxu0 0.0
    %2298 = vmatprep.subr.mxu0 0.0
    %2299 = vmatpush1.msra.mxu0 0.0
    %2300 = vmatprep.subr.mxu0 0.0
    %2301 = vmatpush1.msra.mxu0 0.0
    %2302 = vmatprep.subr.mxu0 0.0
    %2303 = vmatpush1.msra.mxu0 0.0
    %2304 = vmatprep.subr.mxu0 0.0
    %2305 = vmatpush1.msra.mxu0 0.0
    %2306 = vmatprep.subr.mxu0 0.0
    %2307 = vmatpush1.msra.mxu0 0.0
    %2308 = vmatprep.subr.mxu0 0.0
    %2309 = vmatpush1.msra.mxu0 0.0
    %2310 = vmatprep.subr.mxu0 0.0
    %2311 = vmatpush1.msra.mxu0 0.0
    %2312 = vmatprep.subr.mxu0 0.0
    %2313 = vmatpush1.msra.mxu0 0.0
    %2314 = vmatprep.subr.mxu0 0.0
    %2315 = vmatpush1.msra.mxu0 0.0
    %2316 = vmatprep.subr.mxu0 0.0
    %2317 = vmatpush1.msra.mxu0 0.0
    %2318 = vmatprep.subr.mxu0 0.0
    %2319 = vmatpush1.msra.mxu0 0.0
    %2320 = vmatprep.mubr.f32.mxu0 0.0
    %2321 = vmatmul.mubr.f32.gmra.mrb[0].mxu0 %v2251
    %v2322 = vpop.f32.mrb[0].mxu0
    %v2323 = vadd.f32 %v2248, %v2322
    %v2324 = vpop.f32.mrb[0].mxu0
    %2325 = vmatprep.mubr.f32.mxu0 0.0
    %2326 = vmatmul.mubr.f32.gmra.mrb[0].mxu0 %v2254
    %v2327 = vpop.f32.mrb[0].mxu0
    %v2328 = vadd.f32 %v2248, %v2327
    %v2329 = vpop.f32.mrb[0].mxu0
    %2330 = vdwg.mxu0
    %v2331 = vmax.f32 %v2323, 0.0
    %v2332 = vmax.f32 %v2328, 0.0
    %v2333 = vld [vmem:[%s11] sm:$0xff]
    %v2334 = vld [vmem:[%s11 + $0x8] sm:$0xff]
    %v2335 = vld [vmem:[%s11 + $0x10] sm:$0xff]
    %v2336 = vld [vmem:[%s11 + $0x18] sm:$0xff]
    %v2337 = vld [vmem:[%s11 + $0x20] sm:$0xff]
    %v2338 = vld [vmem:[%s11 + $0x28] sm:$0xff]
    %v2339 = vld [vmem:[%s11 + $0x30] sm:$0xff]
    %v2340 = vld [vmem:[%s11 + $0x38] sm:$0xff]
    %vm2341 = vcmask 523264
    %v2343 = vsel %vm2341, %v2331, 0
    %v2346 = vsel %vm2341, %v2332, 0
    %2348 = vmatprep.subr.mxu0 0.0
    %2349 = vmatpush1.msra.mxu0 %v2333
    %2350 = vmatprep.subr.mxu0 0.0
    %2351 = vmatpush1.msra.mxu0 %v2334
    %2352 = vmatprep.subr.mxu0 0.0
    %2353 = vmatpush1.msra.mxu0 %v2335
    %2354 = vmatprep.subr.mxu0 0.0
    %2355 = vmatpush1.msra.mxu0 %v2336
    %2356 = vmatprep.subr.mxu0 0.0
    %2357 = vmatpush1.msra.mxu0 %v2337
    %2358 = vmatprep.subr.mxu0 0.0
    %2359 = vmatpush1.msra.mxu0 %v2338
    %2360 = vmatprep.subr.mxu0 0.0
    %2361 = vmatpush1.msra.mxu0 %v2339
    %2362 = vmatprep.subr.mxu0 0.0
    %2363 = vmatpush1.msra.mxu0 %v2340
    %2364 = vmatprep.subr.mxu0 0.0
    %2365 = vmatpush1.msra.mxu0 0.0
    %2366 = vmatprep.subr.mxu0 0.0
    %2367 = vmatpush1.msra.mxu0 0.0
    %2368 = vmatprep.subr.mxu0 0.0
    %2369 = vmatpush1.msra.mxu0 0.0
    %2370 = vmatprep.subr.mxu0 0.0
    %2371 = vmatpush1.msra.mxu0 0.0
    %2372 = vmatprep.subr.mxu0 0.0
    %2373 = vmatpush1.msra.mxu0 0.0
    %2374 = vmatprep.subr.mxu0 0.0
    %2375 = vmatpush1.msra.mxu0 0.0
    %2376 = vmatprep.subr.mxu0 0.0
    %2377 = vmatpush1.msra.mxu0 0.0
    %2378 = vmatprep.subr.mxu0 0.0
    %2379 = vmatpush1.msra.mxu0 0.0
    %2380 = vmatprep.subr.mxu0 0.0
    %2381 = vmatpush1.msra.mxu0 0.0
    %2382 = vmatprep.subr.mxu0 0.0
    %2383 = vmatpush1.msra.mxu0 0.0
    %2384 = vmatprep.subr.mxu0 0.0
    %2385 = vmatpush1.msra.mxu0 0.0
    %2386 = vmatprep.subr.mxu0 0.0
    %2387 = vmatpush1.msra.mxu0 0.0
    %2388 = vmatprep.subr.mxu0 0.0
    %2389 = vmatpush1.msra.mxu0 0.0
    %2390 = vmatprep.subr.mxu0 0.0
    %2391 = vmatpush1.msra.mxu0 0.0
    %2392 = vmatprep.subr.mxu0 0.0
    %2393 = vmatpush1.msra.mxu0 0.0
    %2394 = vmatprep.subr.mxu0 0.0
    %2395 = vmatpush1.msra.mxu0 0.0
    %2396 = vmatprep.subr.mxu0 0.0
    %2397 = vmatpush1.msra.mxu0 0.0
    %2398 = vmatprep.subr.mxu0 0.0
    %2399 = vmatpush1.msra.mxu0 0.0
    %2400 = vmatprep.subr.mxu0 0.0
    %2401 = vmatpush1.msra.mxu0 0.0
    %2402 = vmatprep.subr.mxu0 0.0
    %2403 = vmatpush1.msra.mxu0 0.0
    %2404 = vmatprep.subr.mxu0 0.0
    %2405 = vmatpush1.msra.mxu0 0.0
    %2406 = vmatprep.subr.mxu0 0.0
    %2407 = vmatpush1.msra.mxu0 0.0
    %2408 = vmatprep.subr.mxu0 0.0
    %2409 = vmatpush1.msra.mxu0 0.0
    %2410 = vmatprep.subr.mxu0 0.0
    %2411 = vmatpush1.msra.mxu0 0.0
    %2412 = vmatprep.mubr.f32.mxu0 0.0
    %2413 = vmatmul.mubr.f32.gmra.mrb[0].mxu0 %v2343
    %v2414 = vpop.f32.mrb[0].mxu0
    %v2415 = vadd.f32 0.0, %v2414
    %v2416 = vpop.f32.mrb[0].mxu0
    %2417 = vmatprep.mubr.f32.mxu0 0.0
    %2418 = vmatmul.mubr.f32.gmra.mrb[0].mxu0 %v2346
    %v2419 = vpop.f32.mrb[0].mxu0
    %v2420 = vadd.f32 0.0, %v2419
    %v2421 = vpop.f32.mrb[0].mxu0
    %2422 = vdwg.mxu0
    %v2423 = vadd.f32 %v2173, %v2415
    %v2424 = vadd.f32 %v2174, %v2420
    %v2425 = vld [vmem:[%s12] sm:$0x1]
    %v2427 = vlaneseq
    %v2428 = vshrl.u32 %v2427, 7
    %v2429 = vsub.s32 0, %v2428
    %v2430 = vrot.slane %v2425, %v2429
    %v2432 = vadd.f32 %v2423, %v2430
    %v2433 = vadd.f32 %v2424, %v2430
    %s2434 = scalar_lea.vmem %s1, 1
    %v2435 = vld [vmem:[%s2434] sm:$0x1]
    %s2436 = scalar_lea.vmem %s2, 1
    %v2437 = vld [vmem:[%s2436] sm:$0x1]
    %v2438 = vsel %vm69, %v2432, 0.0
    %2439 = vadd.xlane.f32.xlu0 %v2438
    %v2440 = vpop.xlane.xlu0 %2439
    %v2441 = vsel %vm69, %v2433, 0.0
    %2442 = vadd.xlane.f32.xlu0 %v2441
    %v2443 = vpop.xlane.xlu0 %2442
    %v2444 = vmul.f32 %v2440, %v76
    %v2445 = vmul.f32 %v2443, %v76
    %v2446 = vsub.f32 %v2432, %v2444
    %v2447 = vsub.f32 %v2433, %v2445
    %v2448 = vmul.f32 %v2446, %v2446
    %v2449 = vmul.f32 %v2447, %v2447
    %v2450 = vsel %vm69, %v2448, 0.0
    %2451 = vadd.xlane.f32.xlu0 %v2450
    %v2452 = vpop.xlane.xlu0 %2451
    %v2453 = vsel %vm69, %v2449, 0.0
    %2454 = vadd.xlane.f32.xlu0 %v2453
    %v2455 = vpop.xlane.xlu0 %2454
    %v2456 = vmul.f32 %v2452, %v89
    %v2457 = vmul.f32 %v2455, %v89
    %v2458 = vrsqrt.pop %v2456
    %v2459 = vmul.f32 %v2456, %v2458
    %vm2460 = vcmp.eq.f32.partialorder %v2456, inf
    %v2461 = vsel %vm2460, %v2456, %v2459
    %vm2462 = vcmp.eq.f32.partialorder %v2456, 0.0
    %v2463 = vand.u32 %v2456, 2147483648
    %v2464 = vsel %vm2462, %v2463, %v2461
    %v2465 = vrsqrt.pop %v2457
    %v2466 = vmul.f32 %v2457, %v2465
    %vm2467 = vcmp.eq.f32.partialorder %v2457, inf
    %v2468 = vsel %vm2467, %v2457, %v2466
    %vm2469 = vcmp.eq.f32.partialorder %v2457, 0.0
    %v2470 = vand.u32 %v2457, 2147483648
    %v2471 = vsel %vm2469, %v2470, %v2468
    %v2472 = vadd.f32 %v2464, 1e-06
    %v2473 = vadd.f32 %v2471, 1e-06
    %v2474 = vrcp.pop %v2472
    %v2475 = vrcp.pop %v2473
    %v2476 = vmul.f32 %v2472, %v2474
    %v2477 = vmul.f32 %v2473, %v2475
    %v2478 = vsub.f32 2.0, %v2476
    %v2479 = vsub.f32 2.0, %v2477
    %v2480 = vmul.f32 %v2474, %v2478
    %v2481 = vmul.f32 %v2475, %v2479
    %v2483 = vlaneseq
    %v2484 = vshrl.u32 %v2483, 7
    %v2485 = vsub.s32 0, %v2484
    %v2486 = vrot.slane %v2435, %v2485
    %v2488 = vmul.f32 %v2486, %v2446
    %v2489 = vmul.f32 %v2486, %v2447
    %v2490 = vmul.f32 %v2488, %v2480
    %v2491 = vmul.f32 %v2489, %v2481
    %v2493 = vlaneseq
    %v2494 = vshrl.u32 %v2493, 7
    %v2495 = vsub.s32 0, %v2494
    %v2496 = vrot.slane %v2437, %v2495
    %v2498 = vadd.f32 %v2490, %v2496
    %v2499 = vadd.f32 %v2491, %v2496
    %s2500 = scalar_lea.vmem %s3, 32
    %v2501 = vld [vmem:[%s2500] sm:$0xff]
    %v2502 = vld [vmem:[%s2500 + $0x8] sm:$0xff]
    %v2503 = vld [vmem:[%s2500 + $0x10] sm:$0xff]
    %v2504 = vld [vmem:[%s2500 + $0x18] sm:$0xff]
    %s2505 = scalar_lea.vmem %s4, 1
    %v2506 = vld [vmem:[%s2505] sm:$0x1]
    %v2508 = vlaneseq
    %v2509 = vshrl.u32 %v2508, 7
    %v2510 = vsub.s32 0, %v2509
    %v2511 = vrot.slane %v2506, %v2510
    %v2514 = vsel %vm69, %v2498, 0
    %v2517 = vsel %vm69, %v2499, 0
    %2519 = vmatprep.subr.mxu0 0.0
    %2520 = vmatpush1.msra.mxu0 %v2501
    %2521 = vmatprep.subr.mxu0 0.0
    %2522 = vmatpush1.msra.mxu0 %v2502
    %2523 = vmatprep.subr.mxu0 0.0
    %2524 = vmatpush1.msra.mxu0 %v2503
    %2525 = vmatprep.subr.mxu0 0.0
    %2526 = vmatpush1.msra.mxu0 %v2504
    %2527 = vmatprep.subr.mxu0 0.0
    %2528 = vmatpush1.msra.mxu0 0.0
    %2529 = vmatprep.subr.mxu0 0.0
    %2530 = vmatpush1.msra.mxu0 0.0
    %2531 = vmatprep.subr.mxu0 0.0
    %2532 = vmatpush1.msra.mxu0 0.0
    %2533 = vmatprep.subr.mxu0 0.0
    %2534 = vmatpush1.msra.mxu0 0.0
    %2535 = vmatprep.subr.mxu0 0.0
    %2536 = vmatpush1.msra.mxu0 0.0
    %2537 = vmatprep.subr.mxu0 0.0
    %2538 = vmatpush1.msra.mxu0 0.0
    %2539 = vmatprep.subr.mxu0 0.0
    %2540 = vmatpush1.msra.mxu0 0.0
    %2541 = vmatprep.subr.mxu0 0.0
    %2542 = vmatpush1.msra.mxu0 0.0
    %2543 = vmatprep.subr.mxu0 0.0
    %2544 = vmatpush1.msra.mxu0 0.0
    %2545 = vmatprep.subr.mxu0 0.0
    %2546 = vmatpush1.msra.mxu0 0.0
    %2547 = vmatprep.subr.mxu0 0.0
    %2548 = vmatpush1.msra.mxu0 0.0
    %2549 = vmatprep.subr.mxu0 0.0
    %2550 = vmatpush1.msra.mxu0 0.0
    %2551 = vmatprep.subr.mxu0 0.0
    %2552 = vmatpush1.msra.mxu0 0.0
    %2553 = vmatprep.subr.mxu0 0.0
    %2554 = vmatpush1.msra.mxu0 0.0
    %2555 = vmatprep.subr.mxu0 0.0
    %2556 = vmatpush1.msra.mxu0 0.0
    %2557 = vmatprep.subr.mxu0 0.0
    %2558 = vmatpush1.msra.mxu0 0.0
    %2559 = vmatprep.subr.mxu0 0.0
    %2560 = vmatpush1.msra.mxu0 0.0
    %2561 = vmatprep.subr.mxu0 0.0
    %2562 = vmatpush1.msra.mxu0 0.0
    %2563 = vmatprep.subr.mxu0 0.0
    %2564 = vmatpush1.msra.mxu0 0.0
    %2565 = vmatprep.subr.mxu0 0.0
    %2566 = vmatpush1.msra.mxu0 0.0
    %2567 = vmatprep.subr.mxu0 0.0
    %2568 = vmatpush1.msra.mxu0 0.0
    %2569 = vmatprep.subr.mxu0 0.0
    %2570 = vmatpush1.msra.mxu0 0.0
    %2571 = vmatprep.subr.mxu0 0.0
    %2572 = vmatpush1.msra.mxu0 0.0
    %2573 = vmatprep.subr.mxu0 0.0
    %2574 = vmatpush1.msra.mxu0 0.0
    %2575 = vmatprep.subr.mxu0 0.0
    %2576 = vmatpush1.msra.mxu0 0.0
    %2577 = vmatprep.subr.mxu0 0.0
    %2578 = vmatpush1.msra.mxu0 0.0
    %2579 = vmatprep.subr.mxu0 0.0
    %2580 = vmatpush1.msra.mxu0 0.0
    %2581 = vmatprep.subr.mxu0 0.0
    %2582 = vmatpush1.msra.mxu0 0.0
    %2583 = vmatprep.mubr.f32.mxu0 0.0
    %2584 = vmatmul.mubr.f32.gmra.mrb[0].mxu0 %v2514
    %v2585 = vpop.f32.mrb[0].mxu0
    %v2586 = vadd.f32 %v2511, %v2585
    %v2587 = vpop.f32.mrb[0].mxu0
    %2588 = vmatprep.mubr.f32.mxu0 0.0
    %2589 = vmatmul.mubr.f32.gmra.mrb[0].mxu0 %v2517
    %v2590 = vpop.f32.mrb[0].mxu0
    %v2591 = vadd.f32 %v2511, %v2590
    %v2592 = vpop.f32.mrb[0].mxu0
    %2593 = vdwg.mxu0
    %2595 = vrot.lane.b32.xlu0 %v2586, 96
    %v2596 = vpop.permute.xlu0 %2595
    %v2597 = vsel %vm229, %v2586, 0
    %v2599 = vsel %vm229, %v2596, 0
    %2601 = vmatprep.subr.mxu0 0.0
    %2602 = vmatpush1.xpose.msra.mxu0 %v2599
    %2603 = vmatprep.subr.mxu0 0.0
    %2604 = vmatpush1.xpose.msra.mxu0 0.0
    %2605 = vmatprep.subr.mxu0 0.0
    %2606 = vmatpush1.xpose.msra.mxu0 0.0
    %2607 = vmatprep.subr.mxu0 0.0
    %2608 = vmatpush1.xpose.msra.mxu0 0.0
    %2609 = vmatprep.subr.mxu0 0.0
    %2610 = vmatpush1.xpose.msra.mxu0 0.0
    %2611 = vmatprep.subr.mxu0 0.0
    %2612 = vmatpush1.xpose.msra.mxu0 0.0
    %2613 = vmatprep.subr.mxu0 0.0
    %2614 = vmatpush1.xpose.msra.mxu0 0.0
    %2615 = vmatprep.subr.mxu0 0.0
    %2616 = vmatpush1.xpose.msra.mxu0 0.0
    %2617 = vmatprep.subr.mxu0 0.0
    %2618 = vmatpush1.xpose.msra.mxu0 0.0
    %2619 = vmatprep.subr.mxu0 0.0
    %2620 = vmatpush1.xpose.msra.mxu0 0.0
    %2621 = vmatprep.subr.mxu0 0.0
    %2622 = vmatpush1.xpose.msra.mxu0 0.0
    %2623 = vmatprep.subr.mxu0 0.0
    %2624 = vmatpush1.xpose.msra.mxu0 0.0
    %2625 = vmatprep.subr.mxu0 0.0
    %2626 = vmatpush1.xpose.msra.mxu0 0.0
    %2627 = vmatprep.subr.mxu0 0.0
    %2628 = vmatpush1.xpose.msra.mxu0 0.0
    %2629 = vmatprep.subr.mxu0 0.0
    %2630 = vmatpush1.xpose.msra.mxu0 0.0
    %2631 = vmatprep.subr.mxu0 0.0
    %2632 = vmatpush1.xpose.msra.mxu0 0.0
    %2633 = vmatprep.subr.mxu0 0.0
    %2634 = vmatpush1.xpose.msra.mxu0 0.0
    %2635 = vmatprep.subr.mxu0 0.0
    %2636 = vmatpush1.xpose.msra.mxu0 0.0
    %2637 = vmatprep.subr.mxu0 0.0
    %2638 = vmatpush1.xpose.msra.mxu0 0.0
    %2639 = vmatprep.subr.mxu0 0.0
    %2640 = vmatpush1.xpose.msra.mxu0 0.0
    %2641 = vmatprep.subr.mxu0 0.0
    %2642 = vmatpush1.xpose.msra.mxu0 0.0
    %2643 = vmatprep.subr.mxu0 0.0
    %2644 = vmatpush1.xpose.msra.mxu0 0.0
    %2645 = vmatprep.subr.mxu0 0.0
    %2646 = vmatpush1.xpose.msra.mxu0 0.0
    %2647 = vmatprep.subr.mxu0 0.0
    %2648 = vmatpush1.xpose.msra.mxu0 0.0
    %2649 = vmatprep.subr.mxu0 0.0
    %2650 = vmatpush1.xpose.msra.mxu0 0.0
    %2651 = vmatprep.subr.mxu0 0.0
    %2652 = vmatpush1.xpose.msra.mxu0 0.0
    %2653 = vmatprep.subr.mxu0 0.0
    %2654 = vmatpush1.xpose.msra.mxu0 0.0
    %2655 = vmatprep.subr.mxu0 0.0
    %2656 = vmatpush1.xpose.msra.mxu0 0.0
    %2657 = vmatprep.subr.mxu0 0.0
    %2658 = vmatpush1.xpose.msra.mxu0 0.0
    %2659 = vmatprep.subr.mxu0 0.0
    %2660 = vmatpush1.xpose.msra.mxu0 0.0
    %2661 = vmatprep.subr.mxu0 0.0
    %2662 = vmatpush1.xpose.msra.mxu0 0.0
    %2663 = vmatprep.subr.mxu0 0.0
    %2664 = vmatpush1.xpose.msra.mxu0 0.0
    %2665 = vmatprep.mubr.f32.mxu0 0.0
    %2666 = vmatmul.mubr.f32.gmra.mrb[0].mxu0 %v2597
    %v2667 = vpop.f32.mrb[0].mxu0
    %v2668 = vadd.f32 0.0, %v2667
    %v2669 = vpop.f32.mrb[0].mxu0
    %2670 = vdwg.mxu0
    %v2671 = vsel %vm229, %v2668, -inf
    %2672 = vmax.xlane.f32.xlu0 %v2671
    %v2673 = vpop.xlane.xlu0 %2672
    %v2674 = vsub.f32 %v2668, %v2673
    %v2675 = vmul.f32 %v2674, 1.442695
    %v2676 = vpow.pop %v2675
    %v2677 = vsel %vm229, %v2676, 0.0
    %2678 = vadd.xlane.f32.xlu0 %v2677
    %v2679 = vpop.xlane.xlu0 %2678
    %v2680 = vrcp.pop %v2679
    %v2681 = vmul.f32 %v2679, %v2680
    %v2682 = vsub.f32 2.0, %v2681
    %v2683 = vmul.f32 %v2680, %v2682
    %v2684 = vmul.f32 %v2676, %v2683
    %2685 = vrot.lane.b32.xlu0 %v2586, 64
    %v2686 = vpop.permute.xlu0 %2685
    %v2689 = vsel %vm229, %v2684, 0
    %2691 = vmatprep.subr.mxu0 0.0
    %2692 = vmatpush1.msra.mxu0 %v2686
    %2693 = vmatprep.subr.mxu0 0.0
    %2694 = vmatpush1.msra.mxu0 0.0
    %2695 = vmatprep.subr.mxu0 0.0
    %2696 = vmatpush1.msra.mxu0 0.0
    %2697 = vmatprep.subr.mxu0 0.0
    %2698 = vmatpush1.msra.mxu0 0.0
    %2699 = vmatprep.subr.mxu0 0.0
    %2700 = vmatpush1.msra.mxu0 0.0
    %2701 = vmatprep.subr.mxu0 0.0
    %2702 = vmatpush1.msra.mxu0 0.0
    %2703 = vmatprep.subr.mxu0 0.0
    %2704 = vmatpush1.msra.mxu0 0.0
    %2705 = vmatprep.subr.mxu0 0.0
    %2706 = vmatpush1.msra.mxu0 0.0
    %2707 = vmatprep.subr.mxu0 0.0
    %2708 = vmatpush1.msra.mxu0 0.0
    %2709 = vmatprep.subr.mxu0 0.0
    %2710 = vmatpush1.msra.mxu0 0.0
    %2711 = vmatprep.subr.mxu0 0.0
    %2712 = vmatpush1.msra.mxu0 0.0
    %2713 = vmatprep.subr.mxu0 0.0
    %2714 = vmatpush1.msra.mxu0 0.0
    %2715 = vmatprep.subr.mxu0 0.0
    %2716 = vmatpush1.msra.mxu0 0.0
    %2717 = vmatprep.subr.mxu0 0.0
    %2718 = vmatpush1.msra.mxu0 0.0
    %2719 = vmatprep.subr.mxu0 0.0
    %2720 = vmatpush1.msra.mxu0 0.0
    %2721 = vmatprep.subr.mxu0 0.0
    %2722 = vmatpush1.msra.mxu0 0.0
    %2723 = vmatprep.subr.mxu0 0.0
    %2724 = vmatpush1.msra.mxu0 0.0
    %2725 = vmatprep.subr.mxu0 0.0
    %2726 = vmatpush1.msra.mxu0 0.0
    %2727 = vmatprep.subr.mxu0 0.0
    %2728 = vmatpush1.msra.mxu0 0.0
    %2729 = vmatprep.subr.mxu0 0.0
    %2730 = vmatpush1.msra.mxu0 0.0
    %2731 = vmatprep.subr.mxu0 0.0
    %2732 = vmatpush1.msra.mxu0 0.0
    %2733 = vmatprep.subr.mxu0 0.0
    %2734 = vmatpush1.msra.mxu0 0.0
    %2735 = vmatprep.subr.mxu0 0.0
    %2736 = vmatpush1.msra.mxu0 0.0
    %2737 = vmatprep.subr.mxu0 0.0
    %2738 = vmatpush1.msra.mxu0 0.0
    %2739 = vmatprep.subr.mxu0 0.0
    %2740 = vmatpush1.msra.mxu0 0.0
    %2741 = vmatprep.subr.mxu0 0.0
    %2742 = vmatpush1.msra.mxu0 0.0
    %2743 = vmatprep.subr.mxu0 0.0
    %2744 = vmatpush1.msra.mxu0 0.0
    %2745 = vmatprep.subr.mxu0 0.0
    %2746 = vmatpush1.msra.mxu0 0.0
    %2747 = vmatprep.subr.mxu0 0.0
    %2748 = vmatpush1.msra.mxu0 0.0
    %2749 = vmatprep.subr.mxu0 0.0
    %2750 = vmatpush1.msra.mxu0 0.0
    %2751 = vmatprep.subr.mxu0 0.0
    %2752 = vmatpush1.msra.mxu0 0.0
    %2753 = vmatprep.subr.mxu0 0.0
    %2754 = vmatpush1.msra.mxu0 0.0
    %2755 = vmatprep.mubr.f32.mxu0 0.0
    %2756 = vmatmul.mubr.f32.gmra.mrb[0].mxu0 %v2689
    %v2757 = vpop.f32.mrb[0].mxu0
    %v2758 = vadd.f32 0.0, %v2757
    %v2759 = vpop.f32.mrb[0].mxu0
    %2760 = vdwg.mxu0
    %s2761 = scalar_lea.vmem %s5, 32
    %v2762 = vld [vmem:[%s2761] sm:$0xff]
    %2763 = vrot.lane.b32.xlu0 %v2586, 120
    %v2764 = vpop.permute.xlu0 %2763
    %2765 = vrot.lane.b32.xlu0 %v2586, 88
    %v2766 = vpop.permute.xlu0 %2765
    %v2767 = vsel %vm229, %v2764, 0
    %v2769 = vsel %vm229, %v2766, 0
    %2771 = vmatprep.subr.mxu0 0.0
    %2772 = vmatpush1.xpose.msra.mxu0 %v2769
    %2773 = vmatprep.subr.mxu0 0.0
    %2774 = vmatpush1.xpose.msra.mxu0 0.0
    %2775 = vmatprep.subr.mxu0 0.0
    %2776 = vmatpush1.xpose.msra.mxu0 0.0
    %2777 = vmatprep.subr.mxu0 0.0
    %2778 = vmatpush1.xpose.msra.mxu0 0.0
    %2779 = vmatprep.subr.mxu0 0.0
    %2780 = vmatpush1.xpose.msra.mxu0 0.0
    %2781 = vmatprep.subr.mxu0 0.0
    %2782 = vmatpush1.xpose.msra.mxu0 0.0
    %2783 = vmatprep.subr.mxu0 0.0
    %2784 = vmatpush1.xpose.msra.mxu0 0.0
    %2785 = vmatprep.subr.mxu0 0.0
    %2786 = vmatpush1.xpose.msra.mxu0 0.0
    %2787 = vmatprep.subr.mxu0 0.0
    %2788 = vmatpush1.xpose.msra.mxu0 0.0
    %2789 = vmatprep.subr.mxu0 0.0
    %2790 = vmatpush1.xpose.msra.mxu0 0.0
    %2791 = vmatprep.subr.mxu0 0.0
    %2792 = vmatpush1.xpose.msra.mxu0 0.0
    %2793 = vmatprep.subr.mxu0 0.0
    %2794 = vmatpush1.xpose.msra.mxu0 0.0
    %2795 = vmatprep.subr.mxu0 0.0
    %2796 = vmatpush1.xpose.msra.mxu0 0.0
    %2797 = vmatprep.subr.mxu0 0.0
    %2798 = vmatpush1.xpose.msra.mxu0 0.0
    %2799 = vmatprep.subr.mxu0 0.0
    %2800 = vmatpush1.xpose.msra.mxu0 0.0
    %2801 = vmatprep.subr.mxu0 0.0
    %2802 = vmatpush1.xpose.msra.mxu0 0.0
    %2803 = vmatprep.subr.mxu0 0.0
    %2804 = vmatpush1.xpose.msra.mxu0 0.0
    %2805 = vmatprep.subr.mxu0 0.0
    %2806 = vmatpush1.xpose.msra.mxu0 0.0
    %2807 = vmatprep.subr.mxu0 0.0
    %2808 = vmatpush1.xpose.msra.mxu0 0.0
    %2809 = vmatprep.subr.mxu0 0.0
    %2810 = vmatpush1.xpose.msra.mxu0 0.0
    %2811 = vmatprep.subr.mxu0 0.0
    %2812 = vmatpush1.xpose.msra.mxu0 0.0
    %2813 = vmatprep.subr.mxu0 0.0
    %2814 = vmatpush1.xpose.msra.mxu0 0.0
    %2815 = vmatprep.subr.mxu0 0.0
    %2816 = vmatpush1.xpose.msra.mxu0 0.0
    %2817 = vmatprep.subr.mxu0 0.0
    %2818 = vmatpush1.xpose.msra.mxu0 0.0
    %2819 = vmatprep.subr.mxu0 0.0
    %2820 = vmatpush1.xpose.msra.mxu0 0.0
    %2821 = vmatprep.subr.mxu0 0.0
    %2822 = vmatpush1.xpose.msra.mxu0 0.0
    %2823 = vmatprep.subr.mxu0 0.0
    %2824 = vmatpush1.xpose.msra.mxu0 0.0
    %2825 = vmatprep.subr.mxu0 0.0
    %2826 = vmatpush1.xpose.msra.mxu0 0.0
    %2827 = vmatprep.subr.mxu0 0.0
    %2828 = vmatpush1.xpose.msra.mxu0 0.0
    %2829 = vmatprep.subr.mxu0 0.0
    %2830 = vmatpush1.xpose.msra.mxu0 0.0
    %2831 = vmatprep.subr.mxu0 0.0
    %2832 = vmatpush1.xpose.msra.mxu0 0.0
    %2833 = vmatprep.subr.mxu0 0.0
    %2834 = vmatpush1.xpose.msra.mxu0 0.0
    %2835 = vmatprep.mubr.f32.mxu0 0.0
    %2836 = vmatmul.mubr.f32.gmra.mrb[0].mxu0 %v2767
    %v2837 = vpop.f32.mrb[0].mxu0
    %v2838 = vadd.f32 0.0, %v2837
    %v2839 = vpop.f32.mrb[0].mxu0
    %2840 = vdwg.mxu0
    %v2841 = vsel %vm229, %v2838, -inf
    %2842 = vmax.xlane.f32.xlu0 %v2841
    %v2843 = vpop.xlane.xlu0 %2842
    %v2844 = vsub.f32 %v2838, %v2843
    %v2845 = vmul.f32 %v2844, 1.442695
    %v2846 = vpow.pop %v2845
    %v2847 = vsel %vm229, %v2846, 0.0
    %2848 = vadd.xlane.f32.xlu0 %v2847
    %v2849 = vpop.xlane.xlu0 %2848
    %v2850 = vrcp.pop %v2849
    %v2851 = vmul.f32 %v2849, %v2850
    %v2852 = vsub.f32 2.0, %v2851
    %v2853 = vmul.f32 %v2850, %v2852
    %v2854 = vmul.f32 %v2846, %v2853
    %2855 = vrot.lane.b32.xlu0 %v2586, 56
    %v2856 = vpop.permute.xlu0 %2855
    %v2859 = vsel %vm229, %v2854, 0
    %2861 = vmatprep.subr.mxu0 0.0
    %2862 = vmatpush1.msra.mxu0 %v2856
    %2863 = vmatprep.subr.mxu0 0.0
    %2864 = vmatpush1.msra.mxu0 0.0
    %2865 = vmatprep.subr.mxu0 0.0
    %2866 = vmatpush1.msra.mxu0 0.0
    %2867 = vmatprep.subr.mxu0 0.0
    %2868 = vmatpush1.msra.mxu0 0.0
    %2869 = vmatprep.subr.mxu0 0.0
    %2870 = vmatpush1.msra.mxu0 0.0
    %2871 = vmatprep.subr.mxu0 0.0
    %2872 = vmatpush1.msra.mxu0 0.0
    %2873 = vmatprep.subr.mxu0 0.0
    %2874 = vmatpush1.msra.mxu0 0.0
    %2875 = vmatprep.subr.mxu0 0.0
    %2876 = vmatpush1.msra.mxu0 0.0
    %2877 = vmatprep.subr.mxu0 0.0
    %2878 = vmatpush1.msra.mxu0 0.0
    %2879 = vmatprep.subr.mxu0 0.0
    %2880 = vmatpush1.msra.mxu0 0.0
    %2881 = vmatprep.subr.mxu0 0.0
    %2882 = vmatpush1.msra.mxu0 0.0
    %2883 = vmatprep.subr.mxu0 0.0
    %2884 = vmatpush1.msra.mxu0 0.0
    %2885 = vmatprep.subr.mxu0 0.0
    %2886 = vmatpush1.msra.mxu0 0.0
    %2887 = vmatprep.subr.mxu0 0.0
    %2888 = vmatpush1.msra.mxu0 0.0
    %2889 = vmatprep.subr.mxu0 0.0
    %2890 = vmatpush1.msra.mxu0 0.0
    %2891 = vmatprep.subr.mxu0 0.0
    %2892 = vmatpush1.msra.mxu0 0.0
    %2893 = vmatprep.subr.mxu0 0.0
    %2894 = vmatpush1.msra.mxu0 0.0
    %2895 = vmatprep.subr.mxu0 0.0
    %2896 = vmatpush1.msra.mxu0 0.0
    %2897 = vmatprep.subr.mxu0 0.0
    %2898 = vmatpush1.msra.mxu0 0.0
    %2899 = vmatprep.subr.mxu0 0.0
    %2900 = vmatpush1.msra.mxu0 0.0
    %2901 = vmatprep.subr.mxu0 0.0
    %2902 = vmatpush1.msra.mxu0 0.0
    %2903 = vmatprep.subr.mxu0 0.0
    %2904 = vmatpush1.msra.mxu0 0.0
    %2905 = vmatprep.subr.mxu0 0.0
    %2906 = vmatpush1.msra.mxu0 0.0
    %2907 = vmatprep.subr.mxu0 0.0
    %2908 = vmatpush1.msra.mxu0 0.0
    %2909 = vmatprep.subr.mxu0 0.0
    %2910 = vmatpush1.msra.mxu0 0.0
    %2911 = vmatprep.subr.mxu0 0.0
    %2912 = vmatpush1.msra.mxu0 0.0
    %2913 = vmatprep.subr.mxu0 0.0
    %2914 = vmatpush1.msra.mxu0 0.0
    %2915 = vmatprep.subr.mxu0 0.0
    %2916 = vmatpush1.msra.mxu0 0.0
    %2917 = vmatprep.subr.mxu0 0.0
    %2918 = vmatpush1.msra.mxu0 0.0
    %2919 = vmatprep.subr.mxu0 0.0
    %2920 = vmatpush1.msra.mxu0 0.0
    %2921 = vmatprep.subr.mxu0 0.0
    %2922 = vmatpush1.msra.mxu0 0.0
    %2923 = vmatprep.subr.mxu0 0.0
    %2924 = vmatpush1.msra.mxu0 0.0
    %2925 = vmatprep.mubr.f32.mxu0 0.0
    %2926 = vmatmul.mubr.f32.gmra.mrb[0].mxu0 %v2859
    %v2927 = vpop.f32.mrb[0].mxu0
    %v2928 = vadd.f32 0.0, %v2927
    %v2929 = vpop.f32.mrb[0].mxu0
    %2930 = vdwg.mxu0
    %s2931 = scalar_lea.vmem %s5, 40
    %v2932 = vld [vmem:[%s2931] sm:$0xff]
    %v2934 = vsel %vm229, %v2928, 0
    %2936 = vmatprep.subr.mxu0 0.0
    %2937 = vmatpush1.msra.mxu0 %v2932
    %2938 = vmatprep.subr.mxu0 0.0
    %2939 = vmatpush1.msra.mxu0 0.0
    %2940 = vmatprep.subr.mxu0 0.0
    %2941 = vmatpush1.msra.mxu0 0.0
    %2942 = vmatprep.subr.mxu0 0.0
    %2943 = vmatpush1.msra.mxu0 0.0
    %2944 = vmatprep.subr.mxu0 0.0
    %2945 = vmatpush1.msra.mxu0 0.0
    %2946 = vmatprep.subr.mxu0 0.0
    %2947 = vmatpush1.msra.mxu0 0.0
    %2948 = vmatprep.subr.mxu0 0.0
    %2949 = vmatpush1.msra.mxu0 0.0
    %2950 = vmatprep.subr.mxu0 0.0
    %2951 = vmatpush1.msra.mxu0 0.0
    %2952 = vmatprep.subr.mxu0 0.0
    %2953 = vmatpush1.msra.mxu0 0.0
    %2954 = vmatprep.subr.mxu0 0.0
    %2955 = vmatpush1.msra.mxu0 0.0
    %2956 = vmatprep.subr.mxu0 0.0
    %2957 = vmatpush1.msra.mxu0 0.0
    %2958 = vmatprep.subr.mxu0 0.0
    %2959 = vmatpush1.msra.mxu0 0.0
    %2960 = vmatprep.subr.mxu0 0.0
    %2961 = vmatpush1.msra.mxu0 0.0
    %2962 = vmatprep.subr.mxu0 0.0
    %2963 = vmatpush1.msra.mxu0 0.0
    %2964 = vmatprep.subr.mxu0 0.0
    %2965 = vmatpush1.msra.mxu0 0.0
    %2966 = vmatprep.subr.mxu0 0.0
    %2967 = vmatpush1.msra.mxu0 0.0
    %2968 = vmatprep.subr.mxu0 0.0
    %2969 = vmatpush1.msra.mxu0 0.0
    %2970 = vmatprep.subr.mxu0 0.0
    %2971 = vmatpush1.msra.mxu0 0.0
    %2972 = vmatprep.subr.mxu0 0.0
    %2973 = vmatpush1.msra.mxu0 0.0
    %2974 = vmatprep.subr.mxu0 0.0
    %2975 = vmatpush1.msra.mxu0 0.0
    %2976 = vmatprep.subr.mxu0 0.0
    %2977 = vmatpush1.msra.mxu0 0.0
    %2978 = vmatprep.subr.mxu0 0.0
    %2979 = vmatpush1.msra.mxu0 0.0
    %2980 = vmatprep.subr.mxu0 0.0
    %2981 = vmatpush1.msra.mxu0 0.0
    %2982 = vmatprep.subr.mxu0 0.0
    %2983 = vmatpush1.msra.mxu0 0.0
    %2984 = vmatprep.subr.mxu0 0.0
    %2985 = vmatpush1.msra.mxu0 0.0
    %2986 = vmatprep.subr.mxu0 0.0
    %2987 = vmatpush1.msra.mxu0 0.0
    %2988 = vmatprep.subr.mxu0 0.0
    %2989 = vmatpush1.msra.mxu0 0.0
    %2990 = vmatprep.subr.mxu0 0.0
    %2991 = vmatpush1.msra.mxu0 0.0
    %2992 = vmatprep.subr.mxu0 0.0
    %2993 = vmatpush1.msra.mxu0 0.0
    %2994 = vmatprep.subr.mxu0 0.0
    %2995 = vmatpush1.msra.mxu0 0.0
    %2996 = vmatprep.subr.mxu0 0.0
    %2997 = vmatpush1.msra.mxu0 0.0
    %2998 = vmatprep.subr.mxu0 0.0
    %2999 = vmatpush1.msra.mxu0 0.0
    %3000 = vmatprep.mubr.f32.mxu0 0.0
    %3001 = vmatmul.mubr.f32.gmra.mrb[0].mxu0 %v2934
    %v3002 = vpop.f32.mrb[0].mxu0
    %v3003 = vadd.f32 0.0, %v3002
    %v3004 = vpop.f32.mrb[0].mxu0
    %3005 = vdwg.mxu0
    %v3007 = vsel %vm229, %v2758, 0
    %3009 = vmatprep.subr.mxu0 0.0
    %3010 = vmatpush1.msra.mxu0 %v2762
    %3011 = vmatprep.subr.mxu0 0.0
    %3012 = vmatpush1.msra.mxu0 0.0
    %3013 = vmatprep.subr.mxu0 0.0
    %3014 = vmatpush1.msra.mxu0 0.0
    %3015 = vmatprep.subr.mxu0 0.0
    %3016 = vmatpush1.msra.mxu0 0.0
    %3017 = vmatprep.subr.mxu0 0.0
    %3018 = vmatpush1.msra.mxu0 0.0
    %3019 = vmatprep.subr.mxu0 0.0
    %3020 = vmatpush1.msra.mxu0 0.0
    %3021 = vmatprep.subr.mxu0 0.0
    %3022 = vmatpush1.msra.mxu0 0.0
    %3023 = vmatprep.subr.mxu0 0.0
    %3024 = vmatpush1.msra.mxu0 0.0
    %3025 = vmatprep.subr.mxu0 0.0
    %3026 = vmatpush1.msra.mxu0 0.0
    %3027 = vmatprep.subr.mxu0 0.0
    %3028 = vmatpush1.msra.mxu0 0.0
    %3029 = vmatprep.subr.mxu0 0.0
    %3030 = vmatpush1.msra.mxu0 0.0
    %3031 = vmatprep.subr.mxu0 0.0
    %3032 = vmatpush1.msra.mxu0 0.0
    %3033 = vmatprep.subr.mxu0 0.0
    %3034 = vmatpush1.msra.mxu0 0.0
    %3035 = vmatprep.subr.mxu0 0.0
    %3036 = vmatpush1.msra.mxu0 0.0
    %3037 = vmatprep.subr.mxu0 0.0
    %3038 = vmatpush1.msra.mxu0 0.0
    %3039 = vmatprep.subr.mxu0 0.0
    %3040 = vmatpush1.msra.mxu0 0.0
    %3041 = vmatprep.subr.mxu0 0.0
    %3042 = vmatpush1.msra.mxu0 0.0
    %3043 = vmatprep.subr.mxu0 0.0
    %3044 = vmatpush1.msra.mxu0 0.0
    %3045 = vmatprep.subr.mxu0 0.0
    %3046 = vmatpush1.msra.mxu0 0.0
    %3047 = vmatprep.subr.mxu0 0.0
    %3048 = vmatpush1.msra.mxu0 0.0
    %3049 = vmatprep.subr.mxu0 0.0
    %3050 = vmatpush1.msra.mxu0 0.0
    %3051 = vmatprep.subr.mxu0 0.0
    %3052 = vmatpush1.msra.mxu0 0.0
    %3053 = vmatprep.subr.mxu0 0.0
    %3054 = vmatpush1.msra.mxu0 0.0
    %3055 = vmatprep.subr.mxu0 0.0
    %3056 = vmatpush1.msra.mxu0 0.0
    %3057 = vmatprep.subr.mxu0 0.0
    %3058 = vmatpush1.msra.mxu0 0.0
    %3059 = vmatprep.subr.mxu0 0.0
    %3060 = vmatpush1.msra.mxu0 0.0
    %3061 = vmatprep.subr.mxu0 0.0
    %3062 = vmatpush1.msra.mxu0 0.0
    %3063 = vmatprep.subr.mxu0 0.0
    %3064 = vmatpush1.msra.mxu0 0.0
    %3065 = vmatprep.subr.mxu0 0.0
    %3066 = vmatpush1.msra.mxu0 0.0
    %3067 = vmatprep.subr.mxu0 0.0
    %3068 = vmatpush1.msra.mxu0 0.0
    %3069 = vmatprep.subr.mxu0 0.0
    %3070 = vmatpush1.msra.mxu0 0.0
    %3071 = vmatprep.subr.mxu0 0.0
    %3072 = vmatpush1.msra.mxu0 0.0
    %3073 = vmatprep.mubr.f32.mxu0 0.0
    %3074 = vmatmul.mubr.f32.gmra.mrb[0].mxu0 %v3007
    %v3075 = vpop.f32.mrb[0].mxu0
    %v3076 = vadd.f32 %v3003, %v3075
    %v3077 = vpop.f32.mrb[0].mxu0
    %3078 = vdwg.mxu0
    %3079 = vrot.lane.b32.xlu0 %v2586, 112
    %v3080 = vpop.permute.xlu0 %3079
    %3081 = vrot.lane.b32.xlu0 %v2586, 80
    %v3082 = vpop.permute.xlu0 %3081
    %v3083 = vsel %vm229, %v3080, 0
    %v3085 = vsel %vm229, %v3082, 0
    %3087 = vmatprep.subr.mxu0 0.0
    %3088 = vmatpush1.xpose.msra.mxu0 %v3085
    %3089 = vmatprep.subr.mxu0 0.0
    %3090 = vmatpush1.xpose.msra.mxu0 0.0
    %3091 = vmatprep.subr.mxu0 0.0
    %3092 = vmatpush1.xpose.msra.mxu0 0.0
    %3093 = vmatprep.subr.mxu0 0.0
    %3094 = vmatpush1.xpose.msra.mxu0 0.0
    %3095 = vmatprep.subr.mxu0 0.0
    %3096 = vmatpush1.xpose.msra.mxu0 0.0
    %3097 = vmatprep.subr.mxu0 0.0
    %3098 = vmatpush1.xpose.msra.mxu0 0.0
    %3099 = vmatprep.subr.mxu0 0.0
    %3100 = vmatpush1.xpose.msra.mxu0 0.0
    %3101 = vmatprep.subr.mxu0 0.0
    %3102 = vmatpush1.xpose.msra.mxu0 0.0
    %3103 = vmatprep.subr.mxu0 0.0
    %3104 = vmatpush1.xpose.msra.mxu0 0.0
    %3105 = vmatprep.subr.mxu0 0.0
    %3106 = vmatpush1.xpose.msra.mxu0 0.0
    %3107 = vmatprep.subr.mxu0 0.0
    %3108 = vmatpush1.xpose.msra.mxu0 0.0
    %3109 = vmatprep.subr.mxu0 0.0
    %3110 = vmatpush1.xpose.msra.mxu0 0.0
    %3111 = vmatprep.subr.mxu0 0.0
    %3112 = vmatpush1.xpose.msra.mxu0 0.0
    %3113 = vmatprep.subr.mxu0 0.0
    %3114 = vmatpush1.xpose.msra.mxu0 0.0
    %3115 = vmatprep.subr.mxu0 0.0
    %3116 = vmatpush1.xpose.msra.mxu0 0.0
    %3117 = vmatprep.subr.mxu0 0.0
    %3118 = vmatpush1.xpose.msra.mxu0 0.0
    %3119 = vmatprep.subr.mxu0 0.0
    %3120 = vmatpush1.xpose.msra.mxu0 0.0
    %3121 = vmatprep.subr.mxu0 0.0
    %3122 = vmatpush1.xpose.msra.mxu0 0.0
    %3123 = vmatprep.subr.mxu0 0.0
    %3124 = vmatpush1.xpose.msra.mxu0 0.0
    %3125 = vmatprep.subr.mxu0 0.0
    %3126 = vmatpush1.xpose.msra.mxu0 0.0
    %3127 = vmatprep.subr.mxu0 0.0
    %3128 = vmatpush1.xpose.msra.mxu0 0.0
    %3129 = vmatprep.subr.mxu0 0.0
    %3130 = vmatpush1.xpose.msra.mxu0 0.0
    %3131 = vmatprep.subr.mxu0 0.0
    %3132 = vmatpush1.xpose.msra.mxu0 0.0
    %3133 = vmatprep.subr.mxu0 0.0
    %3134 = vmatpush1.xpose.msra.mxu0 0.0
    %3135 = vmatprep.subr.mxu0 0.0
    %3136 = vmatpush1.xpose.msra.mxu0 0.0
    %3137 = vmatprep.subr.mxu0 0.0
    %3138 = vmatpush1.xpose.msra.mxu0 0.0
    %3139 = vmatprep.subr.mxu0 0.0
    %3140 = vmatpush1.xpose.msra.mxu0 0.0
    %3141 = vmatprep.subr.mxu0 0.0
    %3142 = vmatpush1.xpose.msra.mxu0 0.0
    %3143 = vmatprep.subr.mxu0 0.0
    %3144 = vmatpush1.xpose.msra.mxu0 0.0
    %3145 = vmatprep.subr.mxu0 0.0
    %3146 = vmatpush1.xpose.msra.mxu0 0.0
    %3147 = vmatprep.subr.mxu0 0.0
    %3148 = vmatpush1.xpose.msra.mxu0 0.0
    %3149 = vmatprep.subr.mxu0 0.0
    %3150 = vmatpush1.xpose.msra.mxu0 0.0
    %3151 = vmatprep.mubr.f32.mxu0 0.0
    %3152 = vmatmul.mubr.f32.gmra.mrb[0].mxu0 %v3083
    %v3153 = vpop.f32.mrb[0].mxu0
    %v3154 = vadd.f32 0.0, %v3153
    %v3155 = vpop.f32.mrb[0].mxu0
    %3156 = vdwg.mxu0
    %v3157 = vsel %vm229, %v3154, -inf
    %3158 = vmax.xlane.f32.xlu0 %v3157
    %v3159 = vpop.xlane.xlu0 %3158
    %v3160 = vsub.f32 %v3154, %v3159
    %v3161 = vmul.f32 %v3160, 1.442695
    %v3162 = vpow.pop %v3161
    %v3163 = vsel %vm229, %v3162, 0.0
    %3164 = vadd.xlane.f32.xlu0 %v3163
    %v3165 = vpop.xlane.xlu0 %3164
    %v3166 = vrcp.pop %v3165
    %v3167 = vmul.f32 %v3165, %v3166
    %v3168 = vsub.f32 2.0, %v3167
    %v3169 = vmul.f32 %v3166, %v3168
    %v3170 = vmul.f32 %v3162, %v3169
    %3171 = vrot.lane.b32.xlu0 %v2586, 48
    %v3172 = vpop.permute.xlu0 %3171
    %v3175 = vsel %vm229, %v3170, 0
    %3177 = vmatprep.subr.mxu0 0.0
    %3178 = vmatpush1.msra.mxu0 %v3172
    %3179 = vmatprep.subr.mxu0 0.0
    %3180 = vmatpush1.msra.mxu0 0.0
    %3181 = vmatprep.subr.mxu0 0.0
    %3182 = vmatpush1.msra.mxu0 0.0
    %3183 = vmatprep.subr.mxu0 0.0
    %3184 = vmatpush1.msra.mxu0 0.0
    %3185 = vmatprep.subr.mxu0 0.0
    %3186 = vmatpush1.msra.mxu0 0.0
    %3187 = vmatprep.subr.mxu0 0.0
    %3188 = vmatpush1.msra.mxu0 0.0
    %3189 = vmatprep.subr.mxu0 0.0
    %3190 = vmatpush1.msra.mxu0 0.0
    %3191 = vmatprep.subr.mxu0 0.0
    %3192 = vmatpush1.msra.mxu0 0.0
    %3193 = vmatprep.subr.mxu0 0.0
    %3194 = vmatpush1.msra.mxu0 0.0
    %3195 = vmatprep.subr.mxu0 0.0
    %3196 = vmatpush1.msra.mxu0 0.0
    %3197 = vmatprep.subr.mxu0 0.0
    %3198 = vmatpush1.msra.mxu0 0.0
    %3199 = vmatprep.subr.mxu0 0.0
    %3200 = vmatpush1.msra.mxu0 0.0
    %3201 = vmatprep.subr.mxu0 0.0
    %3202 = vmatpush1.msra.mxu0 0.0
    %3203 = vmatprep.subr.mxu0 0.0
    %3204 = vmatpush1.msra.mxu0 0.0
    %3205 = vmatprep.subr.mxu0 0.0
    %3206 = vmatpush1.msra.mxu0 0.0
    %3207 = vmatprep.subr.mxu0 0.0
    %3208 = vmatpush1.msra.mxu0 0.0
    %3209 = vmatprep.subr.mxu0 0.0
    %3210 = vmatpush1.msra.mxu0 0.0
    %3211 = vmatprep.subr.mxu0 0.0
    %3212 = vmatpush1.msra.mxu0 0.0
    %3213 = vmatprep.subr.mxu0 0.0
    %3214 = vmatpush1.msra.mxu0 0.0
    %3215 = vmatprep.subr.mxu0 0.0
    %3216 = vmatpush1.msra.mxu0 0.0
    %3217 = vmatprep.subr.mxu0 0.0
    %3218 = vmatpush1.msra.mxu0 0.0
    %3219 = vmatprep.subr.mxu0 0.0
    %3220 = vmatpush1.msra.mxu0 0.0
    %3221 = vmatprep.subr.mxu0 0.0
    %3222 = vmatpush1.msra.mxu0 0.0
    %3223 = vmatprep.subr.mxu0 0.0
    %3224 = vmatpush1.msra.mxu0 0.0
    %3225 = vmatprep.subr.mxu0 0.0
    %3226 = vmatpush1.msra.mxu0 0.0
    %3227 = vmatprep.subr.mxu0 0.0
    %3228 = vmatpush1.msra.mxu0 0.0
    %3229 = vmatprep.subr.mxu0 0.0
    %3230 = vmatpush1.msra.mxu0 0.0
    %3231 = vmatprep.subr.mxu0 0.0
    %3232 = vmatpush1.msra.mxu0 0.0
    %3233 = vmatprep.subr.mxu0 0.0
    %3234 = vmatpush1.msra.mxu0 0.0
    %3235 = vmatprep.subr.mxu0 0.0
    %3236 = vmatpush1.msra.mxu0 0.0
    %3237 = vmatprep.subr.mxu0 0.0
    %3238 = vmatpush1.msra.mxu0 0.0
    %3239 = vmatprep.subr.mxu0 0.0
    %3240 = vmatpush1.msra.mxu0 0.0
    %3241 = vmatprep.mubr.f32.mxu0 0.0
    %3242 = vmatmul.mubr.f32.gmra.mrb[0].mxu0 %v3175
    %v3243 = vpop.f32.mrb[0].mxu0
    %v3244 = vadd.f32 0.0, %v3243
    %v3245 = vpop.f32.mrb[0].mxu0
    %3246 = vdwg.mxu0
    %s3247 = scalar_lea.vmem %s5, 48
    %v3248 = vld [vmem:[%s3247] sm:$0xff]
    %v3250 = vsel %vm229, %v3244, 0
    %3252 = vmatprep.subr.mxu0 0.0
    %3253 = vmatpush1.msra.mxu0 %v3248
    %3254 = vmatprep.subr.mxu0 0.0
    %3255 = vmatpush1.msra.mxu0 0.0
    %3256 = vmatprep.subr.mxu0 0.0
    %3257 = vmatpush1.msra.mxu0 0.0
    %3258 = vmatprep.subr.mxu0 0.0
    %3259 = vmatpush1.msra.mxu0 0.0
    %3260 = vmatprep.subr.mxu0 0.0
    %3261 = vmatpush1.msra.mxu0 0.0
    %3262 = vmatprep.subr.mxu0 0.0
    %3263 = vmatpush1.msra.mxu0 0.0
    %3264 = vmatprep.subr.mxu0 0.0
    %3265 = vmatpush1.msra.mxu0 0.0
    %3266 = vmatprep.subr.mxu0 0.0
    %3267 = vmatpush1.msra.mxu0 0.0
    %3268 = vmatprep.subr.mxu0 0.0
    %3269 = vmatpush1.msra.mxu0 0.0
    %3270 = vmatprep.subr.mxu0 0.0
    %3271 = vmatpush1.msra.mxu0 0.0
    %3272 = vmatprep.subr.mxu0 0.0
    %3273 = vmatpush1.msra.mxu0 0.0
    %3274 = vmatprep.subr.mxu0 0.0
    %3275 = vmatpush1.msra.mxu0 0.0
    %3276 = vmatprep.subr.mxu0 0.0
    %3277 = vmatpush1.msra.mxu0 0.0
    %3278 = vmatprep.subr.mxu0 0.0
    %3279 = vmatpush1.msra.mxu0 0.0
    %3280 = vmatprep.subr.mxu0 0.0
    %3281 = vmatpush1.msra.mxu0 0.0
    %3282 = vmatprep.subr.mxu0 0.0
    %3283 = vmatpush1.msra.mxu0 0.0
    %3284 = vmatprep.subr.mxu0 0.0
    %3285 = vmatpush1.msra.mxu0 0.0
    %3286 = vmatprep.subr.mxu0 0.0
    %3287 = vmatpush1.msra.mxu0 0.0
    %3288 = vmatprep.subr.mxu0 0.0
    %3289 = vmatpush1.msra.mxu0 0.0
    %3290 = vmatprep.subr.mxu0 0.0
    %3291 = vmatpush1.msra.mxu0 0.0
    %3292 = vmatprep.subr.mxu0 0.0
    %3293 = vmatpush1.msra.mxu0 0.0
    %3294 = vmatprep.subr.mxu0 0.0
    %3295 = vmatpush1.msra.mxu0 0.0
    %3296 = vmatprep.subr.mxu0 0.0
    %3297 = vmatpush1.msra.mxu0 0.0
    %3298 = vmatprep.subr.mxu0 0.0
    %3299 = vmatpush1.msra.mxu0 0.0
    %3300 = vmatprep.subr.mxu0 0.0
    %3301 = vmatpush1.msra.mxu0 0.0
    %3302 = vmatprep.subr.mxu0 0.0
    %3303 = vmatpush1.msra.mxu0 0.0
    %3304 = vmatprep.subr.mxu0 0.0
    %3305 = vmatpush1.msra.mxu0 0.0
    %3306 = vmatprep.subr.mxu0 0.0
    %3307 = vmatpush1.msra.mxu0 0.0
    %3308 = vmatprep.subr.mxu0 0.0
    %3309 = vmatpush1.msra.mxu0 0.0
    %3310 = vmatprep.subr.mxu0 0.0
    %3311 = vmatpush1.msra.mxu0 0.0
    %3312 = vmatprep.subr.mxu0 0.0
    %3313 = vmatpush1.msra.mxu0 0.0
    %3314 = vmatprep.subr.mxu0 0.0
    %3315 = vmatpush1.msra.mxu0 0.0
    %3316 = vmatprep.mubr.f32.mxu0 0.0
    %3317 = vmatmul.mubr.f32.gmra.mrb[0].mxu0 %v3250
    %v3318 = vpop.f32.mrb[0].mxu0
    %v3319 = vadd.f32 0.0, %v3318
    %v3320 = vpop.f32.mrb[0].mxu0
    %3321 = vdwg.mxu0
    %v3322 = vadd.f32 %v3076, %v3319
    %3323 = vrot.lane.b32.xlu0 %v2586, 104
    %v3324 = vpop.permute.xlu0 %3323
    %3325 = vrot.lane.b32.xlu0 %v2586, 72
    %v3326 = vpop.permute.xlu0 %3325
    %v3327 = vsel %vm229, %v3324, 0
    %v3329 = vsel %vm229, %v3326, 0
    %3331 = vmatprep.subr.mxu0 0.0
    %3332 = vmatpush1.xpose.msra.mxu0 %v3329
    %3333 = vmatprep.subr.mxu0 0.0
    %3334 = vmatpush1.xpose.msra.mxu0 0.0
    %3335 = vmatprep.subr.mxu0 0.0
    %3336 = vmatpush1.xpose.msra.mxu0 0.0
    %3337 = vmatprep.subr.mxu0 0.0
    %3338 = vmatpush1.xpose.msra.mxu0 0.0
    %3339 = vmatprep.subr.mxu0 0.0
    %3340 = vmatpush1.xpose.msra.mxu0 0.0
    %3341 = vmatprep.subr.mxu0 0.0
    %3342 = vmatpush1.xpose.msra.mxu0 0.0
    %3343 = vmatprep.subr.mxu0 0.0
    %3344 = vmatpush1.xpose.msra.mxu0 0.0
    %3345 = vmatprep.subr.mxu0 0.0
    %3346 = vmatpush1.xpose.msra.mxu0 0.0
    %3347 = vmatprep.subr.mxu0 0.0
    %3348 = vmatpush1.xpose.msra.mxu0 0.0
    %3349 = vmatprep.subr.mxu0 0.0
    %3350 = vmatpush1.xpose.msra.mxu0 0.0
    %3351 = vmatprep.subr.mxu0 0.0
    %3352 = vmatpush1.xpose.msra.mxu0 0.0
    %3353 = vmatprep.subr.mxu0 0.0
    %3354 = vmatpush1.xpose.msra.mxu0 0.0
    %3355 = vmatprep.subr.mxu0 0.0
    %3356 = vmatpush1.xpose.msra.mxu0 0.0
    %3357 = vmatprep.subr.mxu0 0.0
    %3358 = vmatpush1.xpose.msra.mxu0 0.0
    %3359 = vmatprep.subr.mxu0 0.0
    %3360 = vmatpush1.xpose.msra.mxu0 0.0
    %3361 = vmatprep.subr.mxu0 0.0
    %3362 = vmatpush1.xpose.msra.mxu0 0.0
    %3363 = vmatprep.subr.mxu0 0.0
    %3364 = vmatpush1.xpose.msra.mxu0 0.0
    %3365 = vmatprep.subr.mxu0 0.0
    %3366 = vmatpush1.xpose.msra.mxu0 0.0
    %3367 = vmatprep.subr.mxu0 0.0
    %3368 = vmatpush1.xpose.msra.mxu0 0.0
    %3369 = vmatprep.subr.mxu0 0.0
    %3370 = vmatpush1.xpose.msra.mxu0 0.0
    %3371 = vmatprep.subr.mxu0 0.0
    %3372 = vmatpush1.xpose.msra.mxu0 0.0
    %3373 = vmatprep.subr.mxu0 0.0
    %3374 = vmatpush1.xpose.msra.mxu0 0.0
    %3375 = vmatprep.subr.mxu0 0.0
    %3376 = vmatpush1.xpose.msra.mxu0 0.0
    %3377 = vmatprep.subr.mxu0 0.0
    %3378 = vmatpush1.xpose.msra.mxu0 0.0
    %3379 = vmatprep.subr.mxu0 0.0
    %3380 = vmatpush1.xpose.msra.mxu0 0.0
    %3381 = vmatprep.subr.mxu0 0.0
    %3382 = vmatpush1.xpose.msra.mxu0 0.0
    %3383 = vmatprep.subr.mxu0 0.0
    %3384 = vmatpush1.xpose.msra.mxu0 0.0
    %3385 = vmatprep.subr.mxu0 0.0
    %3386 = vmatpush1.xpose.msra.mxu0 0.0
    %3387 = vmatprep.subr.mxu0 0.0
    %3388 = vmatpush1.xpose.msra.mxu0 0.0
    %3389 = vmatprep.subr.mxu0 0.0
    %3390 = vmatpush1.xpose.msra.mxu0 0.0
    %3391 = vmatprep.subr.mxu0 0.0
    %3392 = vmatpush1.xpose.msra.mxu0 0.0
    %3393 = vmatprep.subr.mxu0 0.0
    %3394 = vmatpush1.xpose.msra.mxu0 0.0
    %3395 = vmatprep.mubr.f32.mxu0 0.0
    %3396 = vmatmul.mubr.f32.gmra.mrb[0].mxu0 %v3327
    %v3397 = vpop.f32.mrb[0].mxu0
    %v3398 = vadd.f32 0.0, %v3397
    %v3399 = vpop.f32.mrb[0].mxu0
    %3400 = vdwg.mxu0
    %v3401 = vsel %vm229, %v3398, -inf
    %3402 = vmax.xlane.f32.xlu0 %v3401
    %v3403 = vpop.xlane.xlu0 %3402
    %v3404 = vsub.f32 %v3398, %v3403
    %v3405 = vmul.f32 %v3404, 1.442695
    %v3406 = vpow.pop %v3405
    %v3407 = vsel %vm229, %v3406, 0.0
    %3408 = vadd.xlane.f32.xlu0 %v3407
    %v3409 = vpop.xlane.xlu0 %3408
    %v3410 = vrcp.pop %v3409
    %v3411 = vmul.f32 %v3409, %v3410
    %v3412 = vsub.f32 2.0, %v3411
    %v3413 = vmul.f32 %v3410, %v3412
    %v3414 = vmul.f32 %v3406, %v3413
    %3415 = vrot.lane.b32.xlu0 %v2586, 40
    %v3416 = vpop.permute.xlu0 %3415
    %v3419 = vsel %vm229, %v3414, 0
    %3421 = vmatprep.subr.mxu0 0.0
    %3422 = vmatpush1.msra.mxu0 %v3416
    %3423 = vmatprep.subr.mxu0 0.0
    %3424 = vmatpush1.msra.mxu0 0.0
    %3425 = vmatprep.subr.mxu0 0.0
    %3426 = vmatpush1.msra.mxu0 0.0
    %3427 = vmatprep.subr.mxu0 0.0
    %3428 = vmatpush1.msra.mxu0 0.0
    %3429 = vmatprep.subr.mxu0 0.0
    %3430 = vmatpush1.msra.mxu0 0.0
    %3431 = vmatprep.subr.mxu0 0.0
    %3432 = vmatpush1.msra.mxu0 0.0
    %3433 = vmatprep.subr.mxu0 0.0
    %3434 = vmatpush1.msra.mxu0 0.0
    %3435 = vmatprep.subr.mxu0 0.0
    %3436 = vmatpush1.msra.mxu0 0.0
    %3437 = vmatprep.subr.mxu0 0.0
    %3438 = vmatpush1.msra.mxu0 0.0
    %3439 = vmatprep.subr.mxu0 0.0
    %3440 = vmatpush1.msra.mxu0 0.0
    %3441 = vmatprep.subr.mxu0 0.0
    %3442 = vmatpush1.msra.mxu0 0.0
    %3443 = vmatprep.subr.mxu0 0.0
    %3444 = vmatpush1.msra.mxu0 0.0
    %3445 = vmatprep.subr.mxu0 0.0
    %3446 = vmatpush1.msra.mxu0 0.0
    %3447 = vmatprep.subr.mxu0 0.0
    %3448 = vmatpush1.msra.mxu0 0.0
    %3449 = vmatprep.subr.mxu0 0.0
    %3450 = vmatpush1.msra.mxu0 0.0
    %3451 = vmatprep.subr.mxu0 0.0
    %3452 = vmatpush1.msra.mxu0 0.0
    %3453 = vmatprep.subr.mxu0 0.0
    %3454 = vmatpush1.msra.mxu0 0.0
    %3455 = vmatprep.subr.mxu0 0.0
    %3456 = vmatpush1.msra.mxu0 0.0
    %3457 = vmatprep.subr.mxu0 0.0
    %3458 = vmatpush1.msra.mxu0 0.0
    %3459 = vmatprep.subr.mxu0 0.0
    %3460 = vmatpush1.msra.mxu0 0.0
    %3461 = vmatprep.subr.mxu0 0.0
    %3462 = vmatpush1.msra.mxu0 0.0
    %3463 = vmatprep.subr.mxu0 0.0
    %3464 = vmatpush1.msra.mxu0 0.0
    %3465 = vmatprep.subr.mxu0 0.0
    %3466 = vmatpush1.msra.mxu0 0.0
    %3467 = vmatprep.subr.mxu0 0.0
    %3468 = vmatpush1.msra.mxu0 0.0
    %3469 = vmatprep.subr.mxu0 0.0
    %3470 = vmatpush1.msra.mxu0 0.0
    %3471 = vmatprep.subr.mxu0 0.0
    %3472 = vmatpush1.msra.mxu0 0.0
    %3473 = vmatprep.subr.mxu0 0.0
    %3474 = vmatpush1.msra.mxu0 0.0
    %3475 = vmatprep.subr.mxu0 0.0
    %3476 = vmatpush1.msra.mxu0 0.0
    %3477 = vmatprep.subr.mxu0 0.0
    %3478 = vmatpush1.msra.mxu0 0.0
    %3479 = vmatprep.subr.mxu0 0.0
    %3480 = vmatpush1.msra.mxu0 0.0
    %3481 = vmatprep.subr.mxu0 0.0
    %3482 = vmatpush1.msra.mxu0 0.0
    %3483 = vmatprep.subr.mxu0 0.0
    %3484 = vmatpush1.msra.mxu0 0.0
    %3485 = vmatprep.mubr.f32.mxu0 0.0
    %3486 = vmatmul.mubr.f32.gmra.mrb[0].mxu0 %v3419
    %v3487 = vpop.f32.mrb[0].mxu0
    %v3488 = vadd.f32 0.0, %v3487
    %v3489 = vpop.f32.mrb[0].mxu0
    %3490 = vdwg.mxu0
    %s3491 = scalar_lea.vmem %s5, 56
    %v3492 = vld [vmem:[%s3491] sm:$0xff]
    %v3494 = vsel %vm229, %v3488, 0
    %3496 = vmatprep.subr.mxu0 0.0
    %3497 = vmatpush1.msra.mxu0 %v3492
    %3498 = vmatprep.subr.mxu0 0.0
    %3499 = vmatpush1.msra.mxu0 0.0
    %3500 = vmatprep.subr.mxu0 0.0
    %3501 = vmatpush1.msra.mxu0 0.0
    %3502 = vmatprep.subr.mxu0 0.0
    %3503 = vmatpush1.msra.mxu0 0.0
    %3504 = vmatprep.subr.mxu0 0.0
    %3505 = vmatpush1.msra.mxu0 0.0
    %3506 = vmatprep.subr.mxu0 0.0
    %3507 = vmatpush1.msra.mxu0 0.0
    %3508 = vmatprep.subr.mxu0 0.0
    %3509 = vmatpush1.msra.mxu0 0.0
    %3510 = vmatprep.subr.mxu0 0.0
    %3511 = vmatpush1.msra.mxu0 0.0
    %3512 = vmatprep.subr.mxu0 0.0
    %3513 = vmatpush1.msra.mxu0 0.0
    %3514 = vmatprep.subr.mxu0 0.0
    %3515 = vmatpush1.msra.mxu0 0.0
    %3516 = vmatprep.subr.mxu0 0.0
    %3517 = vmatpush1.msra.mxu0 0.0
    %3518 = vmatprep.subr.mxu0 0.0
    %3519 = vmatpush1.msra.mxu0 0.0
    %3520 = vmatprep.subr.mxu0 0.0
    %3521 = vmatpush1.msra.mxu0 0.0
    %3522 = vmatprep.subr.mxu0 0.0
    %3523 = vmatpush1.msra.mxu0 0.0
    %3524 = vmatprep.subr.mxu0 0.0
    %3525 = vmatpush1.msra.mxu0 0.0
    %3526 = vmatprep.subr.mxu0 0.0
    %3527 = vmatpush1.msra.mxu0 0.0
    %3528 = vmatprep.subr.mxu0 0.0
    %3529 = vmatpush1.msra.mxu0 0.0
    %3530 = vmatprep.subr.mxu0 0.0
    %3531 = vmatpush1.msra.mxu0 0.0
    %3532 = vmatprep.subr.mxu0 0.0
    %3533 = vmatpush1.msra.mxu0 0.0
    %3534 = vmatprep.subr.mxu0 0.0
    %3535 = vmatpush1.msra.mxu0 0.0
    %3536 = vmatprep.subr.mxu0 0.0
    %3537 = vmatpush1.msra.mxu0 0.0
    %3538 = vmatprep.subr.mxu0 0.0
    %3539 = vmatpush1.msra.mxu0 0.0
    %3540 = vmatprep.subr.mxu0 0.0
    %3541 = vmatpush1.msra.mxu0 0.0
    %3542 = vmatprep.subr.mxu0 0.0
    %3543 = vmatpush1.msra.mxu0 0.0
    %3544 = vmatprep.subr.mxu0 0.0
    %3545 = vmatpush1.msra.mxu0 0.0
    %3546 = vmatprep.subr.mxu0 0.0
    %3547 = vmatpush1.msra.mxu0 0.0
    %3548 = vmatprep.subr.mxu0 0.0
    %3549 = vmatpush1.msra.mxu0 0.0
    %3550 = vmatprep.subr.mxu0 0.0
    %3551 = vmatpush1.msra.mxu0 0.0
    %3552 = vmatprep.subr.mxu0 0.0
    %3553 = vmatpush1.msra.mxu0 0.0
    %3554 = vmatprep.subr.mxu0 0.0
    %3555 = vmatpush1.msra.mxu0 0.0
    %3556 = vmatprep.subr.mxu0 0.0
    %3557 = vmatpush1.msra.mxu0 0.0
    %3558 = vmatprep.subr.mxu0 0.0
    %3559 = vmatpush1.msra.mxu0 0.0
    %3560 = vmatprep.mubr.f32.mxu0 0.0
    %3561 = vmatmul.mubr.f32.gmra.mrb[0].mxu0 %v3494
    %v3562 = vpop.f32.mrb[0].mxu0
    %v3563 = vadd.f32 0.0, %v3562
    %v3564 = vpop.f32.mrb[0].mxu0
    %3565 = vdwg.mxu0
    %v3566 = vadd.f32 %v3322, %v3563
    %3568 = vrot.lane.b32.xlu0 %v2591, 96
    %v3569 = vpop.permute.xlu0 %3568
    %v3570 = vsel %vm229, %v2591, 0
    %v3572 = vsel %vm229, %v3569, 0
    %3574 = vmatprep.subr.mxu0 0.0
    %3575 = vmatpush1.xpose.msra.mxu0 %v3572
    %3576 = vmatprep.subr.mxu0 0.0
    %3577 = vmatpush1.xpose.msra.mxu0 0.0
    %3578 = vmatprep.subr.mxu0 0.0
    %3579 = vmatpush1.xpose.msra.mxu0 0.0
    %3580 = vmatprep.subr.mxu0 0.0
    %3581 = vmatpush1.xpose.msra.mxu0 0.0
    %3582 = vmatprep.subr.mxu0 0.0
    %3583 = vmatpush1.xpose.msra.mxu0 0.0
    %3584 = vmatprep.subr.mxu0 0.0
    %3585 = vmatpush1.xpose.msra.mxu0 0.0
    %3586 = vmatprep.subr.mxu0 0.0
    %3587 = vmatpush1.xpose.msra.mxu0 0.0
    %3588 = vmatprep.subr.mxu0 0.0
    %3589 = vmatpush1.xpose.msra.mxu0 0.0
    %3590 = vmatprep.subr.mxu0 0.0
    %3591 = vmatpush1.xpose.msra.mxu0 0.0
    %3592 = vmatprep.subr.mxu0 0.0
    %3593 = vmatpush1.xpose.msra.mxu0 0.0
    %3594 = vmatprep.subr.mxu0 0.0
    %3595 = vmatpush1.xpose.msra.mxu0 0.0
    %3596 = vmatprep.subr.mxu0 0.0
    %3597 = vmatpush1.xpose.msra.mxu0 0.0
    %3598 = vmatprep.subr.mxu0 0.0
    %3599 = vmatpush1.xpose.msra.mxu0 0.0
    %3600 = vmatprep.subr.mxu0 0.0
    %3601 = vmatpush1.xpose.msra.mxu0 0.0
    %3602 = vmatprep.subr.mxu0 0.0
    %3603 = vmatpush1.xpose.msra.mxu0 0.0
    %3604 = vmatprep.subr.mxu0 0.0
    %3605 = vmatpush1.xpose.msra.mxu0 0.0
    %3606 = vmatprep.subr.mxu0 0.0
    %3607 = vmatpush1.xpose.msra.mxu0 0.0
    %3608 = vmatprep.subr.mxu0 0.0
    %3609 = vmatpush1.xpose.msra.mxu0 0.0
    %3610 = vmatprep.subr.mxu0 0.0
    %3611 = vmatpush1.xpose.msra.mxu0 0.0
    %3612 = vmatprep.subr.mxu0 0.0
    %3613 = vmatpush1.xpose.msra.mxu0 0.0
    %3614 = vmatprep.subr.mxu0 0.0
    %3615 = vmatpush1.xpose.msra.mxu0 0.0
    %3616 = vmatprep.subr.mxu0 0.0
    %3617 = vmatpush1.xpose.msra.mxu0 0.0
    %3618 = vmatprep.subr.mxu0 0.0
    %3619 = vmatpush1.xpose.msra.mxu0 0.0
    %3620 = vmatprep.subr.mxu0 0.0
    %3621 = vmatpush1.xpose.msra.mxu0 0.0
    %3622 = vmatprep.subr.mxu0 0.0
    %3623 = vmatpush1.xpose.msra.mxu0 0.0
    %3624 = vmatprep.subr.mxu0 0.0
    %3625 = vmatpush1.xpose.msra.mxu0 0.0
    %3626 = vmatprep.subr.mxu0 0.0
    %3627 = vmatpush1.xpose.msra.mxu0 0.0
    %3628 = vmatprep.subr.mxu0 0.0
    %3629 = vmatpush1.xpose.msra.mxu0 0.0
    %3630 = vmatprep.subr.mxu0 0.0
    %3631 = vmatpush1.xpose.msra.mxu0 0.0
    %3632 = vmatprep.subr.mxu0 0.0
    %3633 = vmatpush1.xpose.msra.mxu0 0.0
    %3634 = vmatprep.subr.mxu0 0.0
    %3635 = vmatpush1.xpose.msra.mxu0 0.0
    %3636 = vmatprep.subr.mxu0 0.0
    %3637 = vmatpush1.xpose.msra.mxu0 0.0
    %3638 = vmatprep.mubr.f32.mxu0 0.0
    %3639 = vmatmul.mubr.f32.gmra.mrb[0].mxu0 %v3570
    %v3640 = vpop.f32.mrb[0].mxu0
    %v3641 = vadd.f32 0.0, %v3640
    %v3642 = vpop.f32.mrb[0].mxu0
    %3643 = vdwg.mxu0
    %v3644 = vsel %vm229, %v3641, -inf
    %3645 = vmax.xlane.f32.xlu0 %v3644
    %v3646 = vpop.xlane.xlu0 %3645
    %v3647 = vsub.f32 %v3641, %v3646
    %v3648 = vmul.f32 %v3647, 1.442695
    %v3649 = vpow.pop %v3648
    %v3650 = vsel %vm229, %v3649, 0.0
    %3651 = vadd.xlane.f32.xlu0 %v3650
    %v3652 = vpop.xlane.xlu0 %3651
    %v3653 = vrcp.pop %v3652
    %v3654 = vmul.f32 %v3652, %v3653
    %v3655 = vsub.f32 2.0, %v3654
    %v3656 = vmul.f32 %v3653, %v3655
    %v3657 = vmul.f32 %v3649, %v3656
    %3658 = vrot.lane.b32.xlu0 %v2591, 64
    %v3659 = vpop.permute.xlu0 %3658
    %v3662 = vsel %vm229, %v3657, 0
    %3664 = vmatprep.subr.mxu0 0.0
    %3665 = vmatpush1.msra.mxu0 %v3659
    %3666 = vmatprep.subr.mxu0 0.0
    %3667 = vmatpush1.msra.mxu0 0.0
    %3668 = vmatprep.subr.mxu0 0.0
    %3669 = vmatpush1.msra.mxu0 0.0
    %3670 = vmatprep.subr.mxu0 0.0
    %3671 = vmatpush1.msra.mxu0 0.0
    %3672 = vmatprep.subr.mxu0 0.0
    %3673 = vmatpush1.msra.mxu0 0.0
    %3674 = vmatprep.subr.mxu0 0.0
    %3675 = vmatpush1.msra.mxu0 0.0
    %3676 = vmatprep.subr.mxu0 0.0
    %3677 = vmatpush1.msra.mxu0 0.0
    %3678 = vmatprep.subr.mxu0 0.0
    %3679 = vmatpush1.msra.mxu0 0.0
    %3680 = vmatprep.subr.mxu0 0.0
    %3681 = vmatpush1.msra.mxu0 0.0
    %3682 = vmatprep.subr.mxu0 0.0
    %3683 = vmatpush1.msra.mxu0 0.0
    %3684 = vmatprep.subr.mxu0 0.0
    %3685 = vmatpush1.msra.mxu0 0.0
    %3686 = vmatprep.subr.mxu0 0.0
    %3687 = vmatpush1.msra.mxu0 0.0
    %3688 = vmatprep.subr.mxu0 0.0
    %3689 = vmatpush1.msra.mxu0 0.0
    %3690 = vmatprep.subr.mxu0 0.0
    %3691 = vmatpush1.msra.mxu0 0.0
    %3692 = vmatprep.subr.mxu0 0.0
    %3693 = vmatpush1.msra.mxu0 0.0
    %3694 = vmatprep.subr.mxu0 0.0
    %3695 = vmatpush1.msra.mxu0 0.0
    %3696 = vmatprep.subr.mxu0 0.0
    %3697 = vmatpush1.msra.mxu0 0.0
    %3698 = vmatprep.subr.mxu0 0.0
    %3699 = vmatpush1.msra.mxu0 0.0
    %3700 = vmatprep.subr.mxu0 0.0
    %3701 = vmatpush1.msra.mxu0 0.0
    %3702 = vmatprep.subr.mxu0 0.0
    %3703 = vmatpush1.msra.mxu0 0.0
    %3704 = vmatprep.subr.mxu0 0.0
    %3705 = vmatpush1.msra.mxu0 0.0
    %3706 = vmatprep.subr.mxu0 0.0
    %3707 = vmatpush1.msra.mxu0 0.0
    %3708 = vmatprep.subr.mxu0 0.0
    %3709 = vmatpush1.msra.mxu0 0.0
    %3710 = vmatprep.subr.mxu0 0.0
    %3711 = vmatpush1.msra.mxu0 0.0
    %3712 = vmatprep.subr.mxu0 0.0
    %3713 = vmatpush1.msra.mxu0 0.0
    %3714 = vmatprep.subr.mxu0 0.0
    %3715 = vmatpush1.msra.mxu0 0.0
    %3716 = vmatprep.subr.mxu0 0.0
    %3717 = vmatpush1.msra.mxu0 0.0
    %3718 = vmatprep.subr.mxu0 0.0
    %3719 = vmatpush1.msra.mxu0 0.0
    %3720 = vmatprep.subr.mxu0 0.0
    %3721 = vmatpush1.msra.mxu0 0.0
    %3722 = vmatprep.subr.mxu0 0.0
    %3723 = vmatpush1.msra.mxu0 0.0
    %3724 = vmatprep.subr.mxu0 0.0
    %3725 = vmatpush1.msra.mxu0 0.0
    %3726 = vmatprep.subr.mxu0 0.0
    %3727 = vmatpush1.msra.mxu0 0.0
    %3728 = vmatprep.mubr.f32.mxu0 0.0
    %3729 = vmatmul.mubr.f32.gmra.mrb[0].mxu0 %v3662
    %v3730 = vpop.f32.mrb[0].mxu0
    %v3731 = vadd.f32 0.0, %v3730
    %v3732 = vpop.f32.mrb[0].mxu0
    %3733 = vdwg.mxu0
    %3734 = vrot.lane.b32.xlu0 %v2591, 120
    %v3735 = vpop.permute.xlu0 %3734
    %3736 = vrot.lane.b32.xlu0 %v2591, 88
    %v3737 = vpop.permute.xlu0 %3736
    %v3738 = vsel %vm229, %v3735, 0
    %v3740 = vsel %vm229, %v3737, 0
    %3742 = vmatprep.subr.mxu0 0.0
    %3743 = vmatpush1.xpose.msra.mxu0 %v3740
    %3744 = vmatprep.subr.mxu0 0.0
    %3745 = vmatpush1.xpose.msra.mxu0 0.0
    %3746 = vmatprep.subr.mxu0 0.0
    %3747 = vmatpush1.xpose.msra.mxu0 0.0
    %3748 = vmatprep.subr.mxu0 0.0
    %3749 = vmatpush1.xpose.msra.mxu0 0.0
    %3750 = vmatprep.subr.mxu0 0.0
    %3751 = vmatpush1.xpose.msra.mxu0 0.0
    %3752 = vmatprep.subr.mxu0 0.0
    %3753 = vmatpush1.xpose.msra.mxu0 0.0
    %3754 = vmatprep.subr.mxu0 0.0
    %3755 = vmatpush1.xpose.msra.mxu0 0.0
    %3756 = vmatprep.subr.mxu0 0.0
    %3757 = vmatpush1.xpose.msra.mxu0 0.0
    %3758 = vmatprep.subr.mxu0 0.0
    %3759 = vmatpush1.xpose.msra.mxu0 0.0
    %3760 = vmatprep.subr.mxu0 0.0
    %3761 = vmatpush1.xpose.msra.mxu0 0.0
    %3762 = vmatprep.subr.mxu0 0.0
    %3763 = vmatpush1.xpose.msra.mxu0 0.0
    %3764 = vmatprep.subr.mxu0 0.0
    %3765 = vmatpush1.xpose.msra.mxu0 0.0
    %3766 = vmatprep.subr.mxu0 0.0
    %3767 = vmatpush1.xpose.msra.mxu0 0.0
    %3768 = vmatprep.subr.mxu0 0.0
    %3769 = vmatpush1.xpose.msra.mxu0 0.0
    %3770 = vmatprep.subr.mxu0 0.0
    %3771 = vmatpush1.xpose.msra.mxu0 0.0
    %3772 = vmatprep.subr.mxu0 0.0
    %3773 = vmatpush1.xpose.msra.mxu0 0.0
    %3774 = vmatprep.subr.mxu0 0.0
    %3775 = vmatpush1.xpose.msra.mxu0 0.0
    %3776 = vmatprep.subr.mxu0 0.0
    %3777 = vmatpush1.xpose.msra.mxu0 0.0
    %3778 = vmatprep.subr.mxu0 0.0
    %3779 = vmatpush1.xpose.msra.mxu0 0.0
    %3780 = vmatprep.subr.mxu0 0.0
    %3781 = vmatpush1.xpose.msra.mxu0 0.0
    %3782 = vmatprep.subr.mxu0 0.0
    %3783 = vmatpush1.xpose.msra.mxu0 0.0
    %3784 = vmatprep.subr.mxu0 0.0
    %3785 = vmatpush1.xpose.msra.mxu0 0.0
    %3786 = vmatprep.subr.mxu0 0.0
    %3787 = vmatpush1.xpose.msra.mxu0 0.0
    %3788 = vmatprep.subr.mxu0 0.0
    %3789 = vmatpush1.xpose.msra.mxu0 0.0
    %3790 = vmatprep.subr.mxu0 0.0
    %3791 = vmatpush1.xpose.msra.mxu0 0.0
    %3792 = vmatprep.subr.mxu0 0.0
    %3793 = vmatpush1.xpose.msra.mxu0 0.0
    %3794 = vmatprep.subr.mxu0 0.0
    %3795 = vmatpush1.xpose.msra.mxu0 0.0
    %3796 = vmatprep.subr.mxu0 0.0
    %3797 = vmatpush1.xpose.msra.mxu0 0.0
    %3798 = vmatprep.subr.mxu0 0.0
    %3799 = vmatpush1.xpose.msra.mxu0 0.0
    %3800 = vmatprep.subr.mxu0 0.0
    %3801 = vmatpush1.xpose.msra.mxu0 0.0
    %3802 = vmatprep.subr.mxu0 0.0
    %3803 = vmatpush1.xpose.msra.mxu0 0.0
    %3804 = vmatprep.subr.mxu0 0.0
    %3805 = vmatpush1.xpose.msra.mxu0 0.0
    %3806 = vmatprep.mubr.f32.mxu0 0.0
    %3807 = vmatmul.mubr.f32.gmra.mrb[0].mxu0 %v3738
    %v3808 = vpop.f32.mrb[0].mxu0
    %v3809 = vadd.f32 0.0, %v3808
    %v3810 = vpop.f32.mrb[0].mxu0
    %3811 = vdwg.mxu0
    %v3812 = vsel %vm229, %v3809, -inf
    %3813 = vmax.xlane.f32.xlu0 %v3812
    %v3814 = vpop.xlane.xlu0 %3813
    %v3815 = vsub.f32 %v3809, %v3814
    %v3816 = vmul.f32 %v3815, 1.442695
    %v3817 = vpow.pop %v3816
    %v3818 = vsel %vm229, %v3817, 0.0
    %3819 = vadd.xlane.f32.xlu0 %v3818
    %v3820 = vpop.xlane.xlu0 %3819
    %v3821 = vrcp.pop %v3820
    %v3822 = vmul.f32 %v3820, %v3821
    %v3823 = vsub.f32 2.0, %v3822
    %v3824 = vmul.f32 %v3821, %v3823
    %v3825 = vmul.f32 %v3817, %v3824
    %3826 = vrot.lane.b32.xlu0 %v2591, 56
    %v3827 = vpop.permute.xlu0 %3826
    %v3830 = vsel %vm229, %v3825, 0
    %3832 = vmatprep.subr.mxu0 0.0
    %3833 = vmatpush1.msra.mxu0 %v3827
    %3834 = vmatprep.subr.mxu0 0.0
    %3835 = vmatpush1.msra.mxu0 0.0
    %3836 = vmatprep.subr.mxu0 0.0
    %3837 = vmatpush1.msra.mxu0 0.0
    %3838 = vmatprep.subr.mxu0 0.0
    %3839 = vmatpush1.msra.mxu0 0.0
    %3840 = vmatprep.subr.mxu0 0.0
    %3841 = vmatpush1.msra.mxu0 0.0
    %3842 = vmatprep.subr.mxu0 0.0
    %3843 = vmatpush1.msra.mxu0 0.0
    %3844 = vmatprep.subr.mxu0 0.0
    %3845 = vmatpush1.msra.mxu0 0.0
    %3846 = vmatprep.subr.mxu0 0.0
    %3847 = vmatpush1.msra.mxu0 0.0
    %3848 = vmatprep.subr.mxu0 0.0
    %3849 = vmatpush1.msra.mxu0 0.0
    %3850 = vmatprep.subr.mxu0 0.0
    %3851 = vmatpush1.msra.mxu0 0.0
    %3852 = vmatprep.subr.mxu0 0.0
    %3853 = vmatpush1.msra.mxu0 0.0
    %3854 = vmatprep.subr.mxu0 0.0
    %3855 = vmatpush1.msra.mxu0 0.0
    %3856 = vmatprep.subr.mxu0 0.0
    %3857 = vmatpush1.msra.mxu0 0.0
    %3858 = vmatprep.subr.mxu0 0.0
    %3859 = vmatpush1.msra.mxu0 0.0
    %3860 = vmatprep.subr.mxu0 0.0
    %3861 = vmatpush1.msra.mxu0 0.0
    %3862 = vmatprep.subr.mxu0 0.0
    %3863 = vmatpush1.msra.mxu0 0.0
    %3864 = vmatprep.subr.mxu0 0.0
    %3865 = vmatpush1.msra.mxu0 0.0
    %3866 = vmatprep.subr.mxu0 0.0
    %3867 = vmatpush1.msra.mxu0 0.0
    %3868 = vmatprep.subr.mxu0 0.0
    %3869 = vmatpush1.msra.mxu0 0.0
    %3870 = vmatprep.subr.mxu0 0.0
    %3871 = vmatpush1.msra.mxu0 0.0
    %3872 = vmatprep.subr.mxu0 0.0
    %3873 = vmatpush1.msra.mxu0 0.0
    %3874 = vmatprep.subr.mxu0 0.0
    %3875 = vmatpush1.msra.mxu0 0.0
    %3876 = vmatprep.subr.mxu0 0.0
    %3877 = vmatpush1.msra.mxu0 0.0
    %3878 = vmatprep.subr.mxu0 0.0
    %3879 = vmatpush1.msra.mxu0 0.0
    %3880 = vmatprep.subr.mxu0 0.0
    %3881 = vmatpush1.msra.mxu0 0.0
    %3882 = vmatprep.subr.mxu0 0.0
    %3883 = vmatpush1.msra.mxu0 0.0
    %3884 = vmatprep.subr.mxu0 0.0
    %3885 = vmatpush1.msra.mxu0 0.0
    %3886 = vmatprep.subr.mxu0 0.0
    %3887 = vmatpush1.msra.mxu0 0.0
    %3888 = vmatprep.subr.mxu0 0.0
    %3889 = vmatpush1.msra.mxu0 0.0
    %3890 = vmatprep.subr.mxu0 0.0
    %3891 = vmatpush1.msra.mxu0 0.0
    %3892 = vmatprep.subr.mxu0 0.0
    %3893 = vmatpush1.msra.mxu0 0.0
    %3894 = vmatprep.subr.mxu0 0.0
    %3895 = vmatpush1.msra.mxu0 0.0
    %3896 = vmatprep.mubr.f32.mxu0 0.0
    %3897 = vmatmul.mubr.f32.gmra.mrb[0].mxu0 %v3830
    %v3898 = vpop.f32.mrb[0].mxu0
    %v3899 = vadd.f32 0.0, %v3898
    %v3900 = vpop.f32.mrb[0].mxu0
    %3901 = vdwg.mxu0
    %v3903 = vsel %vm229, %v3899, 0
    %3905 = vmatprep.subr.mxu0 0.0
    %3906 = vmatpush1.msra.mxu0 %v2932
    %3907 = vmatprep.subr.mxu0 0.0
    %3908 = vmatpush1.msra.mxu0 0.0
    %3909 = vmatprep.subr.mxu0 0.0
    %3910 = vmatpush1.msra.mxu0 0.0
    %3911 = vmatprep.subr.mxu0 0.0
    %3912 = vmatpush1.msra.mxu0 0.0
    %3913 = vmatprep.subr.mxu0 0.0
    %3914 = vmatpush1.msra.mxu0 0.0
    %3915 = vmatprep.subr.mxu0 0.0
    %3916 = vmatpush1.msra.mxu0 0.0
    %3917 = vmatprep.subr.mxu0 0.0
    %3918 = vmatpush1.msra.mxu0 0.0
    %3919 = vmatprep.subr.mxu0 0.0
    %3920 = vmatpush1.msra.mxu0 0.0
    %3921 = vmatprep.subr.mxu0 0.0
    %3922 = vmatpush1.msra.mxu0 0.0
    %3923 = vmatprep.subr.mxu0 0.0
    %3924 = vmatpush1.msra.mxu0 0.0
    %3925 = vmatprep.subr.mxu0 0.0
    %3926 = vmatpush1.msra.mxu0 0.0
    %3927 = vmatprep.subr.mxu0 0.0
    %3928 = vmatpush1.msra.mxu0 0.0
    %3929 = vmatprep.subr.mxu0 0.0
    %3930 = vmatpush1.msra.mxu0 0.0
    %3931 = vmatprep.subr.mxu0 0.0
    %3932 = vmatpush1.msra.mxu0 0.0
    %3933 = vmatprep.subr.mxu0 0.0
    %3934 = vmatpush1.msra.mxu0 0.0
    %3935 = vmatprep.subr.mxu0 0.0
    %3936 = vmatpush1.msra.mxu0 0.0
    %3937 = vmatprep.subr.mxu0 0.0
    %3938 = vmatpush1.msra.mxu0 0.0
    %3939 = vmatprep.subr.mxu0 0.0
    %3940 = vmatpush1.msra.mxu0 0.0
    %3941 = vmatprep.subr.mxu0 0.0
    %3942 = vmatpush1.msra.mxu0 0.0
    %3943 = vmatprep.subr.mxu0 0.0
    %3944 = vmatpush1.msra.mxu0 0.0
    %3945 = vmatprep.subr.mxu0 0.0
    %3946 = vmatpush1.msra.mxu0 0.0
    %3947 = vmatprep.subr.mxu0 0.0
    %3948 = vmatpush1.msra.mxu0 0.0
    %3949 = vmatprep.subr.mxu0 0.0
    %3950 = vmatpush1.msra.mxu0 0.0
    %3951 = vmatprep.subr.mxu0 0.0
    %3952 = vmatpush1.msra.mxu0 0.0
    %3953 = vmatprep.subr.mxu0 0.0
    %3954 = vmatpush1.msra.mxu0 0.0
    %3955 = vmatprep.subr.mxu0 0.0
    %3956 = vmatpush1.msra.mxu0 0.0
    %3957 = vmatprep.subr.mxu0 0.0
    %3958 = vmatpush1.msra.mxu0 0.0
    %3959 = vmatprep.subr.mxu0 0.0
    %3960 = vmatpush1.msra.mxu0 0.0
    %3961 = vmatprep.subr.mxu0 0.0
    %3962 = vmatpush1.msra.mxu0 0.0
    %3963 = vmatprep.subr.mxu0 0.0
    %3964 = vmatpush1.msra.mxu0 0.0
    %3965 = vmatprep.subr.mxu0 0.0
    %3966 = vmatpush1.msra.mxu0 0.0
    %3967 = vmatprep.subr.mxu0 0.0
    %3968 = vmatpush1.msra.mxu0 0.0
    %3969 = vmatprep.mubr.f32.mxu0 0.0
    %3970 = vmatmul.mubr.f32.gmra.mrb[0].mxu0 %v3903
    %v3971 = vpop.f32.mrb[0].mxu0
    %v3972 = vadd.f32 0.0, %v3971
    %v3973 = vpop.f32.mrb[0].mxu0
    %3974 = vdwg.mxu0
    %v3976 = vsel %vm229, %v3731, 0
    %3978 = vmatprep.subr.mxu0 0.0
    %3979 = vmatpush1.msra.mxu0 %v2762
    %3980 = vmatprep.subr.mxu0 0.0
    %3981 = vmatpush1.msra.mxu0 0.0
    %3982 = vmatprep.subr.mxu0 0.0
    %3983 = vmatpush1.msra.mxu0 0.0
    %3984 = vmatprep.subr.mxu0 0.0
    %3985 = vmatpush1.msra.mxu0 0.0
    %3986 = vmatprep.subr.mxu0 0.0
    %3987 = vmatpush1.msra.mxu0 0.0
    %3988 = vmatprep.subr.mxu0 0.0
    %3989 = vmatpush1.msra.mxu0 0.0
    %3990 = vmatprep.subr.mxu0 0.0
    %3991 = vmatpush1.msra.mxu0 0.0
    %3992 = vmatprep.subr.mxu0 0.0
    %3993 = vmatpush1.msra.mxu0 0.0
    %3994 = vmatprep.subr.mxu0 0.0
    %3995 = vmatpush1.msra.mxu0 0.0
    %3996 = vmatprep.subr.mxu0 0.0
    %3997 = vmatpush1.msra.mxu0 0.0
    %3998 = vmatprep.subr.mxu0 0.0
    %3999 = vmatpush1.msra.mxu0 0.0
    %4000 = vmatprep.subr.mxu0 0.0
    %4001 = vmatpush1.msra.mxu0 0.0
    %4002 = vmatprep.subr.mxu0 0.0
    %4003 = vmatpush1.msra.mxu0 0.0
    %4004 = vmatprep.subr.mxu0 0.0
    %4005 = vmatpush1.msra.mxu0 0.0
    %4006 = vmatprep.subr.mxu0 0.0
    %4007 = vmatpush1.msra.mxu0 0.0
    %4008 = vmatprep.subr.mxu0 0.0
    %4009 = vmatpush1.msra.mxu0 0.0
    %4010 = vmatprep.subr.mxu0 0.0
    %4011 = vmatpush1.msra.mxu0 0.0
    %4012 = vmatprep.subr.mxu0 0.0
    %4013 = vmatpush1.msra.mxu0 0.0
    %4014 = vmatprep.subr.mxu0 0.0
    %4015 = vmatpush1.msra.mxu0 0.0
    %4016 = vmatprep.subr.mxu0 0.0
    %4017 = vmatpush1.msra.mxu0 0.0
    %4018 = vmatprep.subr.mxu0 0.0
    %4019 = vmatpush1.msra.mxu0 0.0
    %4020 = vmatprep.subr.mxu0 0.0
    %4021 = vmatpush1.msra.mxu0 0.0
    %4022 = vmatprep.subr.mxu0 0.0
    %4023 = vmatpush1.msra.mxu0 0.0
    %4024 = vmatprep.subr.mxu0 0.0
    %4025 = vmatpush1.msra.mxu0 0.0
    %4026 = vmatprep.subr.mxu0 0.0
    %4027 = vmatpush1.msra.mxu0 0.0
    %4028 = vmatprep.subr.mxu0 0.0
    %4029 = vmatpush1.msra.mxu0 0.0
    %4030 = vmatprep.subr.mxu0 0.0
    %4031 = vmatpush1.msra.mxu0 0.0
    %4032 = vmatprep.subr.mxu0 0.0
    %4033 = vmatpush1.msra.mxu0 0.0
    %4034 = vmatprep.subr.mxu0 0.0
    %4035 = vmatpush1.msra.mxu0 0.0
    %4036 = vmatprep.subr.mxu0 0.0
    %4037 = vmatpush1.msra.mxu0 0.0
    %4038 = vmatprep.subr.mxu0 0.0
    %4039 = vmatpush1.msra.mxu0 0.0
    %4040 = vmatprep.subr.mxu0 0.0
    %4041 = vmatpush1.msra.mxu0 0.0
    %4042 = vmatprep.mubr.f32.mxu0 0.0
    %4043 = vmatmul.mubr.f32.gmra.mrb[0].mxu0 %v3976
    %v4044 = vpop.f32.mrb[0].mxu0
    %v4045 = vadd.f32 %v3972, %v4044
    %v4046 = vpop.f32.mrb[0].mxu0
    %4047 = vdwg.mxu0
    %4048 = vrot.lane.b32.xlu0 %v2591, 112
    %v4049 = vpop.permute.xlu0 %4048
    %4050 = vrot.lane.b32.xlu0 %v2591, 80
    %v4051 = vpop.permute.xlu0 %4050
    %v4052 = vsel %vm229, %v4049, 0
    %v4054 = vsel %vm229, %v4051, 0
    %4056 = vmatprep.subr.mxu0 0.0
    %4057 = vmatpush1.xpose.msra.mxu0 %v4054
    %4058 = vmatprep.subr.mxu0 0.0
    %4059 = vmatpush1.xpose.msra.mxu0 0.0
    %4060 = vmatprep.subr.mxu0 0.0
    %4061 = vmatpush1.xpose.msra.mxu0 0.0
    %4062 = vmatprep.subr.mxu0 0.0
    %4063 = vmatpush1.xpose.msra.mxu0 0.0
    %4064 = vmatprep.subr.mxu0 0.0
    %4065 = vmatpush1.xpose.msra.mxu0 0.0
    %4066 = vmatprep.subr.mxu0 0.0
    %4067 = vmatpush1.xpose.msra.mxu0 0.0
    %4068 = vmatprep.subr.mxu0 0.0
    %4069 = vmatpush1.xpose.msra.mxu0 0.0
    %4070 = vmatprep.subr.mxu0 0.0
    %4071 = vmatpush1.xpose.msra.mxu0 0.0
    %4072 = vmatprep.subr.mxu0 0.0
    %4073 = vmatpush1.xpose.msra.mxu0 0.0
    %4074 = vmatprep.subr.mxu0 0.0
    %4075 = vmatpush1.xpose.msra.mxu0 0.0
    %4076 = vmatprep.subr.mxu0 0.0
    %4077 = vmatpush1.xpose.msra.mxu0 0.0
    %4078 = vmatprep.subr.mxu0 0.0
    %4079 = vmatpush1.xpose.msra.mxu0 0.0
    %4080 = vmatprep.subr.mxu0 0.0
    %4081 = vmatpush1.xpose.msra.mxu0 0.0
    %4082 = vmatprep.subr.mxu0 0.0
    %4083 = vmatpush1.xpose.msra.mxu0 0.0
    %4084 = vmatprep.subr.mxu0 0.0
    %4085 = vmatpush1.xpose.msra.mxu0 0.0
    %4086 = vmatprep.subr.mxu0 0.0
    %4087 = vmatpush1.xpose.msra.mxu0 0.0
    %4088 = vmatprep.subr.mxu0 0.0
    %4089 = vmatpush1.xpose.msra.mxu0 0.0
    %4090 = vmatprep.subr.mxu0 0.0
    %4091 = vmatpush1.xpose.msra.mxu0 0.0
    %4092 = vmatprep.subr.mxu0 0.0
    %4093 = vmatpush1.xpose.msra.mxu0 0.0
    %4094 = vmatprep.subr.mxu0 0.0
    %4095 = vmatpush1.xpose.msra.mxu0 0.0
    %4096 = vmatprep.subr.mxu0 0.0
    %4097 = vmatpush1.xpose.msra.mxu0 0.0
    %4098 = vmatprep.subr.mxu0 0.0
    %4099 = vmatpush1.xpose.msra.mxu0 0.0
    %4100 = vmatprep.subr.mxu0 0.0
    %4101 = vmatpush1.xpose.msra.mxu0 0.0
    %4102 = vmatprep.subr.mxu0 0.0
    %4103 = vmatpush1.xpose.msra.mxu0 0.0
    %4104 = vmatprep.subr.mxu0 0.0
    %4105 = vmatpush1.xpose.msra.mxu0 0.0
    %4106 = vmatprep.subr.mxu0 0.0
    %4107 = vmatpush1.xpose.msra.mxu0 0.0
    %4108 = vmatprep.subr.mxu0 0.0
    %4109 = vmatpush1.xpose.msra.mxu0 0.0
    %4110 = vmatprep.subr.mxu0 0.0
    %4111 = vmatpush1.xpose.msra.mxu0 0.0
    %4112 = vmatprep.subr.mxu0 0.0
    %4113 = vmatpush1.xpose.msra.mxu0 0.0
    %4114 = vmatprep.subr.mxu0 0.0
    %4115 = vmatpush1.xpose.msra.mxu0 0.0
    %4116 = vmatprep.subr.mxu0 0.0
    %4117 = vmatpush1.xpose.msra.mxu0 0.0
    %4118 = vmatprep.subr.mxu0 0.0
    %4119 = vmatpush1.xpose.msra.mxu0 0.0
    %4120 = vmatprep.mubr.f32.mxu0 0.0
    %4121 = vmatmul.mubr.f32.gmra.mrb[0].mxu0 %v4052
    %v4122 = vpop.f32.mrb[0].mxu0
    %v4123 = vadd.f32 0.0, %v4122
    %v4124 = vpop.f32.mrb[0].mxu0
    %4125 = vdwg.mxu0
    %v4126 = vsel %vm229, %v4123, -inf
    %4127 = vmax.xlane.f32.xlu0 %v4126
    %v4128 = vpop.xlane.xlu0 %4127
    %v4129 = vsub.f32 %v4123, %v4128
    %v4130 = vmul.f32 %v4129, 1.442695
    %v4131 = vpow.pop %v4130
    %v4132 = vsel %vm229, %v4131, 0.0
    %4133 = vadd.xlane.f32.xlu0 %v4132
    %v4134 = vpop.xlane.xlu0 %4133
    %v4135 = vrcp.pop %v4134
    %v4136 = vmul.f32 %v4134, %v4135
    %v4137 = vsub.f32 2.0, %v4136
    %v4138 = vmul.f32 %v4135, %v4137
    %v4139 = vmul.f32 %v4131, %v4138
    %4140 = vrot.lane.b32.xlu0 %v2591, 48
    %v4141 = vpop.permute.xlu0 %4140
    %v4144 = vsel %vm229, %v4139, 0
    %4146 = vmatprep.subr.mxu0 0.0
    %4147 = vmatpush1.msra.mxu0 %v4141
    %4148 = vmatprep.subr.mxu0 0.0
    %4149 = vmatpush1.msra.mxu0 0.0
    %4150 = vmatprep.subr.mxu0 0.0
    %4151 = vmatpush1.msra.mxu0 0.0
    %4152 = vmatprep.subr.mxu0 0.0
    %4153 = vmatpush1.msra.mxu0 0.0
    %4154 = vmatprep.subr.mxu0 0.0
    %4155 = vmatpush1.msra.mxu0 0.0
    %4156 = vmatprep.subr.mxu0 0.0
    %4157 = vmatpush1.msra.mxu0 0.0
    %4158 = vmatprep.subr.mxu0 0.0
    %4159 = vmatpush1.msra.mxu0 0.0
    %4160 = vmatprep.subr.mxu0 0.0
    %4161 = vmatpush1.msra.mxu0 0.0
    %4162 = vmatprep.subr.mxu0 0.0
    %4163 = vmatpush1.msra.mxu0 0.0
    %4164 = vmatprep.subr.mxu0 0.0
    %4165 = vmatpush1.msra.mxu0 0.0
    %4166 = vmatprep.subr.mxu0 0.0
    %4167 = vmatpush1.msra.mxu0 0.0
    %4168 = vmatprep.subr.mxu0 0.0
    %4169 = vmatpush1.msra.mxu0 0.0
    %4170 = vmatprep.subr.mxu0 0.0
    %4171 = vmatpush1.msra.mxu0 0.0
    %4172 = vmatprep.subr.mxu0 0.0
    %4173 = vmatpush1.msra.mxu0 0.0
    %4174 = vmatprep.subr.mxu0 0.0
    %4175 = vmatpush1.msra.mxu0 0.0
    %4176 = vmatprep.subr.mxu0 0.0
    %4177 = vmatpush1.msra.mxu0 0.0
    %4178 = vmatprep.subr.mxu0 0.0
    %4179 = vmatpush1.msra.mxu0 0.0
    %4180 = vmatprep.subr.mxu0 0.0
    %4181 = vmatpush1.msra.mxu0 0.0
    %4182 = vmatprep.subr.mxu0 0.0
    %4183 = vmatpush1.msra.mxu0 0.0
    %4184 = vmatprep.subr.mxu0 0.0
    %4185 = vmatpush1.msra.mxu0 0.0
    %4186 = vmatprep.subr.mxu0 0.0
    %4187 = vmatpush1.msra.mxu0 0.0
    %4188 = vmatprep.subr.mxu0 0.0
    %4189 = vmatpush1.msra.mxu0 0.0
    %4190 = vmatprep.subr.mxu0 0.0
    %4191 = vmatpush1.msra.mxu0 0.0
    %4192 = vmatprep.subr.mxu0 0.0
    %4193 = vmatpush1.msra.mxu0 0.0
    %4194 = vmatprep.subr.mxu0 0.0
    %4195 = vmatpush1.msra.mxu0 0.0
    %4196 = vmatprep.subr.mxu0 0.0
    %4197 = vmatpush1.msra.mxu0 0.0
    %4198 = vmatprep.subr.mxu0 0.0
    %4199 = vmatpush1.msra.mxu0 0.0
    %4200 = vmatprep.subr.mxu0 0.0
    %4201 = vmatpush1.msra.mxu0 0.0
    %4202 = vmatprep.subr.mxu0 0.0
    %4203 = vmatpush1.msra.mxu0 0.0
    %4204 = vmatprep.subr.mxu0 0.0
    %4205 = vmatpush1.msra.mxu0 0.0
    %4206 = vmatprep.subr.mxu0 0.0
    %4207 = vmatpush1.msra.mxu0 0.0
    %4208 = vmatprep.subr.mxu0 0.0
    %4209 = vmatpush1.msra.mxu0 0.0
    %4210 = vmatprep.mubr.f32.mxu0 0.0
    %4211 = vmatmul.mubr.f32.gmra.mrb[0].mxu0 %v4144
    %v4212 = vpop.f32.mrb[0].mxu0
    %v4213 = vadd.f32 0.0, %v4212
    %v4214 = vpop.f32.mrb[0].mxu0
    %4215 = vdwg.mxu0
    %v4217 = vsel %vm229, %v4213, 0
    %4219 = vmatprep.subr.mxu0 0.0
    %4220 = vmatpush1.msra.mxu0 %v3248
    %4221 = vmatprep.subr.mxu0 0.0
    %4222 = vmatpush1.msra.mxu0 0.0
    %4223 = vmatprep.subr.mxu0 0.0
    %4224 = vmatpush1.msra.mxu0 0.0
    %4225 = vmatprep.subr.mxu0 0.0
    %4226 = vmatpush1.msra.mxu0 0.0
    %4227 = vmatprep.subr.mxu0 0.0
    %4228 = vmatpush1.msra.mxu0 0.0
    %4229 = vmatprep.subr.mxu0 0.0
    %4230 = vmatpush1.msra.mxu0 0.0
    %4231 = vmatprep.subr.mxu0 0.0
    %4232 = vmatpush1.msra.mxu0 0.0
    %4233 = vmatprep.subr.mxu0 0.0
    %4234 = vmatpush1.msra.mxu0 0.0
    %4235 = vmatprep.subr.mxu0 0.0
    %4236 = vmatpush1.msra.mxu0 0.0
    %4237 = vmatprep.subr.mxu0 0.0
    %4238 = vmatpush1.msra.mxu0 0.0
    %4239 = vmatprep.subr.mxu0 0.0
    %4240 = vmatpush1.msra.mxu0 0.0
    %4241 = vmatprep.subr.mxu0 0.0
    %4242 = vmatpush1.msra.mxu0 0.0
    %4243 = vmatprep.subr.mxu0 0.0
    %4244 = vmatpush1.msra.mxu0 0.0
    %4245 = vmatprep.subr.mxu0 0.0
    %4246 = vmatpush1.msra.mxu0 0.0
    %4247 = vmatprep.subr.mxu0 0.0
    %4248 = vmatpush1.msra.mxu0 0.0
    %4249 = vmatprep.subr.mxu0 0.0
    %4250 = vmatpush1.msra.mxu0 0.0
    %4251 = vmatprep.subr.mxu0 0.0
    %4252 = vmatpush1.msra.mxu0 0.0
    %4253 = vmatprep.subr.mxu0 0.0
    %4254 = vmatpush1.msra.mxu0 0.0
    %4255 = vmatprep.subr.mxu0 0.0
    %4256 = vmatpush1.msra.mxu0 0.0
    %4257 = vmatprep.subr.mxu0 0.0
    %4258 = vmatpush1.msra.mxu0 0.0
    %4259 = vmatprep.subr.mxu0 0.0
    %4260 = vmatpush1.msra.mxu0 0.0
    %4261 = vmatprep.subr.mxu0 0.0
    %4262 = vmatpush1.msra.mxu0 0.0
    %4263 = vmatprep.subr.mxu0 0.0
    %4264 = vmatpush1.msra.mxu0 0.0
    %4265 = vmatprep.subr.mxu0 0.0
    %4266 = vmatpush1.msra.mxu0 0.0
    %4267 = vmatprep.subr.mxu0 0.0
    %4268 = vmatpush1.msra.mxu0 0.0
    %4269 = vmatprep.subr.mxu0 0.0
    %4270 = vmatpush1.msra.mxu0 0.0
    %4271 = vmatprep.subr.mxu0 0.0
    %4272 = vmatpush1.msra.mxu0 0.0
    %4273 = vmatprep.subr.mxu0 0.0
    %4274 = vmatpush1.msra.mxu0 0.0
    %4275 = vmatprep.subr.mxu0 0.0
    %4276 = vmatpush1.msra.mxu0 0.0
    %4277 = vmatprep.subr.mxu0 0.0
    %4278 = vmatpush1.msra.mxu0 0.0
    %4279 = vmatprep.subr.mxu0 0.0
    %4280 = vmatpush1.msra.mxu0 0.0
    %4281 = vmatprep.subr.mxu0 0.0
    %4282 = vmatpush1.msra.mxu0 0.0
    %4283 = vmatprep.mubr.f32.mxu0 0.0
    %4284 = vmatmul.mubr.f32.gmra.mrb[0].mxu0 %v4217
    %v4285 = vpop.f32.mrb[0].mxu0
    %v4286 = vadd.f32 0.0, %v4285
    %v4287 = vpop.f32.mrb[0].mxu0
    %4288 = vdwg.mxu0
    %v4289 = vadd.f32 %v4045, %v4286
    %4290 = vrot.lane.b32.xlu0 %v2591, 104
    %v4291 = vpop.permute.xlu0 %4290
    %4292 = vrot.lane.b32.xlu0 %v2591, 72
    %v4293 = vpop.permute.xlu0 %4292
    %v4294 = vsel %vm229, %v4291, 0
    %v4296 = vsel %vm229, %v4293, 0
    %4298 = vmatprep.subr.mxu0 0.0
    %4299 = vmatpush1.xpose.msra.mxu0 %v4296
    %4300 = vmatprep.subr.mxu0 0.0
    %4301 = vmatpush1.xpose.msra.mxu0 0.0
    %4302 = vmatprep.subr.mxu0 0.0
    %4303 = vmatpush1.xpose.msra.mxu0 0.0
    %4304 = vmatprep.subr.mxu0 0.0
    %4305 = vmatpush1.xpose.msra.mxu0 0.0
    %4306 = vmatprep.subr.mxu0 0.0
    %4307 = vmatpush1.xpose.msra.mxu0 0.0
    %4308 = vmatprep.subr.mxu0 0.0
    %4309 = vmatpush1.xpose.msra.mxu0 0.0
    %4310 = vmatprep.subr.mxu0 0.0
    %4311 = vmatpush1.xpose.msra.mxu0 0.0
    %4312 = vmatprep.subr.mxu0 0.0
    %4313 = vmatpush1.xpose.msra.mxu0 0.0
    %4314 = vmatprep.subr.mxu0 0.0
    %4315 = vmatpush1.xpose.msra.mxu0 0.0
    %4316 = vmatprep.subr.mxu0 0.0
    %4317 = vmatpush1.xpose.msra.mxu0 0.0
    %4318 = vmatprep.subr.mxu0 0.0
    %4319 = vmatpush1.xpose.msra.mxu0 0.0
    %4320 = vmatprep.subr.mxu0 0.0
    %4321 = vmatpush1.xpose.msra.mxu0 0.0
    %4322 = vmatprep.subr.mxu0 0.0
    %4323 = vmatpush1.xpose.msra.mxu0 0.0
    %4324 = vmatprep.subr.mxu0 0.0
    %4325 = vmatpush1.xpose.msra.mxu0 0.0
    %4326 = vmatprep.subr.mxu0 0.0
    %4327 = vmatpush1.xpose.msra.mxu0 0.0
    %4328 = vmatprep.subr.mxu0 0.0
    %4329 = vmatpush1.xpose.msra.mxu0 0.0
    %4330 = vmatprep.subr.mxu0 0.0
    %4331 = vmatpush1.xpose.msra.mxu0 0.0
    %4332 = vmatprep.subr.mxu0 0.0
    %4333 = vmatpush1.xpose.msra.mxu0 0.0
    %4334 = vmatprep.subr.mxu0 0.0
    %4335 = vmatpush1.xpose.msra.mxu0 0.0
    %4336 = vmatprep.subr.mxu0 0.0
    %4337 = vmatpush1.xpose.msra.mxu0 0.0
    %4338 = vmatprep.subr.mxu0 0.0
    %4339 = vmatpush1.xpose.msra.mxu0 0.0
    %4340 = vmatprep.subr.mxu0 0.0
    %4341 = vmatpush1.xpose.msra.mxu0 0.0
    %4342 = vmatprep.subr.mxu0 0.0
    %4343 = vmatpush1.xpose.msra.mxu0 0.0
    %4344 = vmatprep.subr.mxu0 0.0
    %4345 = vmatpush1.xpose.msra.mxu0 0.0
    %4346 = vmatprep.subr.mxu0 0.0
    %4347 = vmatpush1.xpose.msra.mxu0 0.0
    %4348 = vmatprep.subr.mxu0 0.0
    %4349 = vmatpush1.xpose.msra.mxu0 0.0
    %4350 = vmatprep.subr.mxu0 0.0
    %4351 = vmatpush1.xpose.msra.mxu0 0.0
    %4352 = vmatprep.subr.mxu0 0.0
    %4353 = vmatpush1.xpose.msra.mxu0 0.0
    %4354 = vmatprep.subr.mxu0 0.0
    %4355 = vmatpush1.xpose.msra.mxu0 0.0
    %4356 = vmatprep.subr.mxu0 0.0
    %4357 = vmatpush1.xpose.msra.mxu0 0.0
    %4358 = vmatprep.subr.mxu0 0.0
    %4359 = vmatpush1.xpose.msra.mxu0 0.0
    %4360 = vmatprep.subr.mxu0 0.0
    %4361 = vmatpush1.xpose.msra.mxu0 0.0
    %4362 = vmatprep.mubr.f32.mxu0 0.0
    %4363 = vmatmul.mubr.f32.gmra.mrb[0].mxu0 %v4294
    %v4364 = vpop.f32.mrb[0].mxu0
    %v4365 = vadd.f32 0.0, %v4364
    %v4366 = vpop.f32.mrb[0].mxu0
    %4367 = vdwg.mxu0
    %v4368 = vsel %vm229, %v4365, -inf
    %4369 = vmax.xlane.f32.xlu0 %v4368
    %v4370 = vpop.xlane.xlu0 %4369
    %v4371 = vsub.f32 %v4365, %v4370
    %v4372 = vmul.f32 %v4371, 1.442695
    %v4373 = vpow.pop %v4372
    %v4374 = vsel %vm229, %v4373, 0.0
    %4375 = vadd.xlane.f32.xlu0 %v4374
    %v4376 = vpop.xlane.xlu0 %4375
    %v4377 = vrcp.pop %v4376
    %v4378 = vmul.f32 %v4376, %v4377
    %v4379 = vsub.f32 2.0, %v4378
    %v4380 = vmul.f32 %v4377, %v4379
    %v4381 = vmul.f32 %v4373, %v4380
    %4382 = vrot.lane.b32.xlu0 %v2591, 40
    %v4383 = vpop.permute.xlu0 %4382
    %v4386 = vsel %vm229, %v4381, 0
    %4388 = vmatprep.subr.mxu0 0.0
    %4389 = vmatpush1.msra.mxu0 %v4383
    %4390 = vmatprep.subr.mxu0 0.0
    %4391 = vmatpush1.msra.mxu0 0.0
    %4392 = vmatprep.subr.mxu0 0.0
    %4393 = vmatpush1.msra.mxu0 0.0
    %4394 = vmatprep.subr.mxu0 0.0
    %4395 = vmatpush1.msra.mxu0 0.0
    %4396 = vmatprep.subr.mxu0 0.0
    %4397 = vmatpush1.msra.mxu0 0.0
    %4398 = vmatprep.subr.mxu0 0.0
    %4399 = vmatpush1.msra.mxu0 0.0
    %4400 = vmatprep.subr.mxu0 0.0
    %4401 = vmatpush1.msra.mxu0 0.0
    %4402 = vmatprep.subr.mxu0 0.0
    %4403 = vmatpush1.msra.mxu0 0.0
    %4404 = vmatprep.subr.mxu0 0.0
    %4405 = vmatpush1.msra.mxu0 0.0
    %4406 = vmatprep.subr.mxu0 0.0
    %4407 = vmatpush1.msra.mxu0 0.0
    %4408 = vmatprep.subr.mxu0 0.0
    %4409 = vmatpush1.msra.mxu0 0.0
    %4410 = vmatprep.subr.mxu0 0.0
    %4411 = vmatpush1.msra.mxu0 0.0
    %4412 = vmatprep.subr.mxu0 0.0
    %4413 = vmatpush1.msra.mxu0 0.0
    %4414 = vmatprep.subr.mxu0 0.0
    %4415 = vmatpush1.msra.mxu0 0.0
    %4416 = vmatprep.subr.mxu0 0.0
    %4417 = vmatpush1.msra.mxu0 0.0
    %4418 = vmatprep.subr.mxu0 0.0
    %4419 = vmatpush1.msra.mxu0 0.0
    %4420 = vmatprep.subr.mxu0 0.0
    %4421 = vmatpush1.msra.mxu0 0.0
    %4422 = vmatprep.subr.mxu0 0.0
    %4423 = vmatpush1.msra.mxu0 0.0
    %4424 = vmatprep.subr.mxu0 0.0
    %4425 = vmatpush1.msra.mxu0 0.0
    %4426 = vmatprep.subr.mxu0 0.0
    %4427 = vmatpush1.msra.mxu0 0.0
    %4428 = vmatprep.subr.mxu0 0.0
    %4429 = vmatpush1.msra.mxu0 0.0
    %4430 = vmatprep.subr.mxu0 0.0
    %4431 = vmatpush1.msra.mxu0 0.0
    %4432 = vmatprep.subr.mxu0 0.0
    %4433 = vmatpush1.msra.mxu0 0.0
    %4434 = vmatprep.subr.mxu0 0.0
    %4435 = vmatpush1.msra.mxu0 0.0
    %4436 = vmatprep.subr.mxu0 0.0
    %4437 = vmatpush1.msra.mxu0 0.0
    %4438 = vmatprep.subr.mxu0 0.0
    %4439 = vmatpush1.msra.mxu0 0.0
    %4440 = vmatprep.subr.mxu0 0.0
    %4441 = vmatpush1.msra.mxu0 0.0
    %4442 = vmatprep.subr.mxu0 0.0
    %4443 = vmatpush1.msra.mxu0 0.0
    %4444 = vmatprep.subr.mxu0 0.0
    %4445 = vmatpush1.msra.mxu0 0.0
    %4446 = vmatprep.subr.mxu0 0.0
    %4447 = vmatpush1.msra.mxu0 0.0
    %4448 = vmatprep.subr.mxu0 0.0
    %4449 = vmatpush1.msra.mxu0 0.0
    %4450 = vmatprep.subr.mxu0 0.0
    %4451 = vmatpush1.msra.mxu0 0.0
    %4452 = vmatprep.mubr.f32.mxu0 0.0
    %4453 = vmatmul.mubr.f32.gmra.mrb[0].mxu0 %v4386
    %v4454 = vpop.f32.mrb[0].mxu0
    %v4455 = vadd.f32 0.0, %v4454
    %v4456 = vpop.f32.mrb[0].mxu0
    %4457 = vdwg.mxu0
    %v4459 = vsel %vm229, %v4455, 0
    %4461 = vmatprep.subr.mxu0 0.0
    %4462 = vmatpush1.msra.mxu0 %v3492
    %4463 = vmatprep.subr.mxu0 0.0
    %4464 = vmatpush1.msra.mxu0 0.0
    %4465 = vmatprep.subr.mxu0 0.0
    %4466 = vmatpush1.msra.mxu0 0.0
    %4467 = vmatprep.subr.mxu0 0.0
    %4468 = vmatpush1.msra.mxu0 0.0
    %4469 = vmatprep.subr.mxu0 0.0
    %4470 = vmatpush1.msra.mxu0 0.0
    %4471 = vmatprep.subr.mxu0 0.0
    %4472 = vmatpush1.msra.mxu0 0.0
    %4473 = vmatprep.subr.mxu0 0.0
    %4474 = vmatpush1.msra.mxu0 0.0
    %4475 = vmatprep.subr.mxu0 0.0
    %4476 = vmatpush1.msra.mxu0 0.0
    %4477 = vmatprep.subr.mxu0 0.0
    %4478 = vmatpush1.msra.mxu0 0.0
    %4479 = vmatprep.subr.mxu0 0.0
    %4480 = vmatpush1.msra.mxu0 0.0
    %4481 = vmatprep.subr.mxu0 0.0
    %4482 = vmatpush1.msra.mxu0 0.0
    %4483 = vmatprep.subr.mxu0 0.0
    %4484 = vmatpush1.msra.mxu0 0.0
    %4485 = vmatprep.subr.mxu0 0.0
    %4486 = vmatpush1.msra.mxu0 0.0
    %4487 = vmatprep.subr.mxu0 0.0
    %4488 = vmatpush1.msra.mxu0 0.0
    %4489 = vmatprep.subr.mxu0 0.0
    %4490 = vmatpush1.msra.mxu0 0.0
    %4491 = vmatprep.subr.mxu0 0.0
    %4492 = vmatpush1.msra.mxu0 0.0
    %4493 = vmatprep.subr.mxu0 0.0
    %4494 = vmatpush1.msra.mxu0 0.0
    %4495 = vmatprep.subr.mxu0 0.0
    %4496 = vmatpush1.msra.mxu0 0.0
    %4497 = vmatprep.subr.mxu0 0.0
    %4498 = vmatpush1.msra.mxu0 0.0
    %4499 = vmatprep.subr.mxu0 0.0
    %4500 = vmatpush1.msra.mxu0 0.0
    %4501 = vmatprep.subr.mxu0 0.0
    %4502 = vmatpush1.msra.mxu0 0.0
    %4503 = vmatprep.subr.mxu0 0.0
    %4504 = vmatpush1.msra.mxu0 0.0
    %4505 = vmatprep.subr.mxu0 0.0
    %4506 = vmatpush1.msra.mxu0 0.0
    %4507 = vmatprep.subr.mxu0 0.0
    %4508 = vmatpush1.msra.mxu0 0.0
    %4509 = vmatprep.subr.mxu0 0.0
    %4510 = vmatpush1.msra.mxu0 0.0
    %4511 = vmatprep.subr.mxu0 0.0
    %4512 = vmatpush1.msra.mxu0 0.0
    %4513 = vmatprep.subr.mxu0 0.0
    %4514 = vmatpush1.msra.mxu0 0.0
    %4515 = vmatprep.subr.mxu0 0.0
    %4516 = vmatpush1.msra.mxu0 0.0
    %4517 = vmatprep.subr.mxu0 0.0
    %4518 = vmatpush1.msra.mxu0 0.0
    %4519 = vmatprep.subr.mxu0 0.0
    %4520 = vmatpush1.msra.mxu0 0.0
    %4521 = vmatprep.subr.mxu0 0.0
    %4522 = vmatpush1.msra.mxu0 0.0
    %4523 = vmatprep.subr.mxu0 0.0
    %4524 = vmatpush1.msra.mxu0 0.0
    %4525 = vmatprep.mubr.f32.mxu0 0.0
    %4526 = vmatmul.mubr.f32.gmra.mrb[0].mxu0 %v4459
    %v4527 = vpop.f32.mrb[0].mxu0
    %v4528 = vadd.f32 0.0, %v4527
    %v4529 = vpop.f32.mrb[0].mxu0
    %4530 = vdwg.mxu0
    %v4531 = vadd.f32 %v4289, %v4528
    %v4532 = vadd.f32 %v2432, %v3566
    %v4533 = vadd.f32 %v2433, %v4531
    %s4534 = scalar_lea.vmem %s6, 1
    %v4535 = vld [vmem:[%s4534] sm:$0x1]
    %v4537 = vlaneseq
    %v4538 = vshrl.u32 %v4537, 7
    %v4539 = vsub.s32 0, %v4538
    %v4540 = vrot.slane %v4535, %v4539
    %v4542 = vadd.f32 %v4532, %v4540
    %v4543 = vadd.f32 %v4533, %v4540
    %s4544 = scalar_lea.vmem %s7, 1
    %v4545 = vld [vmem:[%s4544] sm:$0x1]
    %s4546 = scalar_lea.vmem %s8, 1
    %v4547 = vld [vmem:[%s4546] sm:$0x1]
    %v4548 = vsel %vm69, %v4542, 0.0
    %4549 = vadd.xlane.f32.xlu0 %v4548
    %v4550 = vpop.xlane.xlu0 %4549
    %v4551 = vsel %vm69, %v4543, 0.0
    %4552 = vadd.xlane.f32.xlu0 %v4551
    %v4553 = vpop.xlane.xlu0 %4552
    %v4554 = vmul.f32 %v4550, %v76
    %v4555 = vmul.f32 %v4553, %v76
    %v4556 = vsub.f32 %v4542, %v4554
    %v4557 = vsub.f32 %v4543, %v4555
    %v4558 = vmul.f32 %v4556, %v4556
    %v4559 = vmul.f32 %v4557, %v4557
    %v4560 = vsel %vm69, %v4558, 0.0
    %4561 = vadd.xlane.f32.xlu0 %v4560
    %v4562 = vpop.xlane.xlu0 %4561
    %v4563 = vsel %vm69, %v4559, 0.0
    %4564 = vadd.xlane.f32.xlu0 %v4563
    %v4565 = vpop.xlane.xlu0 %4564
    %v4566 = vmul.f32 %v4562, %v89
    %v4567 = vmul.f32 %v4565, %v89
    %v4568 = vrsqrt.pop %v4566
    %v4569 = vmul.f32 %v4566, %v4568
    %vm4570 = vcmp.eq.f32.partialorder %v4566, inf
    %v4571 = vsel %vm4570, %v4566, %v4569
    %vm4572 = vcmp.eq.f32.partialorder %v4566, 0.0
    %v4573 = vand.u32 %v4566, 2147483648
    %v4574 = vsel %vm4572, %v4573, %v4571
    %v4575 = vrsqrt.pop %v4567
    %v4576 = vmul.f32 %v4567, %v4575
    %vm4577 = vcmp.eq.f32.partialorder %v4567, inf
    %v4578 = vsel %vm4577, %v4567, %v4576
    %vm4579 = vcmp.eq.f32.partialorder %v4567, 0.0
    %v4580 = vand.u32 %v4567, 2147483648
    %v4581 = vsel %vm4579, %v4580, %v4578
    %v4582 = vadd.f32 %v4574, 1e-06
    %v4583 = vadd.f32 %v4581, 1e-06
    %v4584 = vrcp.pop %v4582
    %v4585 = vrcp.pop %v4583
    %v4586 = vmul.f32 %v4582, %v4584
    %v4587 = vmul.f32 %v4583, %v4585
    %v4588 = vsub.f32 2.0, %v4586
    %v4589 = vsub.f32 2.0, %v4587
    %v4590 = vmul.f32 %v4584, %v4588
    %v4591 = vmul.f32 %v4585, %v4589
    %v4593 = vlaneseq
    %v4594 = vshrl.u32 %v4593, 7
    %v4595 = vsub.s32 0, %v4594
    %v4596 = vrot.slane %v4545, %v4595
    %v4598 = vmul.f32 %v4596, %v4556
    %v4599 = vmul.f32 %v4596, %v4557
    %v4600 = vmul.f32 %v4598, %v4590
    %v4601 = vmul.f32 %v4599, %v4591
    %v4603 = vlaneseq
    %v4604 = vshrl.u32 %v4603, 7
    %v4605 = vsub.s32 0, %v4604
    %v4606 = vrot.slane %v4547, %v4605
    %v4608 = vadd.f32 %v4600, %v4606
    %v4609 = vadd.f32 %v4601, %v4606
    %s4610 = scalar_lea.vmem %s9, 32
    %v4611 = vld [vmem:[%s4610] sm:$0xff]
    %v4612 = vld [vmem:[%s4610 + $0x8] sm:$0xff]
    %v4613 = vld [vmem:[%s4610 + $0x10] sm:$0xff]
    %v4614 = vld [vmem:[%s4610 + $0x18] sm:$0xff]
    %s4615 = scalar_lea.vmem %s10, 1
    %v4616 = vld [vmem:[%s4615] sm:$0x1]
    %v4618 = vlaneseq
    %v4619 = vshrl.u32 %v4618, 7
    %v4620 = vsub.s32 0, %v4619
    %v4621 = vrot.slane %v4616, %v4620
    %v4624 = vsel %vm69, %v4608, 0
    %v4627 = vsel %vm69, %v4609, 0
    %4629 = vmatprep.subr.mxu0 0.0
    %4630 = vmatpush1.msra.mxu0 %v4611
    %4631 = vmatprep.subr.mxu0 0.0
    %4632 = vmatpush1.msra.mxu0 %v4612
    %4633 = vmatprep.subr.mxu0 0.0
    %4634 = vmatpush1.msra.mxu0 %v4613
    %4635 = vmatprep.subr.mxu0 0.0
    %4636 = vmatpush1.msra.mxu0 %v4614
    %4637 = vmatprep.subr.mxu0 0.0
    %4638 = vmatpush1.msra.mxu0 0.0
    %4639 = vmatprep.subr.mxu0 0.0
    %4640 = vmatpush1.msra.mxu0 0.0
    %4641 = vmatprep.subr.mxu0 0.0
    %4642 = vmatpush1.msra.mxu0 0.0
    %4643 = vmatprep.subr.mxu0 0.0
    %4644 = vmatpush1.msra.mxu0 0.0
    %4645 = vmatprep.subr.mxu0 0.0
    %4646 = vmatpush1.msra.mxu0 0.0
    %4647 = vmatprep.subr.mxu0 0.0
    %4648 = vmatpush1.msra.mxu0 0.0
    %4649 = vmatprep.subr.mxu0 0.0
    %4650 = vmatpush1.msra.mxu0 0.0
    %4651 = vmatprep.subr.mxu0 0.0
    %4652 = vmatpush1.msra.mxu0 0.0
    %4653 = vmatprep.subr.mxu0 0.0
    %4654 = vmatpush1.msra.mxu0 0.0
    %4655 = vmatprep.subr.mxu0 0.0
    %4656 = vmatpush1.msra.mxu0 0.0
    %4657 = vmatprep.subr.mxu0 0.0
    %4658 = vmatpush1.msra.mxu0 0.0
    %4659 = vmatprep.subr.mxu0 0.0
    %4660 = vmatpush1.msra.mxu0 0.0
    %4661 = vmatprep.subr.mxu0 0.0
    %4662 = vmatpush1.msra.mxu0 0.0
    %4663 = vmatprep.subr.mxu0 0.0
    %4664 = vmatpush1.msra.mxu0 0.0
    %4665 = vmatprep.subr.mxu0 0.0
    %4666 = vmatpush1.msra.mxu0 0.0
    %4667 = vmatprep.subr.mxu0 0.0
    %4668 = vmatpush1.msra.mxu0 0.0
    %4669 = vmatprep.subr.mxu0 0.0
    %4670 = vmatpush1.msra.mxu0 0.0
    %4671 = vmatprep.subr.mxu0 0.0
    %4672 = vmatpush1.msra.mxu0 0.0
    %4673 = vmatprep.subr.mxu0 0.0
    %4674 = vmatpush1.msra.mxu0 0.0
    %4675 = vmatprep.subr.mxu0 0.0
    %4676 = vmatpush1.msra.mxu0 0.0
    %4677 = vmatprep.subr.mxu0 0.0
    %4678 = vmatpush1.msra.mxu0 0.0
    %4679 = vmatprep.subr.mxu0 0.0
    %4680 = vmatpush1.msra.mxu0 0.0
    %4681 = vmatprep.subr.mxu0 0.0
    %4682 = vmatpush1.msra.mxu0 0.0
    %4683 = vmatprep.subr.mxu0 0.0
    %4684 = vmatpush1.msra.mxu0 0.0
    %4685 = vmatprep.subr.mxu0 0.0
    %4686 = vmatpush1.msra.mxu0 0.0
    %4687 = vmatprep.subr.mxu0 0.0
    %4688 = vmatpush1.msra.mxu0 0.0
    %4689 = vmatprep.subr.mxu0 0.0
    %4690 = vmatpush1.msra.mxu0 0.0
    %4691 = vmatprep.subr.mxu0 0.0
    %4692 = vmatpush1.msra.mxu0 0.0
    %4693 = vmatprep.mubr.f32.mxu0 0.0
    %4694 = vmatmul.mubr.f32.gmra.mrb[0].mxu0 %v4624
    %v4695 = vpop.f32.mrb[0].mxu0
    %v4696 = vadd.f32 %v4621, %v4695
    %v4697 = vpop.f32.mrb[0].mxu0
    %4698 = vmatprep.mubr.f32.mxu0 0.0
    %4699 = vmatmul.mubr.f32.gmra.mrb[0].mxu0 %v4627
    %v4700 = vpop.f32.mrb[0].mxu0
    %v4701 = vadd.f32 %v4621, %v4700
    %v4702 = vpop.f32.mrb[0].mxu0
    %4703 = vdwg.mxu0
    %v4704 = vmax.f32 %v4696, 0.0
    %v4705 = vmax.f32 %v4701, 0.0
    %s4706 = scalar_lea.vmem %s11, 64
    %v4707 = vld [vmem:[%s4706] sm:$0xff]
    %v4708 = vld [vmem:[%s4706 + $0x8] sm:$0xff]
    %v4709 = vld [vmem:[%s4706 + $0x10] sm:$0xff]
    %v4710 = vld [vmem:[%s4706 + $0x18] sm:$0xff]
    %v4711 = vld [vmem:[%s4706 + $0x20] sm:$0xff]
    %v4712 = vld [vmem:[%s4706 + $0x28] sm:$0xff]
    %v4713 = vld [vmem:[%s4706 + $0x30] sm:$0xff]
    %v4714 = vld [vmem:[%s4706 + $0x38] sm:$0xff]
    %v4716 = vsel %vm2341, %v4704, 0
    %v4719 = vsel %vm2341, %v4705, 0
    %4721 = vmatprep.subr.mxu0 0.0
    %4722 = vmatpush1.msra.mxu0 %v4707
    %4723 = vmatprep.subr.mxu0 0.0
    %4724 = vmatpush1.msra.mxu0 %v4708
    %4725 = vmatprep.subr.mxu0 0.0
    %4726 = vmatpush1.msra.mxu0 %v4709
    %4727 = vmatprep.subr.mxu0 0.0
    %4728 = vmatpush1.msra.mxu0 %v4710
    %4729 = vmatprep.subr.mxu0 0.0
    %4730 = vmatpush1.msra.mxu0 %v4711
    %4731 = vmatprep.subr.mxu0 0.0
    %4732 = vmatpush1.msra.mxu0 %v4712
    %4733 = vmatprep.subr.mxu0 0.0
    %4734 = vmatpush1.msra.mxu0 %v4713
    %4735 = vmatprep.subr.mxu0 0.0
    %4736 = vmatpush1.msra.mxu0 %v4714
    %4737 = vmatprep.subr.mxu0 0.0
    %4738 = vmatpush1.msra.mxu0 0.0
    %4739 = vmatprep.subr.mxu0 0.0
    %4740 = vmatpush1.msra.mxu0 0.0
    %4741 = vmatprep.subr.mxu0 0.0
    %4742 = vmatpush1.msra.mxu0 0.0
    %4743 = vmatprep.subr.mxu0 0.0
    %4744 = vmatpush1.msra.mxu0 0.0
    %4745 = vmatprep.subr.mxu0 0.0
    %4746 = vmatpush1.msra.mxu0 0.0
    %4747 = vmatprep.subr.mxu0 0.0
    %4748 = vmatpush1.msra.mxu0 0.0
    %4749 = vmatprep.subr.mxu0 0.0
    %4750 = vmatpush1.msra.mxu0 0.0
    %4751 = vmatprep.subr.mxu0 0.0
    %4752 = vmatpush1.msra.mxu0 0.0
    %4753 = vmatprep.subr.mxu0 0.0
    %4754 = vmatpush1.msra.mxu0 0.0
    %4755 = vmatprep.subr.mxu0 0.0
    %4756 = vmatpush1.msra.mxu0 0.0
    %4757 = vmatprep.subr.mxu0 0.0
    %4758 = vmatpush1.msra.mxu0 0.0
    %4759 = vmatprep.subr.mxu0 0.0
    %4760 = vmatpush1.msra.mxu0 0.0
    %4761 = vmatprep.subr.mxu0 0.0
    %4762 = vmatpush1.msra.mxu0 0.0
    %4763 = vmatprep.subr.mxu0 0.0
    %4764 = vmatpush1.msra.mxu0 0.0
    %4765 = vmatprep.subr.mxu0 0.0
    %4766 = vmatpush1.msra.mxu0 0.0
    %4767 = vmatprep.subr.mxu0 0.0
    %4768 = vmatpush1.msra.mxu0 0.0
    %4769 = vmatprep.subr.mxu0 0.0
    %4770 = vmatpush1.msra.mxu0 0.0
    %4771 = vmatprep.subr.mxu0 0.0
    %4772 = vmatpush1.msra.mxu0 0.0
    %4773 = vmatprep.subr.mxu0 0.0
    %4774 = vmatpush1.msra.mxu0 0.0
    %4775 = vmatprep.subr.mxu0 0.0
    %4776 = vmatpush1.msra.mxu0 0.0
    %4777 = vmatprep.subr.mxu0 0.0
    %4778 = vmatpush1.msra.mxu0 0.0
    %4779 = vmatprep.subr.mxu0 0.0
    %4780 = vmatpush1.msra.mxu0 0.0
    %4781 = vmatprep.subr.mxu0 0.0
    %4782 = vmatpush1.msra.mxu0 0.0
    %4783 = vmatprep.subr.mxu0 0.0
    %4784 = vmatpush1.msra.mxu0 0.0
    %4785 = vmatprep.mubr.f32.mxu0 0.0
    %4786 = vmatmul.mubr.f32.gmra.mrb[0].mxu0 %v4716
    %v4787 = vpop.f32.mrb[0].mxu0
    %v4788 = vadd.f32 0.0, %v4787
    %v4789 = vpop.f32.mrb[0].mxu0
    %4790 = vmatprep.mubr.f32.mxu0 0.0
    %4791 = vmatmul.mubr.f32.gmra.mrb[0].mxu0 %v4719
    %v4792 = vpop.f32.mrb[0].mxu0
    %v4793 = vadd.f32 0.0, %v4792
    %v4794 = vpop.f32.mrb[0].mxu0
    %4795 = vdwg.mxu0
    %v4796 = vadd.f32 %v4542, %v4788
    %v4797 = vadd.f32 %v4543, %v4793
    %s4798 = scalar_lea.vmem %s12, 1
    %v4799 = vld [vmem:[%s4798] sm:$0x1]
    %v4801 = vlaneseq
    %v4802 = vshrl.u32 %v4801, 7
    %v4803 = vsub.s32 0, %v4802
    %v4804 = vrot.slane %v4799, %v4803
    %v4806 = vadd.f32 %v4796, %v4804
    %v4807 = vadd.f32 %v4797, %v4804
    %v4808 = vld [vmem:[%s13] sm:$0x1]
    %v4809 = vld [vmem:[%s14] sm:$0x1]
    %v4810 = vsel %vm69, %v4806, 0.0
    %4811 = vadd.xlane.f32.xlu0 %v4810
    %v4812 = vpop.xlane.xlu0 %4811
    %v4813 = vsel %vm69, %v4807, 0.0
    %4814 = vadd.xlane.f32.xlu0 %v4813
    %v4815 = vpop.xlane.xlu0 %4814
    %v4816 = vmul.f32 %v4812, %v76
    %v4817 = vmul.f32 %v4815, %v76
    %v4818 = vsub.f32 %v4806, %v4816
    %v4819 = vsub.f32 %v4807, %v4817
    %v4820 = vmul.f32 %v4818, %v4818
    %v4821 = vmul.f32 %v4819, %v4819
    %v4822 = vsel %vm69, %v4820, 0.0
    %4823 = vadd.xlane.f32.xlu0 %v4822
    %v4824 = vpop.xlane.xlu0 %4823
    %v4825 = vsel %vm69, %v4821, 0.0
    %4826 = vadd.xlane.f32.xlu0 %v4825
    %v4827 = vpop.xlane.xlu0 %4826
    %v4828 = vmul.f32 %v4824, %v89
    %v4829 = vmul.f32 %v4827, %v89
    %v4830 = vrsqrt.pop %v4828
    %v4831 = vmul.f32 %v4828, %v4830
    %vm4832 = vcmp.eq.f32.partialorder %v4828, inf
    %v4833 = vsel %vm4832, %v4828, %v4831
    %vm4834 = vcmp.eq.f32.partialorder %v4828, 0.0
    %v4835 = vand.u32 %v4828, 2147483648
    %v4836 = vsel %vm4834, %v4835, %v4833
    %v4837 = vrsqrt.pop %v4829
    %v4838 = vmul.f32 %v4829, %v4837
    %vm4839 = vcmp.eq.f32.partialorder %v4829, inf
    %v4840 = vsel %vm4839, %v4829, %v4838
    %vm4841 = vcmp.eq.f32.partialorder %v4829, 0.0
    %v4842 = vand.u32 %v4829, 2147483648
    %v4843 = vsel %vm4841, %v4842, %v4840
    %v4844 = vadd.f32 %v4836, 1e-06
    %v4845 = vadd.f32 %v4843, 1e-06
    %v4846 = vrcp.pop %v4844
    %v4847 = vrcp.pop %v4845
    %v4848 = vmul.f32 %v4844, %v4846
    %v4849 = vmul.f32 %v4845, %v4847
    %v4850 = vsub.f32 2.0, %v4848
    %v4851 = vsub.f32 2.0, %v4849
    %v4852 = vmul.f32 %v4846, %v4850
    %v4853 = vmul.f32 %v4847, %v4851
    %v4855 = vlaneseq
    %v4856 = vshrl.u32 %v4855, 7
    %v4857 = vsub.s32 0, %v4856
    %v4858 = vrot.slane %v4808, %v4857
    %v4860 = vmul.f32 %v4858, %v4818
    %v4861 = vmul.f32 %v4858, %v4819
    %v4862 = vmul.f32 %v4860, %v4852
    %v4863 = vmul.f32 %v4861, %v4853
    %v4865 = vlaneseq
    %v4866 = vshrl.u32 %v4865, 7
    %v4867 = vsub.s32 0, %v4866
    %v4868 = vrot.slane %v4809, %v4867
    %v4870 = vadd.f32 %v4862, %v4868
    %v4871 = vadd.f32 %v4863, %v4868
    %4872 = vst.msk [vmem:[#allocation5] sm:$0xff] %vm69, %v4870
    %4873 = vst.msk [vmem:[#allocation5 + $0x8] sm:$0xff] %vm69, %v4871
    // Predicated region
    $region66: #{encoder_forward.1} parent=1 // pred_check
      _
    $region67: #{encoder_forward.1} parent=1 // pred_check_branch
      %4875 = sbr.rel (0) target = $region69
    $region68: #{encoder_forward.1} parent=1 // pred_region
      %s4877 = ssub.s32 256, 256
      %4878 = vsyncadd [#allocation4], %s4877
      %s4879 = sshll.u32 [#allocation5], 4
      %s4880 = int_to_ptr.vmem [resolvable:$true] %s4879
      %4885 = dma.vmem_to_hbm [thread:$0]  %s4880, 256, %s15, [#allocation4], 128, 128, 8
    $region69: #{encoder_forward.1} parent=1 // pred_fallthru
      _
    // Predicated region
    $region70: #{encoder_forward.1} parent=1 // pred_check
      _
    $region71: #{encoder_forward.1} parent=1 // pred_check_branch
      %4887 = sbr.rel (0) target = $region73
    $region72: #{encoder_forward.1} parent=1 // pred_region
      %4888 = dma.done [#allocation4], 256
    $region73: #{encoder_forward.1} parent=1 // pred_fallthru
      _
    %4889 = vsyncpa [#allocation3], 1
    %4890 = vsyncpa [#allocation4], 1

</llo_original>
